<compile_context>
chip_gen: v7x
topology: tpu7x:2x2x1
jax: 0.10.0
libtpu: 0.0.40
codegen_flags: <defaults>
</compile_context>

<pallas_src>
import jax
import jax.numpy as jnp
from jax.experimental import pallas as pl
from jax.experimental.pallas import tpu as pltpu

IN_FEATS = 784          # 28 * 28 (nn.Flatten)
OUT_FEATS = 10
OUT_PAD = 128           # lane-dense output store; sliced to 10 outside the kernel
H1, H2, H3 = 512, 256, 128


def _round_up(x, m):
    return (x + m - 1) // m * m


def _pick_tile(batch, *, max_tile=1024, min_tile=256):
    """Batch-tile rows.

    * multiples of 256: bf16 LHS packs 16 rows/sublane group and the MXU eats
      256 LHS rows per pass -> no wasted passes, unmasked stores.
    * >= 2 tiles once batch > 256 so v7x's two TensorCores both get work via the
      "parallel" grid axis.
    * capped at 1024: double-buffered f32 x tile (2 x 3.2 MB) + out tiles +
      resident bf16 weights (~1.2 MB) + f32 intermediates ~= 15 MB, well inside
      v7x's 64 MiB/TC VMEM and the 48 MiB scoped limit set below.
    """
    if batch <= min_tile:
        return min_tile
    return min(max_tile, _round_up(pl.cdiv(batch, 2), min_tile))


def _resident_spec(shape):
    """Full-array block with a constant index_map -> fetched once, VMEM-resident.

    pl.Buffered(1) drops the (useless) second pipeline buffer for these
    never-refetched blocks (~1.3 MB VMEM back); fall back if this JAX build's
    BlockSpec has no `pipeline_mode`.
    """
    idx = lambda i: (0, 0)
    try:
        return pl.BlockSpec(shape, idx, pipeline_mode=pl.Buffered(1))
    except (TypeError, AttributeError):
        return pl.BlockSpec(shape, idx)


def mlp_kernel(x_ref,
               w1_ref, b1_ref,
               w2_ref, b2_ref,
               w3_ref, b3_ref,
               w4_ref, b4_ref,
               o_ref):
    """Fused 4-layer MLP on one (TB, 784) batch tile.

    x arrives f32 and is cast to bf16 in-kernel; weights are bf16; every matmul
    accumulates in f32 on the MXU; bias-add and ReLU stay f32.
    """
    x = x_ref[...].astype(jnp.bfloat16)

    h = jnp.dot(x, w1_ref[...], preferred_element_type=jnp.float32)
    h = jnp.maximum(h + b1_ref[...], 0.0)

    h = jnp.dot(h.astype(jnp.bfloat16), w2_ref[...],
                preferred_element_type=jnp.float32)
    h = jnp.maximum(h + b2_ref[...], 0.0)

    h = jnp.dot(h.astype(jnp.bfloat16), w3_ref[...],
                preferred_element_type=jnp.float32)
    h = jnp.maximum(h + b3_ref[...], 0.0)

    h = jnp.dot(h.astype(jnp.bfloat16), w4_ref[...],
                preferred_element_type=jnp.float32)
    o_ref[...] = (h + b4_ref[...]).astype(o_ref.dtype)


def fashion_classifier_forward(x_nchw, packed_params):
    """x_nchw: (B, 1, 28, 28) float32. Returns (B, 10) float32 logits."""
    B = x_nchw.shape[0]
    # nn.Flatten: metadata-only reshape, no copy, no dtype change (kernel casts).
    x = x_nchw.reshape(B, IN_FEATS)

    w1, b1, w2, b2, w3, b3, w4, b4 = packed_params

    tb = _pick_tile(B)
    n_tiles = pl.cdiv(B, tb)          # Pallas masks OOB reads/writes of last tile

    def tile_map(i):
        return (i, 0)

    rows = n_tiles * tb
    flops = 2 * rows * (IN_FEATS * H1 + H1 * H2 + H2 * H3 + H3 * OUT_PAD)
    bytes_accessed = (
        B * IN_FEATS * 4                                   # x (f32, read once)
        + sum(w.size * 2 for w in (w1, w2, w3, w4))        # bf16 weights
        + sum(b.size * 4 for b in (b1, b2, b3, b4))        # f32 biases
        + B * OUT_PAD * 4                                  # f32 output
    )

    out = pl.pallas_call(
        mlp_kernel,
        out_shape=jax.ShapeDtypeStruct((B, OUT_PAD), jnp.float32),
        grid=(n_tiles,),
        in_specs=[
            pl.BlockSpec((tb, IN_FEATS), tile_map),
            _resident_spec(w1.shape), _resident_spec(b1.shape),
            _resident_spec(w2.shape), _resident_spec(b2.shape),
            _resident_spec(w3.shape), _resident_spec(b3.shape),
            _resident_spec(w4.shape), _resident_spec(b4.shape),
        ],
        out_specs=pl.BlockSpec((tb, OUT_PAD), tile_map),
        compiler_params=pltpu.CompilerParams(
            dimension_semantics=("parallel",),   # megacore-shards batch tiles on v7x
            vmem_limit_bytes=48 << 20),          # > v5e/v6e defaults, < v7x 64 MiB
        cost_estimate=pl.CostEstimate(
            flops=flops, transcendentals=0, bytes_accessed=bytes_accessed),
    )(x, w1, b1, w2, b2, w3, b3, w4, b4)

    return out[:, :OUT_FEATS]


def init_params(key):
    """torch.nn.Linear-style init. Weights stored (in, out); biases (1, out)."""
    dims = [(IN_FEATS, H1), (H1, H2), (H2, H3), (H3, OUT_FEATS)]
    params = []
    for i, (fan_in, fan_out) in enumerate(dims):
        kw, kb, key = jax.random.split(jax.random.fold_in(key, i), 3)
        bound = 1.0 / (fan_in ** 0.5)
        w = jax.random.uniform(kw, (fan_in, fan_out), jnp.float32, -bound, bound)
        b = jax.random.uniform(kb, (1, fan_out), jnp.float32, -bound, bound)
        params.append((w, b))
    return params


def pack_params(params):
    """bf16 weights; fc4 zero-padded 10 -> 128 output lanes (lane-dense store)."""
    (w1, b1), (w2, b2), (w3, b3), (w4, b4) = params
    w4p = jnp.zeros((H3, OUT_PAD), jnp.float32).at[:, :OUT_FEATS].set(w4)
    b4p = jnp.zeros((1, OUT_PAD), jnp.float32).at[:, :OUT_FEATS].set(b4)
    return (w1.astype(jnp.bfloat16), b1,
            w2.astype(jnp.bfloat16), b2,
            w3.astype(jnp.bfloat16), b3,
            w4p.astype(jnp.bfloat16), b4p)


def reference_forward(x_nchw, params):
    """Pure-JAX reference with matching bf16-input / f32-accumulate numerics."""
    h = x_nchw.reshape(x_nchw.shape[0], -1)
    layers = list(params)
    for idx, (w, b) in enumerate(layers):
        h = jnp.dot(h.astype(jnp.bfloat16), w.astype(jnp.bfloat16),
                    preferred_element_type=jnp.float32) + b
        if idx < len(layers) - 1:
            h = jnp.maximum(h, 0.0)
    return h


if __name__ == "__main__":
    key = jax.random.PRNGKey(0)
    kx, kp = jax.random.split(key)

    B = 8
    x = jax.random.normal(kx, (B, 1, 28, 28), dtype=jnp.float32)
    params = init_params(kp)
    packed = pack_params(params)

    out = fashion_classifier_forward(x, packed)
    out = jax.block_until_ready(out)

    ref = reference_forward(x, params)
    assert out.shape == (B, OUT_FEATS), out.shape
    assert jnp.allclose(out, ref, atol=1e-2, rtol=1e-2), (
        float(jnp.max(jnp.abs(out - ref))))

    print("KERNEL_OK")
</pallas_src>

<mosaic_0001>
module attributes {stable_mosaic.version = 11 : i64} {
  func.func @mlp_kernel(%arg0: i32, %arg1: memref<256x784xf32, #tpu.memory_space<vmem>>, %arg2: memref<784x512xbf16, #tpu.memory_space<vmem>>, %arg3: memref<1x512xf32, #tpu.memory_space<vmem>>, %arg4: memref<512x256xbf16, #tpu.memory_space<vmem>>, %arg5: memref<1x256xf32, #tpu.memory_space<vmem>>, %arg6: memref<256x128xbf16, #tpu.memory_space<vmem>>, %arg7: memref<1x128xf32, #tpu.memory_space<vmem>>, %arg8: memref<128x128xbf16, #tpu.memory_space<vmem>>, %arg9: memref<1x128xf32, #tpu.memory_space<vmem>>, %arg10: memref<256x128xf32, #tpu.memory_space<vmem>>) attributes {dimension_semantics = [#tpu.dimension_semantics<parallel>], iteration_bounds = array<i64: 1>, scalar_prefetch = 0 : i64, scratch_operands = 0 : i64, tpu.core_type = #tpu.core_type<tc>, window_params = [{transform_indices = @transform_0, window_bounds = array<i64: 256, 784>}, {pipeline_mode = #tpu.pipeline_mode<synchronous>, transform_indices = @transform_1, window_bounds = array<i64: 784, 512>}, {pipeline_mode = #tpu.pipeline_mode<synchronous>, transform_indices = @transform_2, window_bounds = array<i64: 1, 512>}, {pipeline_mode = #tpu.pipeline_mode<synchronous>, transform_indices = @transform_3, window_bounds = array<i64: 512, 256>}, {pipeline_mode = #tpu.pipeline_mode<synchronous>, transform_indices = @transform_4, window_bounds = array<i64: 1, 256>}, {pipeline_mode = #tpu.pipeline_mode<synchronous>, transform_indices = @transform_5, window_bounds = array<i64: 256, 128>}, {pipeline_mode = #tpu.pipeline_mode<synchronous>, transform_indices = @transform_6, window_bounds = array<i64: 1, 128>}, {pipeline_mode = #tpu.pipeline_mode<synchronous>, transform_indices = @transform_7, window_bounds = array<i64: 128, 128>}, {pipeline_mode = #tpu.pipeline_mode<synchronous>, transform_indices = @transform_8, window_bounds = array<i64: 1, 128>}, {transform_indices = @transform_9, window_bounds = array<i64: 256, 128>}]} {
    %c0 = arith.constant 0 : index
    %c0_0 = arith.constant 0 : index
    %0 = vector.load %arg1[%c0, %c0_0] : memref<256x784xf32, #tpu.memory_space<vmem>>, vector<256x784xf32>
    %1 = arith.truncf %0 : vector<256x784xf32> to vector<256x784xbf16>
    %c0_1 = arith.constant 0 : index
    %c0_2 = arith.constant 0 : index
    %2 = vector.load %arg2[%c0_1, %c0_2] : memref<784x512xbf16, #tpu.memory_space<vmem>>, vector<784x512xbf16>
    %cst = arith.constant dense<0.000000e+00> : vector<256x512xf32>
    %3 = tpu.matmul %1, %2, %cst {dimension_numbers = #tpu.dot_dimension_numbers<[1], [0], [0], [1], [0, 0, 1, 1], [], []>} : vector<256x784xbf16>, vector<784x512xbf16>, vector<256x512xf32> -> vector<256x512xf32>
    %c0_3 = arith.constant 0 : index
    %c0_4 = arith.constant 0 : index
    %4 = vector.load %arg3[%c0_3, %c0_4] : memref<1x512xf32, #tpu.memory_space<vmem>>, vector<1x512xf32>
    %5 = vector.broadcast %4 : vector<1x512xf32> to vector<256x512xf32>
    %6 = arith.addf %3, %5 : vector<256x512xf32>
    %cst_5 = arith.constant 0.000000e+00 : f32
    %7 = vector.broadcast %cst_5 : f32 to vector<256x512xf32>
    %8 = arith.maximumf %6, %7 : vector<256x512xf32>
    %9 = arith.truncf %8 : vector<256x512xf32> to vector<256x512xbf16>
    %c0_6 = arith.constant 0 : index
    %c0_7 = arith.constant 0 : index
    %10 = vector.load %arg4[%c0_6, %c0_7] : memref<512x256xbf16, #tpu.memory_space<vmem>>, vector<512x256xbf16>
    %cst_8 = arith.constant dense<0.000000e+00> : vector<256x256xf32>
    %11 = tpu.matmul %9, %10, %cst_8 {dimension_numbers = #tpu.dot_dimension_numbers<[1], [0], [0], [1], [0, 0, 1, 1], [], []>} : vector<256x512xbf16>, vector<512x256xbf16>, vector<256x256xf32> -> vector<256x256xf32>
    %c0_9 = arith.constant 0 : index
    %c0_10 = arith.constant 0 : index
    %12 = vector.load %arg5[%c0_9, %c0_10] : memref<1x256xf32, #tpu.memory_space<vmem>>, vector<1x256xf32>
    %13 = vector.broadcast %12 : vector<1x256xf32> to vector<256x256xf32>
    %14 = arith.addf %11, %13 : vector<256x256xf32>
    %cst_11 = arith.constant 0.000000e+00 : f32
    %15 = vector.broadcast %cst_11 : f32 to vector<256x256xf32>
    %16 = arith.maximumf %14, %15 : vector<256x256xf32>
    %17 = arith.truncf %16 : vector<256x256xf32> to vector<256x256xbf16>
    %c0_12 = arith.constant 0 : index
    %c0_13 = arith.constant 0 : index
    %18 = vector.load %arg6[%c0_12, %c0_13] : memref<256x128xbf16, #tpu.memory_space<vmem>>, vector<256x128xbf16>
    %cst_14 = arith.constant dense<0.000000e+00> : vector<256x128xf32>
    %19 = tpu.matmul %17, %18, %cst_14 {dimension_numbers = #tpu.dot_dimension_numbers<[1], [0], [0], [1], [0, 0, 1, 1], [], []>} : vector<256x256xbf16>, vector<256x128xbf16>, vector<256x128xf32> -> vector<256x128xf32>
    %c0_15 = arith.constant 0 : index
    %c0_16 = arith.constant 0 : index
    %20 = vector.load %arg7[%c0_15, %c0_16] : memref<1x128xf32, #tpu.memory_space<vmem>>, vector<1x128xf32>
    %21 = vector.broadcast %20 : vector<1x128xf32> to vector<256x128xf32>
    %22 = arith.addf %19, %21 : vector<256x128xf32>
    %cst_17 = arith.constant 0.000000e+00 : f32
    %23 = vector.broadcast %cst_17 : f32 to vector<256x128xf32>
    %24 = arith.maximumf %22, %23 : vector<256x128xf32>
    %25 = arith.truncf %24 : vector<256x128xf32> to vector<256x128xbf16>
    %c0_18 = arith.constant 0 : index
    %c0_19 = arith.constant 0 : index
    %26 = vector.load %arg8[%c0_18, %c0_19] : memref<128x128xbf16, #tpu.memory_space<vmem>>, vector<128x128xbf16>
    %cst_20 = arith.constant dense<0.000000e+00> : vector<256x128xf32>
    %27 = tpu.matmul %25, %26, %cst_20 {dimension_numbers = #tpu.dot_dimension_numbers<[1], [0], [0], [1], [0, 0, 1, 1], [], []>} : vector<256x128xbf16>, vector<128x128xbf16>, vector<256x128xf32> -> vector<256x128xf32>
    %c0_21 = arith.constant 0 : index
    %c0_22 = arith.constant 0 : index
    %28 = vector.load %arg9[%c0_21, %c0_22] : memref<1x128xf32, #tpu.memory_space<vmem>>, vector<1x128xf32>
    %29 = vector.broadcast %28 : vector<1x128xf32> to vector<256x128xf32>
    %30 = arith.addf %27, %29 : vector<256x128xf32>
    %c0_23 = arith.constant 0 : index
    %c0_24 = arith.constant 0 : index
    %31 = vector.load %arg10[%c0_23, %c0_24] : memref<256x128xf32, #tpu.memory_space<vmem>>, vector<256x128xf32>
    tpu.vector_store %arg10[%c0_23, %c0_24], %30 {strides = array<i32>} : memref<256x128xf32, #tpu.memory_space<vmem>>, vector<256x128xf32>,
    return
  }
  func.func @transform_0(%arg0: i32) -> (i32, i32) {
    %c0_i32 = arith.constant 0 : i32
    %c0_i32_0 = arith.constant 0 : i32
    return %arg0, %c0_i32 : i32, i32
  }
  func.func @transform_1(%arg0: i32) -> (i32, i32) {
    %c0_i32 = arith.constant 0 : i32
    %c0_i32_0 = arith.constant 0 : i32
    %c0_i32_1 = arith.constant 0 : i32
    return %c0_i32, %c0_i32_0 : i32, i32
  }
  func.func @transform_2(%arg0: i32) -> (i32, i32) {
    %c0_i32 = arith.constant 0 : i32
    %c0_i32_0 = arith.constant 0 : i32
    %c0_i32_1 = arith.constant 0 : i32
    return %c0_i32, %c0_i32_0 : i32, i32
  }
  func.func @transform_3(%arg0: i32) -> (i32, i32) {
    %c0_i32 = arith.constant 0 : i32
    %c0_i32_0 = arith.constant 0 : i32
    %c0_i32_1 = arith.constant 0 : i32
    return %c0_i32, %c0_i32_0 : i32, i32
  }
  func.func @transform_4(%arg0: i32) -> (i32, i32) {
    %c0_i32 = arith.constant 0 : i32
    %c0_i32_0 = arith.constant 0 : i32
    %c0_i32_1 = arith.constant 0 : i32
    return %c0_i32, %c0_i32_0 : i32, i32
  }
  func.func @transform_5(%arg0: i32) -> (i32, i32) {
    %c0_i32 = arith.constant 0 : i32
    %c0_i32_0 = arith.constant 0 : i32
    %c0_i32_1 = arith.constant 0 : i32
    return %c0_i32, %c0_i32_0 : i32, i32
  }
  func.func @transform_6(%arg0: i32) -> (i32, i32) {
    %c0_i32 = arith.constant 0 : i32
    %c0_i32_0 = arith.constant 0 : i32
    %c0_i32_1 = arith.constant 0 : i32
    return %c0_i32, %c0_i32_0 : i32, i32
  }
  func.func @transform_7(%arg0: i32) -> (i32, i32) {
    %c0_i32 = arith.constant 0 : i32
    %c0_i32_0 = arith.constant 0 : i32
    %c0_i32_1 = arith.constant 0 : i32
    return %c0_i32, %c0_i32_0 : i32, i32
  }
  func.func @transform_8(%arg0: i32) -> (i32, i32) {
    %c0_i32 = arith.constant 0 : i32
    %c0_i32_0 = arith.constant 0 : i32
    %c0_i32_1 = arith.constant 0 : i32
    return %c0_i32, %c0_i32_0 : i32, i32
  }
  func.func @transform_9(%arg0: i32) -> (i32, i32) {
    %c0_i32 = arith.constant 0 : i32
    %c0_i32_0 = arith.constant 0 : i32
    return %arg0, %c0_i32 : i32, i32
  }
}

</mosaic_0001>

<llo_original>
// kernel: tpu_custom_call.1
$region0: #{tpu_custom_call.1}
  #allocation0 [shape = 'u32[]', space=smem, size = 0x4, offset = 0x4, fixed_abs, tag = 'smem constant byte address 0x4 - core index']
  #allocation1 [shape = 'u32[144,128]{1,0:T(1,128)}', space=vmem, size = 0x12000, scoped, tag = 'internal scratch']
  %s0 = inlined_call_operand.hbm [shape: f32[8,784], index: 0, kind: input, shape index: {}]
  %s1 = inlined_call_operand.hbm [shape: bf16[784,512], index: 1, kind: input, shape index: {}]
  %s2 = inlined_call_operand.vmem [shape: f32[1,512], index: 2, kind: input, shape index: {}]
  %s3 = inlined_call_operand.hbm [shape: bf16[512,256], index: 3, kind: input, shape index: {}]
  %s4 = inlined_call_operand.vmem [shape: f32[1,256], index: 4, kind: input, shape index: {}]
  %s5 = inlined_call_operand.hbm [shape: bf16[256,128], index: 5, kind: input, shape index: {}]
  %s6 = inlined_call_operand.vmem [shape: f32[1,128], index: 6, kind: input, shape index: {}]
  %s7 = inlined_call_operand.hbm [shape: bf16[128,128], index: 7, kind: input, shape index: {}]
  %s8 = inlined_call_operand.vmem [shape: f32[1,128], index: 8, kind: input, shape index: {}]
  %s9 = inlined_call_operand.hbm [shape: f32[8,128], index: 9, kind: output, shape index: {}]
  %s10 = sld [smem:[#allocation0]]
  $region66: #{tpu_custom_call.1} parent=0
    _
  %s12 = ssub.s32 1, %s10
  %s13 = scalar_select 0, %s12, %s10
  $region1: #{tpu_custom_call.1} parent=0
    #allocation2 [shape = 'u8[917504]{0}', space=vmem, size = 0xe0000, scoped, tag = 'input window, operand 0, single buffered']
    #allocation3 [shape = 's32[1]{0}', space=sflag, size = 0x4, scoped, tag = 'scoped memory for tpu_custom_call.1']
    #allocation4 [shape = 's32[1]{0}', space=sflag, size = 0x4, scoped, tag = 'scoped memory for tpu_custom_call.1']
    #allocation5 [shape = 'u8[802816]{0}', space=vmem, size = 0xc4000, scoped, tag = 'input window, operand 1, single buffered']
    #allocation6 [shape = 's32[1]{0}', space=sflag, size = 0x4, scoped, tag = 'scoped memory for tpu_custom_call.1']
    #allocation7 [shape = 'u8[262144]{0}', space=vmem, size = 0x40000, scoped, tag = 'input window, operand 3, single buffered']
    #allocation8 [shape = 'u8[65536]{0}', space=vmem, size = 0x10000, scoped, tag = 'input window, operand 5, single buffered']
    #allocation9 [shape = 's32[1]{0}', space=sflag, size = 0x4, scoped, tag = 'scoped memory for tpu_custom_call.1']
    #allocation10 [shape = 'u8[32768]{0}', space=vmem, size = 0x8000, scoped, tag = 'input window, operand 7, single buffered']
    #allocation11 [shape = 'u8[131072]{0}', space=vmem, size = 0x20000, scoped, tag = 'output window, operand 0, single buffered']
    %14 = vsyncpa [#allocation3], 0
    %15 = vsyncpa [#allocation6], 0
    %16 = vsyncpa [#allocation9], 0
    %17 = vsyncpa [#allocation4], 0
    // Predicated region
    $region2: #{tpu_custom_call.1} parent=1 // pred_check
      _
    $region3: #{tpu_custom_call.1} parent=1 // pred_check_branch
      %19 = sbr.rel (0) target = $region5
    $region4: #{tpu_custom_call.1} parent=1 // pred_region
      %s21 = ssub.s32 28672, 896
      %22 = vsyncadd [#allocation3], %s21
      %s23 = sshll.u32 [#allocation2], 4
      %s24 = int_to_ptr.vmem [resolvable:$true] %s23
      %29 = dma.hbm_to_vmem [thread:$0]  %s0, 896, %s24, [#allocation3], 896, 896, 56
    $region5: #{tpu_custom_call.1} parent=1 // pred_fallthru
      _
    // Predicated region
    $region6: #{tpu_custom_call.1} parent=1 // pred_check
      _
    $region7: #{tpu_custom_call.1} parent=1 // pred_check_branch
      %31 = sbr.rel (0) target = $region9
    $region8: #{tpu_custom_call.1} parent=1 // pred_region
      %s33 = ssub.s32 25088, 25088
      %34 = vsyncadd [#allocation6], %s33
      %s35 = sshll.u32 [#allocation5], 4
      %s36 = int_to_ptr.vmem [resolvable:$true] %s35
      %41 = dma.hbm_to_vmem [thread:$0]  %s1, 25088, %s36, [#allocation6], 256, 256, 16
    $region9: #{tpu_custom_call.1} parent=1 // pred_fallthru
      _
    // Predicated region
    $region10: #{tpu_custom_call.1} parent=1 // pred_check
      _
    $region11: #{tpu_custom_call.1} parent=1 // pred_check_branch
      %43 = sbr.rel (0) target = $region13
    $region12: #{tpu_custom_call.1} parent=1 // pred_region
      _
    $region13: #{tpu_custom_call.1} parent=1 // pred_fallthru
      _
    // Predicated region
    $region14: #{tpu_custom_call.1} parent=1 // pred_check
      _
    $region15: #{tpu_custom_call.1} parent=1 // pred_check_branch
      %45 = sbr.rel (0) target = $region17
    $region16: #{tpu_custom_call.1} parent=1 // pred_region
      %s47 = ssub.s32 8192, 8192
      %48 = vsyncadd [#allocation6], %s47
      %s49 = sshll.u32 [#allocation7], 4
      %s50 = int_to_ptr.vmem [resolvable:$true] %s49
      %55 = dma.hbm_to_vmem [thread:$0]  %s3, 8192, %s50, [#allocation6], 128, 128, 8
    $region17: #{tpu_custom_call.1} parent=1 // pred_fallthru
      _
    // Predicated region
    $region18: #{tpu_custom_call.1} parent=1 // pred_check
      _
    $region19: #{tpu_custom_call.1} parent=1 // pred_check_branch
      %57 = sbr.rel (0) target = $region21
    $region20: #{tpu_custom_call.1} parent=1 // pred_region
      _
    $region21: #{tpu_custom_call.1} parent=1 // pred_fallthru
      _
    // Predicated region
    $region22: #{tpu_custom_call.1} parent=1 // pred_check
      _
    $region23: #{tpu_custom_call.1} parent=1 // pred_check_branch
      %59 = sbr.rel (0) target = $region25
    $region24: #{tpu_custom_call.1} parent=1 // pred_region
      %s61 = ssub.s32 2048, 2048
      %62 = vsyncadd [#allocation9], %s61
      %s63 = sshll.u32 [#allocation8], 4
      %s64 = int_to_ptr.vmem [resolvable:$true] %s63
      %69 = dma.hbm_to_vmem [thread:$0]  %s5, 2048, %s64, [#allocation9], 64, 64, 4
    $region25: #{tpu_custom_call.1} parent=1 // pred_fallthru
      _
    // Predicated region
    $region26: #{tpu_custom_call.1} parent=1 // pred_check
      _
    $region27: #{tpu_custom_call.1} parent=1 // pred_check_branch
      %71 = sbr.rel (0) target = $region29
    $region28: #{tpu_custom_call.1} parent=1 // pred_region
      _
    $region29: #{tpu_custom_call.1} parent=1 // pred_fallthru
      _
    // Predicated region
    $region30: #{tpu_custom_call.1} parent=1 // pred_check
      _
    $region31: #{tpu_custom_call.1} parent=1 // pred_check_branch
      %73 = sbr.rel (0) target = $region33
    $region32: #{tpu_custom_call.1} parent=1 // pred_region
      %s75 = ssub.s32 1024, 1024
      %76 = vsyncadd [#allocation9], %s75
      %s77 = sshll.u32 [#allocation10], 4
      %s78 = int_to_ptr.vmem [resolvable:$true] %s77
      %83 = dma.hbm_to_vmem [thread:$0]  %s7, 1024, %s78, [#allocation9], 64, 64, 4
    $region33: #{tpu_custom_call.1} parent=1 // pred_fallthru
      _
    // Predicated region
    $region34: #{tpu_custom_call.1} parent=1 // pred_check
      _
    $region35: #{tpu_custom_call.1} parent=1 // pred_check_branch
      %85 = sbr.rel (0) target = $region37
    $region36: #{tpu_custom_call.1} parent=1 // pred_region
      _
    $region37: #{tpu_custom_call.1} parent=1 // pred_fallthru
      _
    // Predicated region
    $region38: #{tpu_custom_call.1} parent=1 // pred_check
      _
    $region39: #{tpu_custom_call.1} parent=1 // pred_check_branch
      %87 = sbr.rel (0) target = $region41
    $region40: #{tpu_custom_call.1} parent=1 // pred_region
      %88 = dma.done [#allocation3], 28672
    $region41: #{tpu_custom_call.1} parent=1 // pred_fallthru
      _
    // Predicated region
    $region42: #{tpu_custom_call.1} parent=1 // pred_check
      _
    $region43: #{tpu_custom_call.1} parent=1 // pred_check_branch
      %90 = sbr.rel (0) target = $region45
    $region44: #{tpu_custom_call.1} parent=1 // pred_region
      %91 = dma.done [#allocation6], 25088
    $region45: #{tpu_custom_call.1} parent=1 // pred_fallthru
      _
    // Predicated region
    $region46: #{tpu_custom_call.1} parent=1 // pred_check
      _
    $region47: #{tpu_custom_call.1} parent=1 // pred_check_branch
      %93 = sbr.rel (0) target = $region49
    $region48: #{tpu_custom_call.1} parent=1 // pred_region
      %94 = dma.done [#allocation6], 8192
    $region49: #{tpu_custom_call.1} parent=1 // pred_fallthru
      _
    // Predicated region
    $region50: #{tpu_custom_call.1} parent=1 // pred_check
      _
    $region51: #{tpu_custom_call.1} parent=1 // pred_check_branch
      %96 = sbr.rel (0) target = $region53
    $region52: #{tpu_custom_call.1} parent=1 // pred_region
      %97 = dma.done [#allocation9], 2048
    $region53: #{tpu_custom_call.1} parent=1 // pred_fallthru
      _
    // Predicated region
    $region54: #{tpu_custom_call.1} parent=1 // pred_check
      _
    $region55: #{tpu_custom_call.1} parent=1 // pred_check_branch
      %99 = sbr.rel (0) target = $region57
    $region56: #{tpu_custom_call.1} parent=1 // pred_region
      %100 = dma.done [#allocation9], 1024
    $region57: #{tpu_custom_call.1} parent=1 // pred_fallthru
      _
    %v102 = vld [vmem:[#allocation2] sm:$0xff]
    %v103 = vld [vmem:[#allocation2 + $0x8] sm:$0xff]
    %v104 = vld [vmem:[#allocation2 + $0x10] sm:$0xff]
    %v105 = vld [vmem:[#allocation2 + $0x18] sm:$0xff]
    %v106 = vld [vmem:[#allocation2 + $0x20] sm:$0xff]
    %v107 = vld [vmem:[#allocation2 + $0x28] sm:$0xff]
    %v108 = vld [vmem:[#allocation2 + $0x30] sm:$0xff]
    %v109 = vld [vmem:[#allocation2 + $0x38] sm:$0xff]
    %v110 = vld [vmem:[#allocation2 + $0x40] sm:$0xff]
    %v111 = vld [vmem:[#allocation2 + $0x48] sm:$0xff]
    %v112 = vld [vmem:[#allocation2 + $0x50] sm:$0xff]
    %v113 = vld [vmem:[#allocation2 + $0x58] sm:$0xff]
    %v114 = vld [vmem:[#allocation2 + $0x60] sm:$0xff]
    %v115 = vld [vmem:[#allocation2 + $0x68] sm:$0xff]
    %v116 = vld [vmem:[#allocation2 + $0x70] sm:$0xff]
    %v117 = vld [vmem:[#allocation2 + $0x78] sm:$0xff]
    %v118 = vld [vmem:[#allocation2 + $0x80] sm:$0xff]
    %v119 = vld [vmem:[#allocation2 + $0x88] sm:$0xff]
    %v120 = vld [vmem:[#allocation2 + $0x90] sm:$0xff]
    %v121 = vld [vmem:[#allocation2 + $0x98] sm:$0xff]
    %v122 = vld [vmem:[#allocation2 + $0xa0] sm:$0xff]
    %v123 = vld [vmem:[#allocation2 + $0xa8] sm:$0xff]
    %v124 = vld [vmem:[#allocation2 + $0xb0] sm:$0xff]
    %v125 = vld [vmem:[#allocation2 + $0xb8] sm:$0xff]
    %v126 = vld [vmem:[#allocation2 + $0xc0] sm:$0xff]
    %v127 = vld [vmem:[#allocation2 + $0xc8] sm:$0xff]
    %v128 = vld [vmem:[#allocation2 + $0xd0] sm:$0xff]
    %v129 = vld [vmem:[#allocation2 + $0xd8] sm:$0xff]
    %v130 = vld [vmem:[#allocation2 + $0xe0] sm:$0xff]
    %v131 = vld [vmem:[#allocation2 + $0xe8] sm:$0xff]
    %v132 = vld [vmem:[#allocation2 + $0xf0] sm:$0xff]
    %v133 = vld [vmem:[#allocation2 + $0xf8] sm:$0xff]
    %v134 = vld [vmem:[#allocation2 + $0x100] sm:$0xff]
    %v135 = vld [vmem:[#allocation2 + $0x108] sm:$0xff]
    %v136 = vld [vmem:[#allocation2 + $0x110] sm:$0xff]
    %v137 = vld [vmem:[#allocation2 + $0x118] sm:$0xff]
    %v138 = vld [vmem:[#allocation2 + $0x120] sm:$0xff]
    %v139 = vld [vmem:[#allocation2 + $0x128] sm:$0xff]
    %v140 = vld [vmem:[#allocation2 + $0x130] sm:$0xff]
    %v141 = vld [vmem:[#allocation2 + $0x138] sm:$0xff]
    %v142 = vld [vmem:[#allocation2 + $0x140] sm:$0xff]
    %v143 = vld [vmem:[#allocation2 + $0x148] sm:$0xff]
    %v144 = vld [vmem:[#allocation2 + $0x150] sm:$0xff]
    %v145 = vld [vmem:[#allocation2 + $0x158] sm:$0xff]
    %v146 = vld [vmem:[#allocation2 + $0x160] sm:$0xff]
    %v147 = vld [vmem:[#allocation2 + $0x168] sm:$0xff]
    %v148 = vld [vmem:[#allocation2 + $0x170] sm:$0xff]
    %v149 = vld [vmem:[#allocation2 + $0x178] sm:$0xff]
    %v150 = vld [vmem:[#allocation2 + $0x180] sm:$0xff]
    %v151 = vld [vmem:[#allocation2 + $0x188] sm:$0xff]
    %v152 = vld [vmem:[#allocation2 + $0x190] sm:$0xff]
    %v153 = vld [vmem:[#allocation2 + $0x198] sm:$0xff]
    %v154 = vld [vmem:[#allocation2 + $0x1a0] sm:$0xff]
    %v155 = vld [vmem:[#allocation2 + $0x1a8] sm:$0xff]
    %v156 = vld [vmem:[#allocation2 + $0x1b0] sm:$0xff]
    %v157 = vld [vmem:[#allocation2 + $0x1b8] sm:$0xff]
    %v158 = vld [vmem:[#allocation2 + $0x1c0] sm:$0xff]
    %v159 = vld [vmem:[#allocation2 + $0x1c8] sm:$0xff]
    %v160 = vld [vmem:[#allocation2 + $0x1d0] sm:$0xff]
    %v161 = vld [vmem:[#allocation2 + $0x1d8] sm:$0xff]
    %v162 = vld [vmem:[#allocation2 + $0x1e0] sm:$0xff]
    %v163 = vld [vmem:[#allocation2 + $0x1e8] sm:$0xff]
    %v164 = vld [vmem:[#allocation2 + $0x1f0] sm:$0xff]
    %v165 = vld [vmem:[#allocation2 + $0x1f8] sm:$0xff]
    %v166 = vld [vmem:[#allocation2 + $0x200] sm:$0xff]
    %v167 = vld [vmem:[#allocation2 + $0x208] sm:$0xff]
    %v168 = vld [vmem:[#allocation2 + $0x210] sm:$0xff]
    %v169 = vld [vmem:[#allocation2 + $0x218] sm:$0xff]
    %v170 = vld [vmem:[#allocation2 + $0x220] sm:$0xff]
    %v171 = vld [vmem:[#allocation2 + $0x228] sm:$0xff]
    %v172 = vld [vmem:[#allocation2 + $0x230] sm:$0xff]
    %v173 = vld [vmem:[#allocation2 + $0x238] sm:$0xff]
    %v174 = vld [vmem:[#allocation2 + $0x240] sm:$0xff]
    %v175 = vld [vmem:[#allocation2 + $0x248] sm:$0xff]
    %v176 = vld [vmem:[#allocation2 + $0x250] sm:$0xff]
    %v177 = vld [vmem:[#allocation2 + $0x258] sm:$0xff]
    %v178 = vld [vmem:[#allocation2 + $0x260] sm:$0xff]
    %v179 = vld [vmem:[#allocation2 + $0x268] sm:$0xff]
    %v180 = vld [vmem:[#allocation2 + $0x270] sm:$0xff]
    %v181 = vld [vmem:[#allocation2 + $0x278] sm:$0xff]
    %v182 = vld [vmem:[#allocation2 + $0x280] sm:$0xff]
    %v183 = vld [vmem:[#allocation2 + $0x288] sm:$0xff]
    %v184 = vld [vmem:[#allocation2 + $0x290] sm:$0xff]
    %v185 = vld [vmem:[#allocation2 + $0x298] sm:$0xff]
    %v186 = vld [vmem:[#allocation2 + $0x2a0] sm:$0xff]
    %v187 = vld [vmem:[#allocation2 + $0x2a8] sm:$0xff]
    %v188 = vld [vmem:[#allocation2 + $0x2b0] sm:$0xff]
    %v189 = vld [vmem:[#allocation2 + $0x2b8] sm:$0xff]
    %v190 = vld [vmem:[#allocation2 + $0x2c0] sm:$0xff]
    %v191 = vld [vmem:[#allocation2 + $0x2c8] sm:$0xff]
    %v192 = vld [vmem:[#allocation2 + $0x2d0] sm:$0xff]
    %v193 = vld [vmem:[#allocation2 + $0x2d8] sm:$0xff]
    %v194 = vld [vmem:[#allocation2 + $0x2e0] sm:$0xff]
    %v195 = vld [vmem:[#allocation2 + $0x2e8] sm:$0xff]
    %v196 = vld [vmem:[#allocation2 + $0x2f0] sm:$0xff]
    %v197 = vld [vmem:[#allocation2 + $0x2f8] sm:$0xff]
    %v198 = vld [vmem:[#allocation2 + $0x300] sm:$0xff]
    %v199 = vld [vmem:[#allocation2 + $0x308] sm:$0xff]
    %v200 = vld [vmem:[#allocation2 + $0x310] sm:$0xff]
    %v201 = vld [vmem:[#allocation2 + $0x318] sm:$0xff]
    %v202 = vld [vmem:[#allocation2 + $0x320] sm:$0xff]
    %v203 = vld [vmem:[#allocation2 + $0x328] sm:$0xff]
    %v204 = vld [vmem:[#allocation2 + $0x330] sm:$0xff]
    %v205 = vld [vmem:[#allocation2 + $0x338] sm:$0xff]
    %v206 = vld [vmem:[#allocation2 + $0x340] sm:$0xff]
    %v207 = vld [vmem:[#allocation2 + $0x348] sm:$0xff]
    %v208 = vld [vmem:[#allocation2 + $0x350] sm:$0xff]
    %v209 = vld [vmem:[#allocation2 + $0x358] sm:$0xff]
    %v210 = vld [vmem:[#allocation2 + $0x360] sm:$0xff]
    %v211 = vld [vmem:[#allocation2 + $0x368] sm:$0xff]
    %v212 = vld [vmem:[#allocation2 + $0x370] sm:$0xff]
    %v213 = vld [vmem:[#allocation2 + $0x378] sm:$0xff]
    %v214 = vld [vmem:[#allocation2 + $0x380] sm:$0xff]
    %v215 = vld [vmem:[#allocation2 + $0x388] sm:$0xff]
    %v216 = vld [vmem:[#allocation2 + $0x390] sm:$0xff]
    %v217 = vld [vmem:[#allocation2 + $0x398] sm:$0xff]
    %v218 = vld [vmem:[#allocation2 + $0x3a0] sm:$0xff]
    %v219 = vld [vmem:[#allocation2 + $0x3a8] sm:$0xff]
    %v220 = vld [vmem:[#allocation2 + $0x3b0] sm:$0xff]
    %v221 = vld [vmem:[#allocation2 + $0x3b8] sm:$0xff]
    %v222 = vld [vmem:[#allocation2 + $0x3c0] sm:$0xff]
    %v223 = vld [vmem:[#allocation2 + $0x3c8] sm:$0xff]
    %v224 = vld [vmem:[#allocation2 + $0x3d0] sm:$0xff]
    %v225 = vld [vmem:[#allocation2 + $0x3d8] sm:$0xff]
    %v226 = vld [vmem:[#allocation2 + $0x3e0] sm:$0xff]
    %v227 = vld [vmem:[#allocation2 + $0x3e8] sm:$0xff]
    %v228 = vld [vmem:[#allocation2 + $0x3f0] sm:$0xff]
    %v229 = vld [vmem:[#allocation2 + $0x3f8] sm:$0xff]
    %v230 = vld [vmem:[#allocation2 + $0x400] sm:$0xff]
    %v231 = vld [vmem:[#allocation2 + $0x408] sm:$0xff]
    %v232 = vld [vmem:[#allocation2 + $0x410] sm:$0xff]
    %v233 = vld [vmem:[#allocation2 + $0x418] sm:$0xff]
    %v234 = vld [vmem:[#allocation2 + $0x420] sm:$0xff]
    %v235 = vld [vmem:[#allocation2 + $0x428] sm:$0xff]
    %v236 = vld [vmem:[#allocation2 + $0x430] sm:$0xff]
    %v237 = vld [vmem:[#allocation2 + $0x438] sm:$0xff]
    %v238 = vld [vmem:[#allocation2 + $0x440] sm:$0xff]
    %v239 = vld [vmem:[#allocation2 + $0x448] sm:$0xff]
    %v240 = vld [vmem:[#allocation2 + $0x450] sm:$0xff]
    %v241 = vld [vmem:[#allocation2 + $0x458] sm:$0xff]
    %v242 = vld [vmem:[#allocation2 + $0x460] sm:$0xff]
    %v243 = vld [vmem:[#allocation2 + $0x468] sm:$0xff]
    %v244 = vld [vmem:[#allocation2 + $0x470] sm:$0xff]
    %v245 = vld [vmem:[#allocation2 + $0x478] sm:$0xff]
    %v246 = vld [vmem:[#allocation2 + $0x480] sm:$0xff]
    %v247 = vld [vmem:[#allocation2 + $0x488] sm:$0xff]
    %v248 = vld [vmem:[#allocation2 + $0x490] sm:$0xff]
    %v249 = vld [vmem:[#allocation2 + $0x498] sm:$0xff]
    %v250 = vld [vmem:[#allocation2 + $0x4a0] sm:$0xff]
    %v251 = vld [vmem:[#allocation2 + $0x4a8] sm:$0xff]
    %v252 = vld [vmem:[#allocation2 + $0x4b0] sm:$0xff]
    %v253 = vld [vmem:[#allocation2 + $0x4b8] sm:$0xff]
    %v254 = vld [vmem:[#allocation2 + $0x4c0] sm:$0xff]
    %v255 = vld [vmem:[#allocation2 + $0x4c8] sm:$0xff]
    %v256 = vld [vmem:[#allocation2 + $0x4d0] sm:$0xff]
    %v257 = vld [vmem:[#allocation2 + $0x4d8] sm:$0xff]
    %v258 = vld [vmem:[#allocation2 + $0x4e0] sm:$0xff]
    %v259 = vld [vmem:[#allocation2 + $0x4e8] sm:$0xff]
    %v260 = vld [vmem:[#allocation2 + $0x4f0] sm:$0xff]
    %v261 = vld [vmem:[#allocation2 + $0x4f8] sm:$0xff]
    %v262 = vld [vmem:[#allocation2 + $0x500] sm:$0xff]
    %v263 = vld [vmem:[#allocation2 + $0x508] sm:$0xff]
    %v264 = vld [vmem:[#allocation2 + $0x510] sm:$0xff]
    %v265 = vld [vmem:[#allocation2 + $0x518] sm:$0xff]
    %v266 = vld [vmem:[#allocation2 + $0x520] sm:$0xff]
    %v267 = vld [vmem:[#allocation2 + $0x528] sm:$0xff]
    %v268 = vld [vmem:[#allocation2 + $0x530] sm:$0xff]
    %v269 = vld [vmem:[#allocation2 + $0x538] sm:$0xff]
    %v270 = vld [vmem:[#allocation2 + $0x540] sm:$0xff]
    %v271 = vld [vmem:[#allocation2 + $0x548] sm:$0xff]
    %v272 = vld [vmem:[#allocation2 + $0x550] sm:$0xff]
    %v273 = vld [vmem:[#allocation2 + $0x558] sm:$0xff]
    %v274 = vld [vmem:[#allocation2 + $0x560] sm:$0xff]
    %v275 = vld [vmem:[#allocation2 + $0x568] sm:$0xff]
    %v276 = vld [vmem:[#allocation2 + $0x570] sm:$0xff]
    %v277 = vld [vmem:[#allocation2 + $0x578] sm:$0xff]
    %v278 = vld [vmem:[#allocation2 + $0x580] sm:$0xff]
    %v279 = vld [vmem:[#allocation2 + $0x588] sm:$0xff]
    %v280 = vld [vmem:[#allocation2 + $0x590] sm:$0xff]
    %v281 = vld [vmem:[#allocation2 + $0x598] sm:$0xff]
    %v282 = vld [vmem:[#allocation2 + $0x5a0] sm:$0xff]
    %v283 = vld [vmem:[#allocation2 + $0x5a8] sm:$0xff]
    %v284 = vld [vmem:[#allocation2 + $0x5b0] sm:$0xff]
    %v285 = vld [vmem:[#allocation2 + $0x5b8] sm:$0xff]
    %v286 = vld [vmem:[#allocation2 + $0x5c0] sm:$0xff]
    %v287 = vld [vmem:[#allocation2 + $0x5c8] sm:$0xff]
    %v288 = vld [vmem:[#allocation2 + $0x5d0] sm:$0xff]
    %v289 = vld [vmem:[#allocation2 + $0x5d8] sm:$0xff]
    %v290 = vld [vmem:[#allocation2 + $0x5e0] sm:$0xff]
    %v291 = vld [vmem:[#allocation2 + $0x5e8] sm:$0xff]
    %v292 = vld [vmem:[#allocation2 + $0x5f0] sm:$0xff]
    %v293 = vld [vmem:[#allocation2 + $0x5f8] sm:$0xff]
    %v294 = vld [vmem:[#allocation2 + $0x600] sm:$0xff]
    %v295 = vld [vmem:[#allocation2 + $0x608] sm:$0xff]
    %v296 = vld [vmem:[#allocation2 + $0x610] sm:$0xff]
    %v297 = vld [vmem:[#allocation2 + $0x618] sm:$0xff]
    %v298 = vld [vmem:[#allocation2 + $0x620] sm:$0xff]
    %v299 = vld [vmem:[#allocation2 + $0x628] sm:$0xff]
    %v300 = vld [vmem:[#allocation2 + $0x630] sm:$0xff]
    %v301 = vld [vmem:[#allocation2 + $0x638] sm:$0xff]
    %v302 = vld [vmem:[#allocation2 + $0x640] sm:$0xff]
    %v303 = vld [vmem:[#allocation2 + $0x648] sm:$0xff]
    %v304 = vld [vmem:[#allocation2 + $0x650] sm:$0xff]
    %v305 = vld [vmem:[#allocation2 + $0x658] sm:$0xff]
    %v306 = vld [vmem:[#allocation2 + $0x660] sm:$0xff]
    %v307 = vld [vmem:[#allocation2 + $0x668] sm:$0xff]
    %v308 = vld [vmem:[#allocation2 + $0x670] sm:$0xff]
    %v309 = vld [vmem:[#allocation2 + $0x678] sm:$0xff]
    %v310 = vld [vmem:[#allocation2 + $0x680] sm:$0xff]
    %v311 = vld [vmem:[#allocation2 + $0x688] sm:$0xff]
    %v312 = vld [vmem:[#allocation2 + $0x690] sm:$0xff]
    %v313 = vld [vmem:[#allocation2 + $0x698] sm:$0xff]
    %v314 = vld [vmem:[#allocation2 + $0x6a0] sm:$0xff]
    %v315 = vld [vmem:[#allocation2 + $0x6a8] sm:$0xff]
    %v316 = vld [vmem:[#allocation2 + $0x6b0] sm:$0xff]
    %v317 = vld [vmem:[#allocation2 + $0x6b8] sm:$0xff]
    %v318 = vld [vmem:[#allocation2 + $0x6c0] sm:$0xff]
    %v319 = vld [vmem:[#allocation2 + $0x6c8] sm:$0xff]
    %v320 = vld [vmem:[#allocation2 + $0x6d0] sm:$0xff]
    %v321 = vld [vmem:[#allocation2 + $0x6d8] sm:$0xff]
    %v322 = vld [vmem:[#allocation2 + $0x6e0] sm:$0xff]
    %v323 = vld [vmem:[#allocation2 + $0x6e8] sm:$0xff]
    %v324 = vld [vmem:[#allocation2 + $0x6f0] sm:$0xff]
    %v325 = vld [vmem:[#allocation2 + $0x6f8] sm:$0xff]
    %v326 = vpack.c.bf16 %v109, %v102
    %v327 = vpack.c.bf16 %v110, %v103
    %v328 = vpack.c.bf16 %v111, %v104
    %v329 = vpack.c.bf16 %v112, %v105
    %v330 = vpack.c.bf16 %v113, %v106
    %v331 = vpack.c.bf16 %v114, %v107
    %v332 = vpack.c.bf16 %v115, %v108
    %v333 = vpack.c.bf16 %v123, %v116
    %v334 = vpack.c.bf16 %v124, %v117
    %v335 = vpack.c.bf16 %v125, %v118
    %v336 = vpack.c.bf16 %v126, %v119
    %v337 = vpack.c.bf16 %v127, %v120
    %v338 = vpack.c.bf16 %v128, %v121
    %v339 = vpack.c.bf16 %v129, %v122
    %v340 = vpack.c.bf16 %v137, %v130
    %v341 = vpack.c.bf16 %v138, %v131
    %v342 = vpack.c.bf16 %v139, %v132
    %v343 = vpack.c.bf16 %v140, %v133
    %v344 = vpack.c.bf16 %v141, %v134
    %v345 = vpack.c.bf16 %v142, %v135
    %v346 = vpack.c.bf16 %v143, %v136
    %v347 = vpack.c.bf16 %v151, %v144
    %v348 = vpack.c.bf16 %v152, %v145
    %v349 = vpack.c.bf16 %v153, %v146
    %v350 = vpack.c.bf16 %v154, %v147
    %v351 = vpack.c.bf16 %v155, %v148
    %v352 = vpack.c.bf16 %v156, %v149
    %v353 = vpack.c.bf16 %v157, %v150
    %v354 = vpack.c.bf16 %v165, %v158
    %v355 = vpack.c.bf16 %v166, %v159
    %v356 = vpack.c.bf16 %v167, %v160
    %v357 = vpack.c.bf16 %v168, %v161
    %v358 = vpack.c.bf16 %v169, %v162
    %v359 = vpack.c.bf16 %v170, %v163
    %v360 = vpack.c.bf16 %v171, %v164
    %v361 = vpack.c.bf16 %v179, %v172
    %v362 = vpack.c.bf16 %v180, %v173
    %v363 = vpack.c.bf16 %v181, %v174
    %v364 = vpack.c.bf16 %v182, %v175
    %v365 = vpack.c.bf16 %v183, %v176
    %v366 = vpack.c.bf16 %v184, %v177
    %v367 = vpack.c.bf16 %v185, %v178
    %v368 = vpack.c.bf16 %v193, %v186
    %v369 = vpack.c.bf16 %v194, %v187
    %v370 = vpack.c.bf16 %v195, %v188
    %v371 = vpack.c.bf16 %v196, %v189
    %v372 = vpack.c.bf16 %v197, %v190
    %v373 = vpack.c.bf16 %v198, %v191
    %v374 = vpack.c.bf16 %v199, %v192
    %v375 = vpack.c.bf16 %v207, %v200
    %v376 = vpack.c.bf16 %v208, %v201
    %v377 = vpack.c.bf16 %v209, %v202
    %v378 = vpack.c.bf16 %v210, %v203
    %v379 = vpack.c.bf16 %v211, %v204
    %v380 = vpack.c.bf16 %v212, %v205
    %v381 = vpack.c.bf16 %v213, %v206
    %v382 = vpack.c.bf16 %v221, %v214
    %v383 = vpack.c.bf16 %v222, %v215
    %v384 = vpack.c.bf16 %v223, %v216
    %v385 = vpack.c.bf16 %v224, %v217
    %v386 = vpack.c.bf16 %v225, %v218
    %v387 = vpack.c.bf16 %v226, %v219
    %v388 = vpack.c.bf16 %v227, %v220
    %v389 = vpack.c.bf16 %v235, %v228
    %v390 = vpack.c.bf16 %v236, %v229
    %v391 = vpack.c.bf16 %v237, %v230
    %v392 = vpack.c.bf16 %v238, %v231
    %v393 = vpack.c.bf16 %v239, %v232
    %v394 = vpack.c.bf16 %v240, %v233
    %v395 = vpack.c.bf16 %v241, %v234
    %v396 = vpack.c.bf16 %v249, %v242
    %v397 = vpack.c.bf16 %v250, %v243
    %v398 = vpack.c.bf16 %v251, %v244
    %v399 = vpack.c.bf16 %v252, %v245
    %v400 = vpack.c.bf16 %v253, %v246
    %v401 = vpack.c.bf16 %v254, %v247
    %v402 = vpack.c.bf16 %v255, %v248
    %v403 = vpack.c.bf16 %v263, %v256
    %v404 = vpack.c.bf16 %v264, %v257
    %v405 = vpack.c.bf16 %v265, %v258
    %v406 = vpack.c.bf16 %v266, %v259
    %v407 = vpack.c.bf16 %v267, %v260
    %v408 = vpack.c.bf16 %v268, %v261
    %v409 = vpack.c.bf16 %v269, %v262
    %v410 = vpack.c.bf16 %v277, %v270
    %v411 = vpack.c.bf16 %v278, %v271
    %v412 = vpack.c.bf16 %v279, %v272
    %v413 = vpack.c.bf16 %v280, %v273
    %v414 = vpack.c.bf16 %v281, %v274
    %v415 = vpack.c.bf16 %v282, %v275
    %v416 = vpack.c.bf16 %v283, %v276
    %v417 = vpack.c.bf16 %v291, %v284
    %v418 = vpack.c.bf16 %v292, %v285
    %v419 = vpack.c.bf16 %v293, %v286
    %v420 = vpack.c.bf16 %v294, %v287
    %v421 = vpack.c.bf16 %v295, %v288
    %v422 = vpack.c.bf16 %v296, %v289
    %v423 = vpack.c.bf16 %v297, %v290
    %v424 = vpack.c.bf16 %v305, %v298
    %v425 = vpack.c.bf16 %v306, %v299
    %v426 = vpack.c.bf16 %v307, %v300
    %v427 = vpack.c.bf16 %v308, %v301
    %v428 = vpack.c.bf16 %v309, %v302
    %v429 = vpack.c.bf16 %v310, %v303
    %v430 = vpack.c.bf16 %v311, %v304
    %v431 = vpack.c.bf16 %v319, %v312
    %v432 = vpack.c.bf16 %v320, %v313
    %v433 = vpack.c.bf16 %v321, %v314
    %v434 = vpack.c.bf16 %v322, %v315
    %v435 = vpack.c.bf16 %v323, %v316
    %v436 = vpack.c.bf16 %v324, %v317
    %v437 = vpack.c.bf16 %v325, %v318
    %v438 = vld [vmem:[#allocation5] sm:$0xff]
    %v439 = vld [vmem:[#allocation5 + $0x8] sm:$0xff]
    %v440 = vld [vmem:[#allocation5 + $0x10] sm:$0xff]
    %v441 = vld [vmem:[#allocation5 + $0x18] sm:$0xff]
    %v442 = vld [vmem:[#allocation5 + $0x20] sm:$0xff]
    %v443 = vld [vmem:[#allocation5 + $0x28] sm:$0xff]
    %v444 = vld [vmem:[#allocation5 + $0x30] sm:$0xff]
    %v445 = vld [vmem:[#allocation5 + $0x38] sm:$0xff]
    %v446 = vld [vmem:[#allocation5 + $0x40] sm:$0xff]
    %v447 = vld [vmem:[#allocation5 + $0x48] sm:$0xff]
    %v448 = vld [vmem:[#allocation5 + $0x50] sm:$0xff]
    %v449 = vld [vmem:[#allocation5 + $0x58] sm:$0xff]
    %v450 = vld [vmem:[#allocation5 + $0x60] sm:$0xff]
    %v451 = vld [vmem:[#allocation5 + $0x68] sm:$0xff]
    %v452 = vld [vmem:[#allocation5 + $0x70] sm:$0xff]
    %v453 = vld [vmem:[#allocation5 + $0x78] sm:$0xff]
    %v454 = vld [vmem:[#allocation5 + $0x80] sm:$0xff]
    %v455 = vld [vmem:[#allocation5 + $0x88] sm:$0xff]
    %v456 = vld [vmem:[#allocation5 + $0x90] sm:$0xff]
    %v457 = vld [vmem:[#allocation5 + $0x98] sm:$0xff]
    %v458 = vld [vmem:[#allocation5 + $0xa0] sm:$0xff]
    %v459 = vld [vmem:[#allocation5 + $0xa8] sm:$0xff]
    %v460 = vld [vmem:[#allocation5 + $0xb0] sm:$0xff]
    %v461 = vld [vmem:[#allocation5 + $0xb8] sm:$0xff]
    %v462 = vld [vmem:[#allocation5 + $0xc0] sm:$0xff]
    %v463 = vld [vmem:[#allocation5 + $0xc8] sm:$0xff]
    %v464 = vld [vmem:[#allocation5 + $0xd0] sm:$0xff]
    %v465 = vld [vmem:[#allocation5 + $0xd8] sm:$0xff]
    %v466 = vld [vmem:[#allocation5 + $0xe0] sm:$0xff]
    %v467 = vld [vmem:[#allocation5 + $0xe8] sm:$0xff]
    %v468 = vld [vmem:[#allocation5 + $0xf0] sm:$0xff]
    %v469 = vld [vmem:[#allocation5 + $0xf8] sm:$0xff]
    %v470 = vld [vmem:[#allocation5 + $0x100] sm:$0xff]
    %v471 = vld [vmem:[#allocation5 + $0x108] sm:$0xff]
    %v472 = vld [vmem:[#allocation5 + $0x110] sm:$0xff]
    %v473 = vld [vmem:[#allocation5 + $0x118] sm:$0xff]
    %v474 = vld [vmem:[#allocation5 + $0x120] sm:$0xff]
    %v475 = vld [vmem:[#allocation5 + $0x128] sm:$0xff]
    %v476 = vld [vmem:[#allocation5 + $0x130] sm:$0xff]
    %v477 = vld [vmem:[#allocation5 + $0x138] sm:$0xff]
    %v478 = vld [vmem:[#allocation5 + $0x140] sm:$0xff]
    %v479 = vld [vmem:[#allocation5 + $0x148] sm:$0xff]
    %v480 = vld [vmem:[#allocation5 + $0x150] sm:$0xff]
    %v481 = vld [vmem:[#allocation5 + $0x158] sm:$0xff]
    %v482 = vld [vmem:[#allocation5 + $0x160] sm:$0xff]
    %v483 = vld [vmem:[#allocation5 + $0x168] sm:$0xff]
    %v484 = vld [vmem:[#allocation5 + $0x170] sm:$0xff]
    %v485 = vld [vmem:[#allocation5 + $0x178] sm:$0xff]
    %v486 = vld [vmem:[#allocation5 + $0x180] sm:$0xff]
    %v487 = vld [vmem:[#allocation5 + $0x188] sm:$0xff]
    %v488 = vld [vmem:[#allocation5 + $0x190] sm:$0xff]
    %v489 = vld [vmem:[#allocation5 + $0x198] sm:$0xff]
    %v490 = vld [vmem:[#allocation5 + $0x1a0] sm:$0xff]
    %v491 = vld [vmem:[#allocation5 + $0x1a8] sm:$0xff]
    %v492 = vld [vmem:[#allocation5 + $0x1b0] sm:$0xff]
    %v493 = vld [vmem:[#allocation5 + $0x1b8] sm:$0xff]
    %v494 = vld [vmem:[#allocation5 + $0x1c0] sm:$0xff]
    %v495 = vld [vmem:[#allocation5 + $0x1c8] sm:$0xff]
    %v496 = vld [vmem:[#allocation5 + $0x1d0] sm:$0xff]
    %v497 = vld [vmem:[#allocation5 + $0x1d8] sm:$0xff]
    %v498 = vld [vmem:[#allocation5 + $0x1e0] sm:$0xff]
    %v499 = vld [vmem:[#allocation5 + $0x1e8] sm:$0xff]
    %v500 = vld [vmem:[#allocation5 + $0x1f0] sm:$0xff]
    %v501 = vld [vmem:[#allocation5 + $0x1f8] sm:$0xff]
    %v502 = vld [vmem:[#allocation5 + $0x200] sm:$0xff]
    %v503 = vld [vmem:[#allocation5 + $0x208] sm:$0xff]
    %v504 = vld [vmem:[#allocation5 + $0x210] sm:$0xff]
    %v505 = vld [vmem:[#allocation5 + $0x218] sm:$0xff]
    %v506 = vld [vmem:[#allocation5 + $0x220] sm:$0xff]
    %v507 = vld [vmem:[#allocation5 + $0x228] sm:$0xff]
    %v508 = vld [vmem:[#allocation5 + $0x230] sm:$0xff]
    %v509 = vld [vmem:[#allocation5 + $0x238] sm:$0xff]
    %v510 = vld [vmem:[#allocation5 + $0x240] sm:$0xff]
    %v511 = vld [vmem:[#allocation5 + $0x248] sm:$0xff]
    %v512 = vld [vmem:[#allocation5 + $0x250] sm:$0xff]
    %v513 = vld [vmem:[#allocation5 + $0x258] sm:$0xff]
    %v514 = vld [vmem:[#allocation5 + $0x260] sm:$0xff]
    %v515 = vld [vmem:[#allocation5 + $0x268] sm:$0xff]
    %v516 = vld [vmem:[#allocation5 + $0x270] sm:$0xff]
    %v517 = vld [vmem:[#allocation5 + $0x278] sm:$0xff]
    %v518 = vld [vmem:[#allocation5 + $0x280] sm:$0xff]
    %v519 = vld [vmem:[#allocation5 + $0x288] sm:$0xff]
    %v520 = vld [vmem:[#allocation5 + $0x290] sm:$0xff]
    %v521 = vld [vmem:[#allocation5 + $0x298] sm:$0xff]
    %v522 = vld [vmem:[#allocation5 + $0x2a0] sm:$0xff]
    %v523 = vld [vmem:[#allocation5 + $0x2a8] sm:$0xff]
    %v524 = vld [vmem:[#allocation5 + $0x2b0] sm:$0xff]
    %v525 = vld [vmem:[#allocation5 + $0x2b8] sm:$0xff]
    %v526 = vld [vmem:[#allocation5 + $0x2c0] sm:$0xff]
    %v527 = vld [vmem:[#allocation5 + $0x2c8] sm:$0xff]
    %v528 = vld [vmem:[#allocation5 + $0x2d0] sm:$0xff]
    %v529 = vld [vmem:[#allocation5 + $0x2d8] sm:$0xff]
    %v530 = vld [vmem:[#allocation5 + $0x2e0] sm:$0xff]
    %v531 = vld [vmem:[#allocation5 + $0x2e8] sm:$0xff]
    %v532 = vld [vmem:[#allocation5 + $0x2f0] sm:$0xff]
    %v533 = vld [vmem:[#allocation5 + $0x2f8] sm:$0xff]
    %v534 = vld [vmem:[#allocation5 + $0x300] sm:$0xff]
    %v535 = vld [vmem:[#allocation5 + $0x308] sm:$0xff]
    %v536 = vld [vmem:[#allocation5 + $0x310] sm:$0xff]
    %v537 = vld [vmem:[#allocation5 + $0x318] sm:$0xff]
    %v538 = vld [vmem:[#allocation5 + $0x320] sm:$0xff]
    %v539 = vld [vmem:[#allocation5 + $0x328] sm:$0xff]
    %v540 = vld [vmem:[#allocation5 + $0x330] sm:$0xff]
    %v541 = vld [vmem:[#allocation5 + $0x338] sm:$0xff]
    %v542 = vld [vmem:[#allocation5 + $0x340] sm:$0xff]
    %v543 = vld [vmem:[#allocation5 + $0x348] sm:$0xff]
    %v544 = vld [vmem:[#allocation5 + $0x350] sm:$0xff]
    %v545 = vld [vmem:[#allocation5 + $0x358] sm:$0xff]
    %v546 = vld [vmem:[#allocation5 + $0x360] sm:$0xff]
    %v547 = vld [vmem:[#allocation5 + $0x368] sm:$0xff]
    %v548 = vld [vmem:[#allocation5 + $0x370] sm:$0xff]
    %v549 = vld [vmem:[#allocation5 + $0x378] sm:$0xff]
    %v550 = vld [vmem:[#allocation5 + $0x380] sm:$0xff]
    %v551 = vld [vmem:[#allocation5 + $0x388] sm:$0xff]
    %v552 = vld [vmem:[#allocation5 + $0x390] sm:$0xff]
    %v553 = vld [vmem:[#allocation5 + $0x398] sm:$0xff]
    %v554 = vld [vmem:[#allocation5 + $0x3a0] sm:$0xff]
    %v555 = vld [vmem:[#allocation5 + $0x3a8] sm:$0xff]
    %v556 = vld [vmem:[#allocation5 + $0x3b0] sm:$0xff]
    %v557 = vld [vmem:[#allocation5 + $0x3b8] sm:$0xff]
    %v558 = vld [vmem:[#allocation5 + $0x3c0] sm:$0xff]
    %v559 = vld [vmem:[#allocation5 + $0x3c8] sm:$0xff]
    %v560 = vld [vmem:[#allocation5 + $0x3d0] sm:$0xff]
    %v561 = vld [vmem:[#allocation5 + $0x3d8] sm:$0xff]
    %v562 = vld [vmem:[#allocation5 + $0x3e0] sm:$0xff]
    %v563 = vld [vmem:[#allocation5 + $0x3e8] sm:$0xff]
    %v564 = vld [vmem:[#allocation5 + $0x3f0] sm:$0xff]
    %v565 = vld [vmem:[#allocation5 + $0x3f8] sm:$0xff]
    %v566 = vld [vmem:[#allocation5 + $0x400] sm:$0xff]
    %v567 = vld [vmem:[#allocation5 + $0x408] sm:$0xff]
    %v568 = vld [vmem:[#allocation5 + $0x410] sm:$0xff]
    %v569 = vld [vmem:[#allocation5 + $0x418] sm:$0xff]
    %v570 = vld [vmem:[#allocation5 + $0x420] sm:$0xff]
    %v571 = vld [vmem:[#allocation5 + $0x428] sm:$0xff]
    %v572 = vld [vmem:[#allocation5 + $0x430] sm:$0xff]
    %v573 = vld [vmem:[#allocation5 + $0x438] sm:$0xff]
    %v574 = vld [vmem:[#allocation5 + $0x440] sm:$0xff]
    %v575 = vld [vmem:[#allocation5 + $0x448] sm:$0xff]
    %v576 = vld [vmem:[#allocation5 + $0x450] sm:$0xff]
    %v577 = vld [vmem:[#allocation5 + $0x458] sm:$0xff]
    %v578 = vld [vmem:[#allocation5 + $0x460] sm:$0xff]
    %v579 = vld [vmem:[#allocation5 + $0x468] sm:$0xff]
    %v580 = vld [vmem:[#allocation5 + $0x470] sm:$0xff]
    %v581 = vld [vmem:[#allocation5 + $0x478] sm:$0xff]
    %v582 = vld [vmem:[#allocation5 + $0x480] sm:$0xff]
    %v583 = vld [vmem:[#allocation5 + $0x488] sm:$0xff]
    %v584 = vld [vmem:[#allocation5 + $0x490] sm:$0xff]
    %v585 = vld [vmem:[#allocation5 + $0x498] sm:$0xff]
    %v586 = vld [vmem:[#allocation5 + $0x4a0] sm:$0xff]
    %v587 = vld [vmem:[#allocation5 + $0x4a8] sm:$0xff]
    %v588 = vld [vmem:[#allocation5 + $0x4b0] sm:$0xff]
    %v589 = vld [vmem:[#allocation5 + $0x4b8] sm:$0xff]
    %v590 = vld [vmem:[#allocation5 + $0x4c0] sm:$0xff]
    %v591 = vld [vmem:[#allocation5 + $0x4c8] sm:$0xff]
    %v592 = vld [vmem:[#allocation5 + $0x4d0] sm:$0xff]
    %v593 = vld [vmem:[#allocation5 + $0x4d8] sm:$0xff]
    %v594 = vld [vmem:[#allocation5 + $0x4e0] sm:$0xff]
    %v595 = vld [vmem:[#allocation5 + $0x4e8] sm:$0xff]
    %v596 = vld [vmem:[#allocation5 + $0x4f0] sm:$0xff]
    %v597 = vld [vmem:[#allocation5 + $0x4f8] sm:$0xff]
    %v598 = vld [vmem:[#allocation5 + $0x500] sm:$0xff]
    %v599 = vld [vmem:[#allocation5 + $0x508] sm:$0xff]
    %v600 = vld [vmem:[#allocation5 + $0x510] sm:$0xff]
    %v601 = vld [vmem:[#allocation5 + $0x518] sm:$0xff]
    %v602 = vld [vmem:[#allocation5 + $0x520] sm:$0xff]
    %v603 = vld [vmem:[#allocation5 + $0x528] sm:$0xff]
    %v604 = vld [vmem:[#allocation5 + $0x530] sm:$0xff]
    %v605 = vld [vmem:[#allocation5 + $0x538] sm:$0xff]
    %v606 = vld [vmem:[#allocation5 + $0x540] sm:$0xff]
    %v607 = vld [vmem:[#allocation5 + $0x548] sm:$0xff]
    %v608 = vld [vmem:[#allocation5 + $0x550] sm:$0xff]
    %v609 = vld [vmem:[#allocation5 + $0x558] sm:$0xff]
    %v610 = vld [vmem:[#allocation5 + $0x560] sm:$0xff]
    %v611 = vld [vmem:[#allocation5 + $0x568] sm:$0xff]
    %v612 = vld [vmem:[#allocation5 + $0x570] sm:$0xff]
    %v613 = vld [vmem:[#allocation5 + $0x578] sm:$0xff]
    %v614 = vld [vmem:[#allocation5 + $0x580] sm:$0xff]
    %v615 = vld [vmem:[#allocation5 + $0x588] sm:$0xff]
    %v616 = vld [vmem:[#allocation5 + $0x590] sm:$0xff]
    %v617 = vld [vmem:[#allocation5 + $0x598] sm:$0xff]
    %v618 = vld [vmem:[#allocation5 + $0x5a0] sm:$0xff]
    %v619 = vld [vmem:[#allocation5 + $0x5a8] sm:$0xff]
    %v620 = vld [vmem:[#allocation5 + $0x5b0] sm:$0xff]
    %v621 = vld [vmem:[#allocation5 + $0x5b8] sm:$0xff]
    %v622 = vld [vmem:[#allocation5 + $0x5c0] sm:$0xff]
    %v623 = vld [vmem:[#allocation5 + $0x5c8] sm:$0xff]
    %v624 = vld [vmem:[#allocation5 + $0x5d0] sm:$0xff]
    %v625 = vld [vmem:[#allocation5 + $0x5d8] sm:$0xff]
    %v626 = vld [vmem:[#allocation5 + $0x5e0] sm:$0xff]
    %v627 = vld [vmem:[#allocation5 + $0x5e8] sm:$0xff]
    %v628 = vld [vmem:[#allocation5 + $0x5f0] sm:$0xff]
    %v629 = vld [vmem:[#allocation5 + $0x5f8] sm:$0xff]
    %v630 = vld [vmem:[#allocation5 + $0x600] sm:$0xff]
    %v631 = vld [vmem:[#allocation5 + $0x608] sm:$0xff]
    %v632 = vld [vmem:[#allocation5 + $0x610] sm:$0xff]
    %v633 = vld [vmem:[#allocation5 + $0x618] sm:$0xff]
    %v634 = vld [vmem:[%s2] sm:$0xf]
    %v636 = vlaneseq
    %v637 = vshrl.u32 %v636, 7
    %v638 = vsub.s32 0, %v637
    %v639 = vrot.slane %v634, %v638
    %v640 = vlaneseq
    %v641 = vshrl.u32 %v640, 7
    %v642 = vsub.s32 1, %v641
    %v643 = vrot.slane %v634, %v642
    %v644 = vlaneseq
    %v645 = vshrl.u32 %v644, 7
    %v646 = vsub.s32 2, %v645
    %v647 = vrot.slane %v634, %v646
    %v648 = vlaneseq
    %v649 = vshrl.u32 %v648, 7
    %v650 = vsub.s32 3, %v649
    %v651 = vrot.slane %v634, %v650
    %v852 = vunpack.c.l.b16 %v438
    %v853 = vunpack.c.h.b16 %v438
    %v854 = vunpack.c.l.b16 %v439
    %v855 = vunpack.c.h.b16 %v439
    %v856 = vunpack.c.l.b16 %v440
    %v857 = vunpack.c.h.b16 %v440
    %v858 = vunpack.c.l.b16 %v441
    %v859 = vunpack.c.h.b16 %v441
    %v860 = vunpack.c.l.b16 %v442
    %v861 = vunpack.c.h.b16 %v442
    %v862 = vunpack.c.l.b16 %v443
    %v863 = vunpack.c.h.b16 %v443
    %v864 = vunpack.c.l.b16 %v444
    %v865 = vunpack.c.h.b16 %v444
    %v866 = vunpack.c.l.b16 %v445
    %v867 = vunpack.c.h.b16 %v445
    %v868 = vunpack.c.l.b16 %v446
    %v869 = vunpack.c.h.b16 %v446
    %v870 = vunpack.c.l.b16 %v447
    %v871 = vunpack.c.h.b16 %v447
    %v872 = vunpack.c.l.b16 %v448
    %v873 = vunpack.c.h.b16 %v448
    %v874 = vunpack.c.l.b16 %v449
    %v875 = vunpack.c.h.b16 %v449
    %v876 = vunpack.c.l.b16 %v450
    %v877 = vunpack.c.h.b16 %v450
    %v878 = vunpack.c.l.b16 %v451
    %v879 = vunpack.c.h.b16 %v451
    %v880 = vunpack.c.l.b16 %v452
    %v881 = vunpack.c.h.b16 %v452
    %v882 = vunpack.c.l.b16 %v453
    %v883 = vunpack.c.h.b16 %v453
    %v884 = vunpack.c.l.b16 %v454
    %v885 = vunpack.c.h.b16 %v454
    %v886 = vunpack.c.l.b16 %v455
    %v887 = vunpack.c.h.b16 %v455
    %v888 = vunpack.c.l.b16 %v456
    %v889 = vunpack.c.h.b16 %v456
    %v890 = vunpack.c.l.b16 %v457
    %v891 = vunpack.c.h.b16 %v457
    %v892 = vunpack.c.l.b16 %v458
    %v893 = vunpack.c.h.b16 %v458
    %v894 = vunpack.c.l.b16 %v459
    %v895 = vunpack.c.h.b16 %v459
    %v896 = vunpack.c.l.b16 %v460
    %v897 = vunpack.c.h.b16 %v460
    %v898 = vunpack.c.l.b16 %v461
    %v899 = vunpack.c.h.b16 %v461
    %v900 = vunpack.c.l.b16 %v462
    %v901 = vunpack.c.h.b16 %v462
    %v902 = vunpack.c.l.b16 %v463
    %v903 = vunpack.c.h.b16 %v463
    %v904 = vunpack.c.l.b16 %v464
    %v905 = vunpack.c.h.b16 %v464
    %v906 = vunpack.c.l.b16 %v465
    %v907 = vunpack.c.h.b16 %v465
    %v908 = vunpack.c.l.b16 %v466
    %v909 = vunpack.c.h.b16 %v466
    %v910 = vunpack.c.l.b16 %v467
    %v911 = vunpack.c.h.b16 %v467
    %v912 = vunpack.c.l.b16 %v468
    %v913 = vunpack.c.h.b16 %v468
    %v914 = vunpack.c.l.b16 %v469
    %v915 = vunpack.c.h.b16 %v469
    %v916 = vunpack.c.l.b16 %v470
    %v917 = vunpack.c.h.b16 %v470
    %v918 = vunpack.c.l.b16 %v471
    %v919 = vunpack.c.h.b16 %v471
    %v920 = vunpack.c.l.b16 %v472
    %v921 = vunpack.c.h.b16 %v472
    %v922 = vunpack.c.l.b16 %v473
    %v923 = vunpack.c.h.b16 %v473
    %v924 = vunpack.c.l.b16 %v474
    %v925 = vunpack.c.h.b16 %v474
    %v926 = vunpack.c.l.b16 %v475
    %v927 = vunpack.c.h.b16 %v475
    %v928 = vunpack.c.l.b16 %v476
    %v929 = vunpack.c.h.b16 %v476
    %v930 = vunpack.c.l.b16 %v477
    %v931 = vunpack.c.h.b16 %v477
    %v932 = vunpack.c.l.b16 %v478
    %v933 = vunpack.c.h.b16 %v478
    %v934 = vunpack.c.l.b16 %v479
    %v935 = vunpack.c.h.b16 %v479
    %v936 = vunpack.c.l.b16 %v480
    %v937 = vunpack.c.h.b16 %v480
    %v938 = vunpack.c.l.b16 %v481
    %v939 = vunpack.c.h.b16 %v481
    %v940 = vunpack.c.l.b16 %v482
    %v941 = vunpack.c.h.b16 %v482
    %v942 = vunpack.c.l.b16 %v483
    %v943 = vunpack.c.h.b16 %v483
    %v944 = vunpack.c.l.b16 %v484
    %v945 = vunpack.c.h.b16 %v484
    %v946 = vunpack.c.l.b16 %v485
    %v947 = vunpack.c.h.b16 %v485
    %v948 = vunpack.c.l.b16 %v486
    %v949 = vunpack.c.h.b16 %v486
    %v950 = vunpack.c.l.b16 %v487
    %v951 = vunpack.c.h.b16 %v487
    %v952 = vunpack.c.l.b16 %v488
    %v953 = vunpack.c.h.b16 %v488
    %v954 = vunpack.c.l.b16 %v489
    %v955 = vunpack.c.h.b16 %v489
    %v956 = vunpack.c.l.b16 %v490
    %v957 = vunpack.c.h.b16 %v490
    %v958 = vunpack.c.l.b16 %v491
    %v959 = vunpack.c.h.b16 %v491
    %v960 = vunpack.c.l.b16 %v492
    %v961 = vunpack.c.h.b16 %v492
    %v962 = vunpack.c.l.b16 %v493
    %v963 = vunpack.c.h.b16 %v493
    %v964 = vunpack.c.l.b16 %v494
    %v965 = vunpack.c.h.b16 %v494
    %v966 = vunpack.c.l.b16 %v495
    %v967 = vunpack.c.h.b16 %v495
    %v968 = vunpack.c.l.b16 %v496
    %v969 = vunpack.c.h.b16 %v496
    %v970 = vunpack.c.l.b16 %v497
    %v971 = vunpack.c.h.b16 %v497
    %v972 = vunpack.c.l.b16 %v498
    %v973 = vunpack.c.h.b16 %v498
    %v974 = vunpack.c.l.b16 %v499
    %v975 = vunpack.c.h.b16 %v499
    %v976 = vunpack.c.l.b16 %v500
    %v977 = vunpack.c.h.b16 %v500
    %v978 = vunpack.c.l.b16 %v501
    %v979 = vunpack.c.h.b16 %v501
    %v980 = vunpack.c.l.b16 %v502
    %v981 = vunpack.c.h.b16 %v502
    %v982 = vunpack.c.l.b16 %v503
    %v983 = vunpack.c.h.b16 %v503
    %v984 = vunpack.c.l.b16 %v504
    %v985 = vunpack.c.h.b16 %v504
    %v986 = vunpack.c.l.b16 %v505
    %v987 = vunpack.c.h.b16 %v505
    %v988 = vunpack.c.l.b16 %v506
    %v989 = vunpack.c.h.b16 %v506
    %v990 = vunpack.c.l.b16 %v507
    %v991 = vunpack.c.h.b16 %v507
    %v992 = vunpack.c.l.b16 %v508
    %v993 = vunpack.c.h.b16 %v508
    %v994 = vunpack.c.l.b16 %v509
    %v995 = vunpack.c.h.b16 %v509
    %v996 = vunpack.c.l.b16 %v510
    %v997 = vunpack.c.h.b16 %v510
    %v998 = vunpack.c.l.b16 %v511
    %v999 = vunpack.c.h.b16 %v511
    %v1000 = vunpack.c.l.b16 %v512
    %v1001 = vunpack.c.h.b16 %v512
    %v1002 = vunpack.c.l.b16 %v513
    %v1003 = vunpack.c.h.b16 %v513
    %v1004 = vunpack.c.l.b16 %v514
    %v1005 = vunpack.c.h.b16 %v514
    %v1006 = vunpack.c.l.b16 %v515
    %v1007 = vunpack.c.h.b16 %v515
    %v1008 = vunpack.c.l.b16 %v516
    %v1009 = vunpack.c.h.b16 %v516
    %v1010 = vunpack.c.l.b16 %v517
    %v1011 = vunpack.c.h.b16 %v517
    %v1012 = vunpack.c.l.b16 %v518
    %v1013 = vunpack.c.h.b16 %v518
    %v1014 = vunpack.c.l.b16 %v519
    %v1015 = vunpack.c.h.b16 %v519
    %v1016 = vunpack.c.l.b16 %v520
    %v1017 = vunpack.c.h.b16 %v520
    %v1018 = vunpack.c.l.b16 %v521
    %v1019 = vunpack.c.h.b16 %v521
    %v1020 = vunpack.c.l.b16 %v522
    %v1021 = vunpack.c.h.b16 %v522
    %v1022 = vunpack.c.l.b16 %v523
    %v1023 = vunpack.c.h.b16 %v523
    %v1024 = vunpack.c.l.b16 %v524
    %v1025 = vunpack.c.h.b16 %v524
    %v1026 = vunpack.c.l.b16 %v525
    %v1027 = vunpack.c.h.b16 %v525
    %v1028 = vunpack.c.l.b16 %v526
    %v1029 = vunpack.c.h.b16 %v526
    %v1030 = vunpack.c.l.b16 %v527
    %v1031 = vunpack.c.h.b16 %v527
    %v1032 = vunpack.c.l.b16 %v528
    %v1033 = vunpack.c.h.b16 %v528
    %v1034 = vunpack.c.l.b16 %v529
    %v1035 = vunpack.c.h.b16 %v529
    %v1036 = vunpack.c.l.b16 %v530
    %v1037 = vunpack.c.h.b16 %v530
    %v1038 = vunpack.c.l.b16 %v531
    %v1039 = vunpack.c.h.b16 %v531
    %v1040 = vunpack.c.l.b16 %v532
    %v1041 = vunpack.c.h.b16 %v532
    %v1042 = vunpack.c.l.b16 %v533
    %v1043 = vunpack.c.h.b16 %v533
    %v1044 = vunpack.c.l.b16 %v534
    %v1045 = vunpack.c.h.b16 %v534
    %v1046 = vunpack.c.l.b16 %v535
    %v1047 = vunpack.c.h.b16 %v535
    %v1048 = vunpack.c.l.b16 %v536
    %v1049 = vunpack.c.h.b16 %v536
    %v1050 = vunpack.c.l.b16 %v537
    %v1051 = vunpack.c.h.b16 %v537
    %v1052 = vunpack.c.l.b16 %v538
    %v1053 = vunpack.c.h.b16 %v538
    %v1054 = vunpack.c.l.b16 %v539
    %v1055 = vunpack.c.h.b16 %v539
    %v1056 = vunpack.c.l.b16 %v540
    %v1057 = vunpack.c.h.b16 %v540
    %v1058 = vunpack.c.l.b16 %v541
    %v1059 = vunpack.c.h.b16 %v541
    %v1060 = vunpack.c.l.b16 %v542
    %v1061 = vunpack.c.h.b16 %v542
    %v1062 = vunpack.c.l.b16 %v543
    %v1063 = vunpack.c.h.b16 %v543
    %v1064 = vunpack.c.l.b16 %v544
    %v1065 = vunpack.c.h.b16 %v544
    %v1066 = vunpack.c.l.b16 %v545
    %v1067 = vunpack.c.h.b16 %v545
    %v1068 = vunpack.c.l.b16 %v546
    %v1069 = vunpack.c.h.b16 %v546
    %v1070 = vunpack.c.l.b16 %v547
    %v1071 = vunpack.c.h.b16 %v547
    %v1072 = vunpack.c.l.b16 %v548
    %v1073 = vunpack.c.h.b16 %v548
    %v1074 = vunpack.c.l.b16 %v549
    %v1075 = vunpack.c.h.b16 %v549
    %v1076 = vunpack.c.l.b16 %v550
    %v1077 = vunpack.c.h.b16 %v550
    %v1078 = vunpack.c.l.b16 %v551
    %v1079 = vunpack.c.h.b16 %v551
    %v1080 = vunpack.c.l.b16 %v552
    %v1081 = vunpack.c.h.b16 %v552
    %v1082 = vunpack.c.l.b16 %v553
    %v1083 = vunpack.c.h.b16 %v553
    %v1084 = vunpack.c.l.b16 %v554
    %v1085 = vunpack.c.h.b16 %v554
    %v1086 = vunpack.c.l.b16 %v555
    %v1087 = vunpack.c.h.b16 %v555
    %v1088 = vunpack.c.l.b16 %v556
    %v1089 = vunpack.c.h.b16 %v556
    %v1090 = vunpack.c.l.b16 %v557
    %v1091 = vunpack.c.h.b16 %v557
    %v1092 = vunpack.c.l.b16 %v558
    %v1093 = vunpack.c.h.b16 %v558
    %v1094 = vunpack.c.l.b16 %v559
    %v1095 = vunpack.c.h.b16 %v559
    %v1096 = vunpack.c.l.b16 %v560
    %v1097 = vunpack.c.h.b16 %v560
    %v1098 = vunpack.c.l.b16 %v561
    %v1099 = vunpack.c.h.b16 %v561
    %v1100 = vunpack.c.l.b16 %v562
    %v1101 = vunpack.c.h.b16 %v562
    %v1102 = vunpack.c.l.b16 %v563
    %v1103 = vunpack.c.h.b16 %v563
    %v1104 = vunpack.c.l.b16 %v564
    %v1105 = vunpack.c.h.b16 %v564
    %v1106 = vunpack.c.l.b16 %v565
    %v1107 = vunpack.c.h.b16 %v565
    %v1108 = vunpack.c.l.b16 %v566
    %v1109 = vunpack.c.h.b16 %v566
    %v1110 = vunpack.c.l.b16 %v567
    %v1111 = vunpack.c.h.b16 %v567
    %v1112 = vunpack.c.l.b16 %v568
    %v1113 = vunpack.c.h.b16 %v568
    %v1114 = vunpack.c.l.b16 %v569
    %v1115 = vunpack.c.h.b16 %v569
    %v1116 = vunpack.c.l.b16 %v570
    %v1117 = vunpack.c.h.b16 %v570
    %v1118 = vunpack.c.l.b16 %v571
    %v1119 = vunpack.c.h.b16 %v571
    %v1120 = vunpack.c.l.b16 %v572
    %v1121 = vunpack.c.h.b16 %v572
    %v1122 = vunpack.c.l.b16 %v573
    %v1123 = vunpack.c.h.b16 %v573
    %v1124 = vunpack.c.l.b16 %v574
    %v1125 = vunpack.c.h.b16 %v574
    %v1126 = vunpack.c.l.b16 %v575
    %v1127 = vunpack.c.h.b16 %v575
    %v1128 = vunpack.c.l.b16 %v576
    %v1129 = vunpack.c.h.b16 %v576
    %v1130 = vunpack.c.l.b16 %v577
    %v1131 = vunpack.c.h.b16 %v577
    %v1132 = vunpack.c.l.b16 %v578
    %v1133 = vunpack.c.h.b16 %v578
    %v1134 = vunpack.c.l.b16 %v579
    %v1135 = vunpack.c.h.b16 %v579
    %v1136 = vunpack.c.l.b16 %v580
    %v1137 = vunpack.c.h.b16 %v580
    %v1138 = vunpack.c.l.b16 %v581
    %v1139 = vunpack.c.h.b16 %v581
    %v1140 = vunpack.c.l.b16 %v582
    %v1141 = vunpack.c.h.b16 %v582
    %v1142 = vunpack.c.l.b16 %v583
    %v1143 = vunpack.c.h.b16 %v583
    %v1144 = vunpack.c.l.b16 %v584
    %v1145 = vunpack.c.h.b16 %v584
    %v1146 = vunpack.c.l.b16 %v585
    %v1147 = vunpack.c.h.b16 %v585
    %v1148 = vunpack.c.l.b16 %v586
    %v1149 = vunpack.c.h.b16 %v586
    %v1150 = vunpack.c.l.b16 %v587
    %v1151 = vunpack.c.h.b16 %v587
    %v1152 = vunpack.c.l.b16 %v588
    %v1153 = vunpack.c.h.b16 %v588
    %v1154 = vunpack.c.l.b16 %v589
    %v1155 = vunpack.c.h.b16 %v589
    %v1156 = vunpack.c.l.b16 %v590
    %v1157 = vunpack.c.h.b16 %v590
    %v1158 = vunpack.c.l.b16 %v591
    %v1159 = vunpack.c.h.b16 %v591
    %v1160 = vunpack.c.l.b16 %v592
    %v1161 = vunpack.c.h.b16 %v592
    %v1162 = vunpack.c.l.b16 %v593
    %v1163 = vunpack.c.h.b16 %v593
    %v1164 = vunpack.c.l.b16 %v594
    %v1165 = vunpack.c.h.b16 %v594
    %v1166 = vunpack.c.l.b16 %v595
    %v1167 = vunpack.c.h.b16 %v595
    %v1168 = vunpack.c.l.b16 %v596
    %v1169 = vunpack.c.h.b16 %v596
    %v1170 = vunpack.c.l.b16 %v597
    %v1171 = vunpack.c.h.b16 %v597
    %v1172 = vunpack.c.l.b16 %v598
    %v1173 = vunpack.c.h.b16 %v598
    %v1174 = vunpack.c.l.b16 %v599
    %v1175 = vunpack.c.h.b16 %v599
    %v1176 = vunpack.c.l.b16 %v600
    %v1177 = vunpack.c.h.b16 %v600
    %v1178 = vunpack.c.l.b16 %v601
    %v1179 = vunpack.c.h.b16 %v601
    %v1180 = vunpack.c.l.b16 %v602
    %v1181 = vunpack.c.h.b16 %v602
    %v1182 = vunpack.c.l.b16 %v603
    %v1183 = vunpack.c.h.b16 %v603
    %v1184 = vunpack.c.l.b16 %v604
    %v1185 = vunpack.c.h.b16 %v604
    %v1186 = vunpack.c.l.b16 %v605
    %v1187 = vunpack.c.h.b16 %v605
    %v1188 = vunpack.c.l.b16 %v606
    %v1189 = vunpack.c.h.b16 %v606
    %v1190 = vunpack.c.l.b16 %v607
    %v1191 = vunpack.c.h.b16 %v607
    %v1192 = vunpack.c.l.b16 %v608
    %v1193 = vunpack.c.h.b16 %v608
    %v1194 = vunpack.c.l.b16 %v609
    %v1195 = vunpack.c.h.b16 %v609
    %v1196 = vunpack.c.l.b16 %v610
    %v1197 = vunpack.c.h.b16 %v610
    %v1198 = vunpack.c.l.b16 %v611
    %v1199 = vunpack.c.h.b16 %v611
    %v1200 = vunpack.c.l.b16 %v612
    %v1201 = vunpack.c.h.b16 %v612
    %v1202 = vunpack.c.l.b16 %v613
    %v1203 = vunpack.c.h.b16 %v613
    %v1204 = vunpack.c.l.b16 %v614
    %v1205 = vunpack.c.h.b16 %v614
    %v1206 = vunpack.c.l.b16 %v615
    %v1207 = vunpack.c.h.b16 %v615
    %v1208 = vunpack.c.l.b16 %v616
    %v1209 = vunpack.c.h.b16 %v616
    %v1210 = vunpack.c.l.b16 %v617
    %v1211 = vunpack.c.h.b16 %v617
    %v1212 = vunpack.c.l.b16 %v618
    %v1213 = vunpack.c.h.b16 %v618
    %v1214 = vunpack.c.l.b16 %v619
    %v1215 = vunpack.c.h.b16 %v619
    %v1216 = vunpack.c.l.b16 %v620
    %v1217 = vunpack.c.h.b16 %v620
    %v1218 = vunpack.c.l.b16 %v621
    %v1219 = vunpack.c.h.b16 %v621
    %v1220 = vunpack.c.l.b16 %v622
    %v1221 = vunpack.c.h.b16 %v622
    %v1222 = vunpack.c.l.b16 %v623
    %v1223 = vunpack.c.h.b16 %v623
    %v1224 = vunpack.c.l.b16 %v624
    %v1225 = vunpack.c.h.b16 %v624
    %v1226 = vunpack.c.l.b16 %v625
    %v1227 = vunpack.c.h.b16 %v625
    %v1228 = vunpack.c.l.b16 %v626
    %v1229 = vunpack.c.h.b16 %v626
    %v1230 = vunpack.c.l.b16 %v627
    %v1231 = vunpack.c.h.b16 %v627
    %v1232 = vunpack.c.l.b16 %v628
    %v1233 = vunpack.c.h.b16 %v628
    %v1234 = vunpack.c.l.b16 %v629
    %v1235 = vunpack.c.h.b16 %v629
    %v1236 = vunpack.c.l.b16 %v630
    %v1237 = vunpack.c.h.b16 %v630
    %v1238 = vunpack.c.l.b16 %v631
    %v1239 = vunpack.c.h.b16 %v631
    %v1240 = vunpack.c.l.b16 %v632
    %v1241 = vunpack.c.h.b16 %v632
    %v1242 = vunpack.c.l.b16 %v633
    %v1243 = vunpack.c.h.b16 %v633
    %v1244 = vpack.c.b16 %v856, %v852
    %v1245 = vpack.c.b16 %v857, %v853
    %v1246 = vpack.c.b16 %v858, %v854
    %v1247 = vpack.c.b16 %v859, %v855
    %v1248 = vpack.c.b16 %v864, %v860
    %v1249 = vpack.c.b16 %v865, %v861
    %v1250 = vpack.c.b16 %v866, %v862
    %v1251 = vpack.c.b16 %v867, %v863
    %v1252 = vpack.c.b16 %v872, %v868
    %v1253 = vpack.c.b16 %v873, %v869
    %v1254 = vpack.c.b16 %v874, %v870
    %v1255 = vpack.c.b16 %v875, %v871
    %v1256 = vpack.c.b16 %v880, %v876
    %v1257 = vpack.c.b16 %v881, %v877
    %v1258 = vpack.c.b16 %v882, %v878
    %v1259 = vpack.c.b16 %v883, %v879
    %v1260 = vpack.c.b16 %v888, %v884
    %v1261 = vpack.c.b16 %v889, %v885
    %v1262 = vpack.c.b16 %v890, %v886
    %v1263 = vpack.c.b16 %v891, %v887
    %v1264 = vpack.c.b16 %v896, %v892
    %v1265 = vpack.c.b16 %v897, %v893
    %v1266 = vpack.c.b16 %v898, %v894
    %v1267 = vpack.c.b16 %v899, %v895
    %v1268 = vpack.c.b16 %v904, %v900
    %v1269 = vpack.c.b16 %v905, %v901
    %v1270 = vpack.c.b16 %v906, %v902
    %v1271 = vpack.c.b16 %v907, %v903
    %v1272 = vpack.c.b16 %v912, %v908
    %v1273 = vpack.c.b16 %v913, %v909
    %v1274 = vpack.c.b16 %v914, %v910
    %v1275 = vpack.c.b16 %v915, %v911
    %v1276 = vpack.c.b16 %v920, %v916
    %v1277 = vpack.c.b16 %v921, %v917
    %v1278 = vpack.c.b16 %v922, %v918
    %v1279 = vpack.c.b16 %v923, %v919
    %v1280 = vpack.c.b16 %v928, %v924
    %v1281 = vpack.c.b16 %v929, %v925
    %v1282 = vpack.c.b16 %v930, %v926
    %v1283 = vpack.c.b16 %v931, %v927
    %v1284 = vpack.c.b16 %v936, %v932
    %v1285 = vpack.c.b16 %v937, %v933
    %v1286 = vpack.c.b16 %v938, %v934
    %v1287 = vpack.c.b16 %v939, %v935
    %v1288 = vpack.c.b16 %v944, %v940
    %v1289 = vpack.c.b16 %v945, %v941
    %v1290 = vpack.c.b16 %v946, %v942
    %v1291 = vpack.c.b16 %v947, %v943
    %v1292 = vpack.c.b16 %v952, %v948
    %v1293 = vpack.c.b16 %v953, %v949
    %v1294 = vpack.c.b16 %v954, %v950
    %v1295 = vpack.c.b16 %v955, %v951
    %v1296 = vpack.c.b16 %v960, %v956
    %v1297 = vpack.c.b16 %v961, %v957
    %v1298 = vpack.c.b16 %v962, %v958
    %v1299 = vpack.c.b16 %v963, %v959
    %v1300 = vpack.c.b16 %v968, %v964
    %v1301 = vpack.c.b16 %v969, %v965
    %v1302 = vpack.c.b16 %v970, %v966
    %v1303 = vpack.c.b16 %v971, %v967
    %v1304 = vpack.c.b16 %v976, %v972
    %v1305 = vpack.c.b16 %v977, %v973
    %v1306 = vpack.c.b16 %v978, %v974
    %v1307 = vpack.c.b16 %v979, %v975
    %v1308 = vpack.c.b16 %v984, %v980
    %v1309 = vpack.c.b16 %v985, %v981
    %v1310 = vpack.c.b16 %v986, %v982
    %v1311 = vpack.c.b16 %v987, %v983
    %v1312 = vpack.c.b16 %v992, %v988
    %v1313 = vpack.c.b16 %v993, %v989
    %v1314 = vpack.c.b16 %v994, %v990
    %v1315 = vpack.c.b16 %v995, %v991
    %v1316 = vpack.c.b16 %v1000, %v996
    %v1317 = vpack.c.b16 %v1001, %v997
    %v1318 = vpack.c.b16 %v1002, %v998
    %v1319 = vpack.c.b16 %v1003, %v999
    %v1320 = vpack.c.b16 %v1008, %v1004
    %v1321 = vpack.c.b16 %v1009, %v1005
    %v1322 = vpack.c.b16 %v1010, %v1006
    %v1323 = vpack.c.b16 %v1011, %v1007
    %v1324 = vpack.c.b16 %v1016, %v1012
    %v1325 = vpack.c.b16 %v1017, %v1013
    %v1326 = vpack.c.b16 %v1018, %v1014
    %v1327 = vpack.c.b16 %v1019, %v1015
    %v1328 = vpack.c.b16 %v1024, %v1020
    %v1329 = vpack.c.b16 %v1025, %v1021
    %v1330 = vpack.c.b16 %v1026, %v1022
    %v1331 = vpack.c.b16 %v1027, %v1023
    %v1332 = vpack.c.b16 %v1032, %v1028
    %v1333 = vpack.c.b16 %v1033, %v1029
    %v1334 = vpack.c.b16 %v1034, %v1030
    %v1335 = vpack.c.b16 %v1035, %v1031
    %v1336 = vpack.c.b16 %v1040, %v1036
    %v1337 = vpack.c.b16 %v1041, %v1037
    %v1338 = vpack.c.b16 %v1042, %v1038
    %v1339 = vpack.c.b16 %v1043, %v1039
    %v1340 = vpack.c.b16 %v1048, %v1044
    %v1341 = vpack.c.b16 %v1049, %v1045
    %v1342 = vpack.c.b16 %v1050, %v1046
    %v1343 = vpack.c.b16 %v1051, %v1047
    %v1344 = vpack.c.b16 %v1056, %v1052
    %v1345 = vpack.c.b16 %v1057, %v1053
    %v1346 = vpack.c.b16 %v1058, %v1054
    %v1347 = vpack.c.b16 %v1059, %v1055
    %v1348 = vpack.c.b16 %v1064, %v1060
    %v1349 = vpack.c.b16 %v1065, %v1061
    %v1350 = vpack.c.b16 %v1066, %v1062
    %v1351 = vpack.c.b16 %v1067, %v1063
    %v1352 = vpack.c.b16 %v1072, %v1068
    %v1353 = vpack.c.b16 %v1073, %v1069
    %v1354 = vpack.c.b16 %v1074, %v1070
    %v1355 = vpack.c.b16 %v1075, %v1071
    %v1356 = vpack.c.b16 %v1080, %v1076
    %v1357 = vpack.c.b16 %v1081, %v1077
    %v1358 = vpack.c.b16 %v1082, %v1078
    %v1359 = vpack.c.b16 %v1083, %v1079
    %v1360 = vpack.c.b16 %v1088, %v1084
    %v1361 = vpack.c.b16 %v1089, %v1085
    %v1362 = vpack.c.b16 %v1090, %v1086
    %v1363 = vpack.c.b16 %v1091, %v1087
    %v1364 = vpack.c.b16 %v1096, %v1092
    %v1365 = vpack.c.b16 %v1097, %v1093
    %v1366 = vpack.c.b16 %v1098, %v1094
    %v1367 = vpack.c.b16 %v1099, %v1095
    %v1368 = vpack.c.b16 %v1104, %v1100
    %v1369 = vpack.c.b16 %v1105, %v1101
    %v1370 = vpack.c.b16 %v1106, %v1102
    %v1371 = vpack.c.b16 %v1107, %v1103
    %v1372 = vpack.c.b16 %v1112, %v1108
    %v1373 = vpack.c.b16 %v1113, %v1109
    %v1374 = vpack.c.b16 %v1114, %v1110
    %v1375 = vpack.c.b16 %v1115, %v1111
    %v1376 = vpack.c.b16 %v1120, %v1116
    %v1377 = vpack.c.b16 %v1121, %v1117
    %v1378 = vpack.c.b16 %v1122, %v1118
    %v1379 = vpack.c.b16 %v1123, %v1119
    %v1380 = vpack.c.b16 %v1128, %v1124
    %v1381 = vpack.c.b16 %v1129, %v1125
    %v1382 = vpack.c.b16 %v1130, %v1126
    %v1383 = vpack.c.b16 %v1131, %v1127
    %v1384 = vpack.c.b16 %v1136, %v1132
    %v1385 = vpack.c.b16 %v1137, %v1133
    %v1386 = vpack.c.b16 %v1138, %v1134
    %v1387 = vpack.c.b16 %v1139, %v1135
    %v1388 = vpack.c.b16 %v1144, %v1140
    %v1389 = vpack.c.b16 %v1145, %v1141
    %v1390 = vpack.c.b16 %v1146, %v1142
    %v1391 = vpack.c.b16 %v1147, %v1143
    %v1392 = vpack.c.b16 %v1152, %v1148
    %v1393 = vpack.c.b16 %v1153, %v1149
    %v1394 = vpack.c.b16 %v1154, %v1150
    %v1395 = vpack.c.b16 %v1155, %v1151
    %v1396 = vpack.c.b16 %v1160, %v1156
    %v1397 = vpack.c.b16 %v1161, %v1157
    %v1398 = vpack.c.b16 %v1162, %v1158
    %v1399 = vpack.c.b16 %v1163, %v1159
    %v1400 = vpack.c.b16 %v1168, %v1164
    %v1401 = vpack.c.b16 %v1169, %v1165
    %v1402 = vpack.c.b16 %v1170, %v1166
    %v1403 = vpack.c.b16 %v1171, %v1167
    %v1404 = vpack.c.b16 %v1176, %v1172
    %v1405 = vpack.c.b16 %v1177, %v1173
    %v1406 = vpack.c.b16 %v1178, %v1174
    %v1407 = vpack.c.b16 %v1179, %v1175
    %v1408 = vpack.c.b16 %v1184, %v1180
    %v1409 = vpack.c.b16 %v1185, %v1181
    %v1410 = vpack.c.b16 %v1186, %v1182
    %v1411 = vpack.c.b16 %v1187, %v1183
    %v1412 = vpack.c.b16 %v1192, %v1188
    %v1413 = vpack.c.b16 %v1193, %v1189
    %v1414 = vpack.c.b16 %v1194, %v1190
    %v1415 = vpack.c.b16 %v1195, %v1191
    %v1416 = vpack.c.b16 %v1200, %v1196
    %v1417 = vpack.c.b16 %v1201, %v1197
    %v1418 = vpack.c.b16 %v1202, %v1198
    %v1419 = vpack.c.b16 %v1203, %v1199
    %v1420 = vpack.c.b16 %v1208, %v1204
    %v1421 = vpack.c.b16 %v1209, %v1205
    %v1422 = vpack.c.b16 %v1210, %v1206
    %v1423 = vpack.c.b16 %v1211, %v1207
    %v1424 = vpack.c.b16 %v1216, %v1212
    %v1425 = vpack.c.b16 %v1217, %v1213
    %v1426 = vpack.c.b16 %v1218, %v1214
    %v1427 = vpack.c.b16 %v1219, %v1215
    %v1428 = vpack.c.b16 %v1224, %v1220
    %v1429 = vpack.c.b16 %v1225, %v1221
    %v1430 = vpack.c.b16 %v1226, %v1222
    %v1431 = vpack.c.b16 %v1227, %v1223
    %v1432 = vpack.c.b16 %v1232, %v1228
    %v1433 = vpack.c.b16 %v1233, %v1229
    %v1434 = vpack.c.b16 %v1234, %v1230
    %v1435 = vpack.c.b16 %v1235, %v1231
    %v1436 = vpack.c.b16 %v1240, %v1236
    %v1437 = vpack.c.b16 %v1241, %v1237
    %v1438 = vpack.c.b16 %v1242, %v1238
    %v1439 = vpack.c.b16 %v1243, %v1239
    %vm1636 = vcmask 130048
    %v1638 = vsel %vm1636, %v332, 0
    %v1641 = vsel %vm1636, %v339, 0
    %v1644 = vsel %vm1636, %v346, 0
    %v1647 = vsel %vm1636, %v353, 0
    %v1650 = vsel %vm1636, %v360, 0
    %v1653 = vsel %vm1636, %v367, 0
    %v1656 = vsel %vm1636, %v374, 0
    %v1659 = vsel %vm1636, %v381, 0
    %v1662 = vsel %vm1636, %v388, 0
    %v1665 = vsel %vm1636, %v395, 0
    %v1668 = vsel %vm1636, %v402, 0
    %v1671 = vsel %vm1636, %v409, 0
    %v1674 = vsel %vm1636, %v416, 0
    %v1677 = vsel %vm1636, %v423, 0
    %v1680 = vsel %vm1636, %v430, 0
    %v1683 = vsel %vm1636, %v437, 0
    %1685 = vmatprep.subr.bf16.mxu0 %v1245
    %1686 = vmatpush1.bf16.msra.mxu0 %v1244
    %1687 = vmatprep.subr.bf16.mxu0 %v1249
    %1688 = vmatpush1.bf16.msra.mxu0 %v1248
    %1689 = vmatprep.subr.bf16.mxu0 %v1253
    %1690 = vmatpush1.bf16.msra.mxu0 %v1252
    %1691 = vmatprep.subr.bf16.mxu0 %v1257
    %1692 = vmatpush1.bf16.msra.mxu0 %v1256
    %1693 = vmatprep.subr.bf16.mxu0 %v1261
    %1694 = vmatpush1.bf16.msra.mxu0 %v1260
    %1695 = vmatprep.subr.bf16.mxu0 %v1265
    %1696 = vmatpush1.bf16.msra.mxu0 %v1264
    %1697 = vmatprep.subr.bf16.mxu0 %v1269
    %1698 = vmatpush1.bf16.msra.mxu0 %v1268
    %1699 = vmatprep.subr.bf16.mxu0 %v1273
    %1700 = vmatpush1.bf16.msra.mxu0 %v1272
    %1701 = vmatprep.subr.bf16.mxu0 %v1277
    %1702 = vmatpush1.bf16.msra.mxu0 %v1276
    %1703 = vmatprep.subr.bf16.mxu0 %v1281
    %1704 = vmatpush1.bf16.msra.mxu0 %v1280
    %1705 = vmatprep.subr.bf16.mxu0 %v1285
    %1706 = vmatpush1.bf16.msra.mxu0 %v1284
    %1707 = vmatprep.subr.bf16.mxu0 %v1289
    %1708 = vmatpush1.bf16.msra.mxu0 %v1288
    %1709 = vmatprep.subr.bf16.mxu0 %v1293
    %1710 = vmatpush1.bf16.msra.mxu0 %v1292
    %1711 = vmatprep.subr.bf16.mxu0 %v1297
    %1712 = vmatpush1.bf16.msra.mxu0 %v1296
    %1713 = vmatprep.subr.bf16.mxu0 %v1301
    %1714 = vmatpush1.bf16.msra.mxu0 %v1300
    %1715 = vmatprep.subr.bf16.mxu0 %v1305
    %1716 = vmatpush1.bf16.msra.mxu0 %v1304
    %1717 = vmatprep.mubr.bf16.mxu0 %v327
    %1718 = vmatmul.mubr.bf16.gmra.mrb[0].mxu0 %v326
    %v1719 = vpop.f32.mrb[0].mxu0
    %v1720 = vadd.f32 %v639, %v1719
    %v1721 = vpop.f32.mrb[0].mxu0
    %v1722 = vadd.f32 %v643, %v1721
    %v1723 = vpop.f32.mrb[0].mxu0
    %v1724 = vadd.f32 %v639, %v1723
    %v1725 = vpop.f32.mrb[0].mxu0
    %v1726 = vadd.f32 %v643, %v1725
    %1727 = vmatprep.mubr.bf16.mxu0 %v334
    %1728 = vmatmul.mubr.bf16.gmra.mrb[0].mxu0 %v333
    %v1729 = vpop.f32.mrb[0].mxu0
    %v1730 = vadd.f32 %v639, %v1729
    %v1731 = vpop.f32.mrb[0].mxu0
    %v1732 = vadd.f32 %v643, %v1731
    %v1733 = vpop.f32.mrb[0].mxu0
    %v1734 = vadd.f32 %v639, %v1733
    %v1735 = vpop.f32.mrb[0].mxu0
    %v1736 = vadd.f32 %v643, %v1735
    %1737 = vmatprep.mubr.bf16.mxu0 %v341
    %1738 = vmatmul.mubr.bf16.gmra.mrb[0].mxu0 %v340
    %v1739 = vpop.f32.mrb[0].mxu0
    %v1740 = vadd.f32 %v639, %v1739
    %v1741 = vpop.f32.mrb[0].mxu0
    %v1742 = vadd.f32 %v643, %v1741
    %v1743 = vpop.f32.mrb[0].mxu0
    %v1744 = vadd.f32 %v639, %v1743
    %v1745 = vpop.f32.mrb[0].mxu0
    %v1746 = vadd.f32 %v643, %v1745
    %1747 = vmatprep.mubr.bf16.mxu0 %v348
    %1748 = vmatmul.mubr.bf16.gmra.mrb[0].mxu0 %v347
    %v1749 = vpop.f32.mrb[0].mxu0
    %v1750 = vadd.f32 %v639, %v1749
    %v1751 = vpop.f32.mrb[0].mxu0
    %v1752 = vadd.f32 %v643, %v1751
    %v1753 = vpop.f32.mrb[0].mxu0
    %v1754 = vadd.f32 %v639, %v1753
    %v1755 = vpop.f32.mrb[0].mxu0
    %v1756 = vadd.f32 %v643, %v1755
    %1757 = vmatprep.mubr.bf16.mxu0 %v355
    %1758 = vmatmul.mubr.bf16.gmra.mrb[0].mxu0 %v354
    %v1759 = vpop.f32.mrb[0].mxu0
    %v1760 = vadd.f32 %v639, %v1759
    %v1761 = vpop.f32.mrb[0].mxu0
    %v1762 = vadd.f32 %v643, %v1761
    %v1763 = vpop.f32.mrb[0].mxu0
    %v1764 = vadd.f32 %v639, %v1763
    %v1765 = vpop.f32.mrb[0].mxu0
    %v1766 = vadd.f32 %v643, %v1765
    %1767 = vmatprep.mubr.bf16.mxu0 %v362
    %1768 = vmatmul.mubr.bf16.gmra.mrb[0].mxu0 %v361
    %v1769 = vpop.f32.mrb[0].mxu0
    %v1770 = vadd.f32 %v639, %v1769
    %v1771 = vpop.f32.mrb[0].mxu0
    %v1772 = vadd.f32 %v643, %v1771
    %v1773 = vpop.f32.mrb[0].mxu0
    %v1774 = vadd.f32 %v639, %v1773
    %v1775 = vpop.f32.mrb[0].mxu0
    %v1776 = vadd.f32 %v643, %v1775
    %1777 = vmatprep.mubr.bf16.mxu0 %v369
    %1778 = vmatmul.mubr.bf16.gmra.mrb[0].mxu0 %v368
    %v1779 = vpop.f32.mrb[0].mxu0
    %v1780 = vadd.f32 %v639, %v1779
    %v1781 = vpop.f32.mrb[0].mxu0
    %v1782 = vadd.f32 %v643, %v1781
    %v1783 = vpop.f32.mrb[0].mxu0
    %v1784 = vadd.f32 %v639, %v1783
    %v1785 = vpop.f32.mrb[0].mxu0
    %v1786 = vadd.f32 %v643, %v1785
    %1787 = vmatprep.mubr.bf16.mxu0 %v376
    %1788 = vmatmul.mubr.bf16.gmra.mrb[0].mxu0 %v375
    %v1789 = vpop.f32.mrb[0].mxu0
    %v1790 = vadd.f32 %v639, %v1789
    %v1791 = vpop.f32.mrb[0].mxu0
    %v1792 = vadd.f32 %v643, %v1791
    %v1793 = vpop.f32.mrb[0].mxu0
    %v1794 = vadd.f32 %v639, %v1793
    %v1795 = vpop.f32.mrb[0].mxu0
    %v1796 = vadd.f32 %v643, %v1795
    %1797 = vmatprep.mubr.bf16.mxu0 %v383
    %1798 = vmatmul.mubr.bf16.gmra.mrb[0].mxu0 %v382
    %v1799 = vpop.f32.mrb[0].mxu0
    %v1800 = vadd.f32 %v639, %v1799
    %v1801 = vpop.f32.mrb[0].mxu0
    %v1802 = vadd.f32 %v643, %v1801
    %v1803 = vpop.f32.mrb[0].mxu0
    %v1804 = vadd.f32 %v639, %v1803
    %v1805 = vpop.f32.mrb[0].mxu0
    %v1806 = vadd.f32 %v643, %v1805
    %1807 = vmatprep.mubr.bf16.mxu0 %v390
    %1808 = vmatmul.mubr.bf16.gmra.mrb[0].mxu0 %v389
    %v1809 = vpop.f32.mrb[0].mxu0
    %v1810 = vadd.f32 %v639, %v1809
    %v1811 = vpop.f32.mrb[0].mxu0
    %v1812 = vadd.f32 %v643, %v1811
    %v1813 = vpop.f32.mrb[0].mxu0
    %v1814 = vadd.f32 %v639, %v1813
    %v1815 = vpop.f32.mrb[0].mxu0
    %v1816 = vadd.f32 %v643, %v1815
    %1817 = vmatprep.mubr.bf16.mxu0 %v397
    %1818 = vmatmul.mubr.bf16.gmra.mrb[0].mxu0 %v396
    %v1819 = vpop.f32.mrb[0].mxu0
    %v1820 = vadd.f32 %v639, %v1819
    %v1821 = vpop.f32.mrb[0].mxu0
    %v1822 = vadd.f32 %v643, %v1821
    %v1823 = vpop.f32.mrb[0].mxu0
    %v1824 = vadd.f32 %v639, %v1823
    %v1825 = vpop.f32.mrb[0].mxu0
    %v1826 = vadd.f32 %v643, %v1825
    %1827 = vmatprep.mubr.bf16.mxu0 %v404
    %1828 = vmatmul.mubr.bf16.gmra.mrb[0].mxu0 %v403
    %v1829 = vpop.f32.mrb[0].mxu0
    %v1830 = vadd.f32 %v639, %v1829
    %v1831 = vpop.f32.mrb[0].mxu0
    %v1832 = vadd.f32 %v643, %v1831
    %v1833 = vpop.f32.mrb[0].mxu0
    %v1834 = vadd.f32 %v639, %v1833
    %v1835 = vpop.f32.mrb[0].mxu0
    %v1836 = vadd.f32 %v643, %v1835
    %1837 = vmatprep.mubr.bf16.mxu0 %v411
    %1838 = vmatmul.mubr.bf16.gmra.mrb[0].mxu0 %v410
    %v1839 = vpop.f32.mrb[0].mxu0
    %v1840 = vadd.f32 %v639, %v1839
    %v1841 = vpop.f32.mrb[0].mxu0
    %v1842 = vadd.f32 %v643, %v1841
    %v1843 = vpop.f32.mrb[0].mxu0
    %v1844 = vadd.f32 %v639, %v1843
    %v1845 = vpop.f32.mrb[0].mxu0
    %v1846 = vadd.f32 %v643, %v1845
    %1847 = vmatprep.mubr.bf16.mxu0 %v418
    %1848 = vmatmul.mubr.bf16.gmra.mrb[0].mxu0 %v417
    %v1849 = vpop.f32.mrb[0].mxu0
    %v1850 = vadd.f32 %v639, %v1849
    %v1851 = vpop.f32.mrb[0].mxu0
    %v1852 = vadd.f32 %v643, %v1851
    %v1853 = vpop.f32.mrb[0].mxu0
    %v1854 = vadd.f32 %v639, %v1853
    %v1855 = vpop.f32.mrb[0].mxu0
    %v1856 = vadd.f32 %v643, %v1855
    %1857 = vmatprep.mubr.bf16.mxu0 %v425
    %1858 = vmatmul.mubr.bf16.gmra.mrb[0].mxu0 %v424
    %v1859 = vpop.f32.mrb[0].mxu0
    %v1860 = vadd.f32 %v639, %v1859
    %v1861 = vpop.f32.mrb[0].mxu0
    %v1862 = vadd.f32 %v643, %v1861
    %v1863 = vpop.f32.mrb[0].mxu0
    %v1864 = vadd.f32 %v639, %v1863
    %v1865 = vpop.f32.mrb[0].mxu0
    %v1866 = vadd.f32 %v643, %v1865
    %1867 = vmatprep.mubr.bf16.mxu0 %v432
    %1868 = vmatmul.mubr.bf16.gmra.mrb[0].mxu0 %v431
    %v1869 = vpop.f32.mrb[0].mxu0
    %v1870 = vadd.f32 %v639, %v1869
    %v1871 = vpop.f32.mrb[0].mxu0
    %v1872 = vadd.f32 %v643, %v1871
    %v1873 = vpop.f32.mrb[0].mxu0
    %v1874 = vadd.f32 %v639, %v1873
    %v1875 = vpop.f32.mrb[0].mxu0
    %v1876 = vadd.f32 %v643, %v1875
    %1877 = vdwg.mxu0
    %1878 = vmatprep.subr.bf16.mxu0 %v1309
    %1879 = vmatpush1.bf16.msra.mxu0 %v1308
    %1880 = vmatprep.subr.bf16.mxu0 %v1313
    %1881 = vmatpush1.bf16.msra.mxu0 %v1312
    %1882 = vmatprep.subr.bf16.mxu0 %v1317
    %1883 = vmatpush1.bf16.msra.mxu0 %v1316
    %1884 = vmatprep.subr.bf16.mxu0 %v1321
    %1885 = vmatpush1.bf16.msra.mxu0 %v1320
    %1886 = vmatprep.subr.bf16.mxu0 %v1325
    %1887 = vmatpush1.bf16.msra.mxu0 %v1324
    %1888 = vmatprep.subr.bf16.mxu0 %v1329
    %1889 = vmatpush1.bf16.msra.mxu0 %v1328
    %1890 = vmatprep.subr.bf16.mxu0 %v1333
    %1891 = vmatpush1.bf16.msra.mxu0 %v1332
    %1892 = vmatprep.subr.bf16.mxu0 %v1337
    %1893 = vmatpush1.bf16.msra.mxu0 %v1336
    %1894 = vmatprep.subr.bf16.mxu0 %v1341
    %1895 = vmatpush1.bf16.msra.mxu0 %v1340
    %1896 = vmatprep.subr.bf16.mxu0 %v1345
    %1897 = vmatpush1.bf16.msra.mxu0 %v1344
    %1898 = vmatprep.subr.bf16.mxu0 %v1349
    %1899 = vmatpush1.bf16.msra.mxu0 %v1348
    %1900 = vmatprep.subr.bf16.mxu0 %v1353
    %1901 = vmatpush1.bf16.msra.mxu0 %v1352
    %1902 = vmatprep.subr.bf16.mxu0 %v1357
    %1903 = vmatpush1.bf16.msra.mxu0 %v1356
    %1904 = vmatprep.subr.bf16.mxu0 %v1361
    %1905 = vmatpush1.bf16.msra.mxu0 %v1360
    %1906 = vmatprep.subr.bf16.mxu0 %v1365
    %1907 = vmatpush1.bf16.msra.mxu0 %v1364
    %1908 = vmatprep.subr.bf16.mxu0 %v1369
    %1909 = vmatpush1.bf16.msra.mxu0 %v1368
    %1910 = vmatprep.mubr.bf16.mxu0 %v329
    %1911 = vmatmul.mubr.bf16.gmra.mrb[0].mxu0 %v328
    %v1912 = vpop.f32.mrb[0].mxu0
    %v1913 = vadd.f32 %v1720, %v1912
    %v1914 = vpop.f32.mrb[0].mxu0
    %v1915 = vadd.f32 %v1722, %v1914
    %v1916 = vpop.f32.mrb[0].mxu0
    %v1917 = vadd.f32 %v1724, %v1916
    %v1918 = vpop.f32.mrb[0].mxu0
    %v1919 = vadd.f32 %v1726, %v1918
    %1920 = vmatprep.mubr.bf16.mxu0 %v336
    %1921 = vmatmul.mubr.bf16.gmra.mrb[0].mxu0 %v335
    %v1922 = vpop.f32.mrb[0].mxu0
    %v1923 = vadd.f32 %v1730, %v1922
    %v1924 = vpop.f32.mrb[0].mxu0
    %v1925 = vadd.f32 %v1732, %v1924
    %v1926 = vpop.f32.mrb[0].mxu0
    %v1927 = vadd.f32 %v1734, %v1926
    %v1928 = vpop.f32.mrb[0].mxu0
    %v1929 = vadd.f32 %v1736, %v1928
    %1930 = vmatprep.mubr.bf16.mxu0 %v343
    %1931 = vmatmul.mubr.bf16.gmra.mrb[0].mxu0 %v342
    %v1932 = vpop.f32.mrb[0].mxu0
    %v1933 = vadd.f32 %v1740, %v1932
    %v1934 = vpop.f32.mrb[0].mxu0
    %v1935 = vadd.f32 %v1742, %v1934
    %v1936 = vpop.f32.mrb[0].mxu0
    %v1937 = vadd.f32 %v1744, %v1936
    %v1938 = vpop.f32.mrb[0].mxu0
    %v1939 = vadd.f32 %v1746, %v1938
    %1940 = vmatprep.mubr.bf16.mxu0 %v350
    %1941 = vmatmul.mubr.bf16.gmra.mrb[0].mxu0 %v349
    %v1942 = vpop.f32.mrb[0].mxu0
    %v1943 = vadd.f32 %v1750, %v1942
    %v1944 = vpop.f32.mrb[0].mxu0
    %v1945 = vadd.f32 %v1752, %v1944
    %v1946 = vpop.f32.mrb[0].mxu0
    %v1947 = vadd.f32 %v1754, %v1946
    %v1948 = vpop.f32.mrb[0].mxu0
    %v1949 = vadd.f32 %v1756, %v1948
    %1950 = vmatprep.mubr.bf16.mxu0 %v357
    %1951 = vmatmul.mubr.bf16.gmra.mrb[0].mxu0 %v356
    %v1952 = vpop.f32.mrb[0].mxu0
    %v1953 = vadd.f32 %v1760, %v1952
    %v1954 = vpop.f32.mrb[0].mxu0
    %v1955 = vadd.f32 %v1762, %v1954
    %v1956 = vpop.f32.mrb[0].mxu0
    %v1957 = vadd.f32 %v1764, %v1956
    %v1958 = vpop.f32.mrb[0].mxu0
    %v1959 = vadd.f32 %v1766, %v1958
    %1960 = vmatprep.mubr.bf16.mxu0 %v364
    %1961 = vmatmul.mubr.bf16.gmra.mrb[0].mxu0 %v363
    %v1962 = vpop.f32.mrb[0].mxu0
    %v1963 = vadd.f32 %v1770, %v1962
    %v1964 = vpop.f32.mrb[0].mxu0
    %v1965 = vadd.f32 %v1772, %v1964
    %v1966 = vpop.f32.mrb[0].mxu0
    %v1967 = vadd.f32 %v1774, %v1966
    %v1968 = vpop.f32.mrb[0].mxu0
    %v1969 = vadd.f32 %v1776, %v1968
    %1970 = vmatprep.mubr.bf16.mxu0 %v371
    %1971 = vmatmul.mubr.bf16.gmra.mrb[0].mxu0 %v370
    %v1972 = vpop.f32.mrb[0].mxu0
    %v1973 = vadd.f32 %v1780, %v1972
    %v1974 = vpop.f32.mrb[0].mxu0
    %v1975 = vadd.f32 %v1782, %v1974
    %v1976 = vpop.f32.mrb[0].mxu0
    %v1977 = vadd.f32 %v1784, %v1976
    %v1978 = vpop.f32.mrb[0].mxu0
    %v1979 = vadd.f32 %v1786, %v1978
    %1980 = vmatprep.mubr.bf16.mxu0 %v378
    %1981 = vmatmul.mubr.bf16.gmra.mrb[0].mxu0 %v377
    %v1982 = vpop.f32.mrb[0].mxu0
    %v1983 = vadd.f32 %v1790, %v1982
    %v1984 = vpop.f32.mrb[0].mxu0
    %v1985 = vadd.f32 %v1792, %v1984
    %v1986 = vpop.f32.mrb[0].mxu0
    %v1987 = vadd.f32 %v1794, %v1986
    %v1988 = vpop.f32.mrb[0].mxu0
    %v1989 = vadd.f32 %v1796, %v1988
    %1990 = vmatprep.mubr.bf16.mxu0 %v385
    %1991 = vmatmul.mubr.bf16.gmra.mrb[0].mxu0 %v384
    %v1992 = vpop.f32.mrb[0].mxu0
    %v1993 = vadd.f32 %v1800, %v1992
    %v1994 = vpop.f32.mrb[0].mxu0
    %v1995 = vadd.f32 %v1802, %v1994
    %v1996 = vpop.f32.mrb[0].mxu0
    %v1997 = vadd.f32 %v1804, %v1996
    %v1998 = vpop.f32.mrb[0].mxu0
    %v1999 = vadd.f32 %v1806, %v1998
    %2000 = vmatprep.mubr.bf16.mxu0 %v392
    %2001 = vmatmul.mubr.bf16.gmra.mrb[0].mxu0 %v391
    %v2002 = vpop.f32.mrb[0].mxu0
    %v2003 = vadd.f32 %v1810, %v2002
    %v2004 = vpop.f32.mrb[0].mxu0
    %v2005 = vadd.f32 %v1812, %v2004
    %v2006 = vpop.f32.mrb[0].mxu0
    %v2007 = vadd.f32 %v1814, %v2006
    %v2008 = vpop.f32.mrb[0].mxu0
    %v2009 = vadd.f32 %v1816, %v2008
    %2010 = vmatprep.mubr.bf16.mxu0 %v399
    %2011 = vmatmul.mubr.bf16.gmra.mrb[0].mxu0 %v398
    %v2012 = vpop.f32.mrb[0].mxu0
    %v2013 = vadd.f32 %v1820, %v2012
    %v2014 = vpop.f32.mrb[0].mxu0
    %v2015 = vadd.f32 %v1822, %v2014
    %v2016 = vpop.f32.mrb[0].mxu0
    %v2017 = vadd.f32 %v1824, %v2016
    %v2018 = vpop.f32.mrb[0].mxu0
    %v2019 = vadd.f32 %v1826, %v2018
    %2020 = vmatprep.mubr.bf16.mxu0 %v406
    %2021 = vmatmul.mubr.bf16.gmra.mrb[0].mxu0 %v405
    %v2022 = vpop.f32.mrb[0].mxu0
    %v2023 = vadd.f32 %v1830, %v2022
    %v2024 = vpop.f32.mrb[0].mxu0
    %v2025 = vadd.f32 %v1832, %v2024
    %v2026 = vpop.f32.mrb[0].mxu0
    %v2027 = vadd.f32 %v1834, %v2026
    %v2028 = vpop.f32.mrb[0].mxu0
    %v2029 = vadd.f32 %v1836, %v2028
    %2030 = vmatprep.mubr.bf16.mxu0 %v413
    %2031 = vmatmul.mubr.bf16.gmra.mrb[0].mxu0 %v412
    %v2032 = vpop.f32.mrb[0].mxu0
    %v2033 = vadd.f32 %v1840, %v2032
    %v2034 = vpop.f32.mrb[0].mxu0
    %v2035 = vadd.f32 %v1842, %v2034
    %v2036 = vpop.f32.mrb[0].mxu0
    %v2037 = vadd.f32 %v1844, %v2036
    %v2038 = vpop.f32.mrb[0].mxu0
    %v2039 = vadd.f32 %v1846, %v2038
    %2040 = vmatprep.mubr.bf16.mxu0 %v420
    %2041 = vmatmul.mubr.bf16.gmra.mrb[0].mxu0 %v419
    %v2042 = vpop.f32.mrb[0].mxu0
    %v2043 = vadd.f32 %v1850, %v2042
    %v2044 = vpop.f32.mrb[0].mxu0
    %v2045 = vadd.f32 %v1852, %v2044
    %v2046 = vpop.f32.mrb[0].mxu0
    %v2047 = vadd.f32 %v1854, %v2046
    %v2048 = vpop.f32.mrb[0].mxu0
    %v2049 = vadd.f32 %v1856, %v2048
    %2050 = vmatprep.mubr.bf16.mxu0 %v427
    %2051 = vmatmul.mubr.bf16.gmra.mrb[0].mxu0 %v426
    %v2052 = vpop.f32.mrb[0].mxu0
    %v2053 = vadd.f32 %v1860, %v2052
    %v2054 = vpop.f32.mrb[0].mxu0
    %v2055 = vadd.f32 %v1862, %v2054
    %v2056 = vpop.f32.mrb[0].mxu0
    %v2057 = vadd.f32 %v1864, %v2056
    %v2058 = vpop.f32.mrb[0].mxu0
    %v2059 = vadd.f32 %v1866, %v2058
    %2060 = vmatprep.mubr.bf16.mxu0 %v434
    %2061 = vmatmul.mubr.bf16.gmra.mrb[0].mxu0 %v433
    %v2062 = vpop.f32.mrb[0].mxu0
    %v2063 = vadd.f32 %v1870, %v2062
    %v2064 = vpop.f32.mrb[0].mxu0
    %v2065 = vadd.f32 %v1872, %v2064
    %v2066 = vpop.f32.mrb[0].mxu0
    %v2067 = vadd.f32 %v1874, %v2066
    %v2068 = vpop.f32.mrb[0].mxu0
    %v2069 = vadd.f32 %v1876, %v2068
    %2070 = vdwg.mxu0
    %2071 = vmatprep.subr.bf16.mxu0 %v1373
    %2072 = vmatpush1.bf16.msra.mxu0 %v1372
    %2073 = vmatprep.subr.bf16.mxu0 %v1377
    %2074 = vmatpush1.bf16.msra.mxu0 %v1376
    %2075 = vmatprep.subr.bf16.mxu0 %v1381
    %2076 = vmatpush1.bf16.msra.mxu0 %v1380
    %2077 = vmatprep.subr.bf16.mxu0 %v1385
    %2078 = vmatpush1.bf16.msra.mxu0 %v1384
    %2079 = vmatprep.subr.bf16.mxu0 %v1389
    %2080 = vmatpush1.bf16.msra.mxu0 %v1388
    %2081 = vmatprep.subr.bf16.mxu0 %v1393
    %2082 = vmatpush1.bf16.msra.mxu0 %v1392
    %2083 = vmatprep.subr.bf16.mxu0 %v1397
    %2084 = vmatpush1.bf16.msra.mxu0 %v1396
    %2085 = vmatprep.subr.bf16.mxu0 %v1401
    %2086 = vmatpush1.bf16.msra.mxu0 %v1400
    %2087 = vmatprep.subr.bf16.mxu0 %v1405
    %2088 = vmatpush1.bf16.msra.mxu0 %v1404
    %2089 = vmatprep.subr.bf16.mxu0 %v1409
    %2090 = vmatpush1.bf16.msra.mxu0 %v1408
    %2091 = vmatprep.subr.bf16.mxu0 %v1413
    %2092 = vmatpush1.bf16.msra.mxu0 %v1412
    %2093 = vmatprep.subr.bf16.mxu0 %v1417
    %2094 = vmatpush1.bf16.msra.mxu0 %v1416
    %2095 = vmatprep.subr.bf16.mxu0 %v1421
    %2096 = vmatpush1.bf16.msra.mxu0 %v1420
    %2097 = vmatprep.subr.bf16.mxu0 %v1425
    %2098 = vmatpush1.bf16.msra.mxu0 %v1424
    %2099 = vmatprep.subr.bf16.mxu0 %v1429
    %2100 = vmatpush1.bf16.msra.mxu0 %v1428
    %2101 = vmatprep.subr.bf16.mxu0 %v1433
    %2102 = vmatpush1.bf16.msra.mxu0 %v1432
    %2103 = vmatprep.mubr.bf16.mxu0 %v331
    %2104 = vmatmul.mubr.bf16.gmra.mrb[0].mxu0 %v330
    %v2105 = vpop.f32.mrb[0].mxu0
    %v2106 = vadd.f32 %v1913, %v2105
    %v2107 = vpop.f32.mrb[0].mxu0
    %v2108 = vadd.f32 %v1915, %v2107
    %v2109 = vpop.f32.mrb[0].mxu0
    %v2110 = vadd.f32 %v1917, %v2109
    %v2111 = vpop.f32.mrb[0].mxu0
    %v2112 = vadd.f32 %v1919, %v2111
    %2113 = vmatprep.mubr.bf16.mxu0 %v338
    %2114 = vmatmul.mubr.bf16.gmra.mrb[0].mxu0 %v337
    %v2115 = vpop.f32.mrb[0].mxu0
    %v2116 = vadd.f32 %v1923, %v2115
    %v2117 = vpop.f32.mrb[0].mxu0
    %v2118 = vadd.f32 %v1925, %v2117
    %v2119 = vpop.f32.mrb[0].mxu0
    %v2120 = vadd.f32 %v1927, %v2119
    %v2121 = vpop.f32.mrb[0].mxu0
    %v2122 = vadd.f32 %v1929, %v2121
    %2123 = vmatprep.mubr.bf16.mxu0 %v345
    %2124 = vmatmul.mubr.bf16.gmra.mrb[0].mxu0 %v344
    %v2125 = vpop.f32.mrb[0].mxu0
    %v2126 = vadd.f32 %v1933, %v2125
    %v2127 = vpop.f32.mrb[0].mxu0
    %v2128 = vadd.f32 %v1935, %v2127
    %v2129 = vpop.f32.mrb[0].mxu0
    %v2130 = vadd.f32 %v1937, %v2129
    %v2131 = vpop.f32.mrb[0].mxu0
    %v2132 = vadd.f32 %v1939, %v2131
    %2133 = vmatprep.mubr.bf16.mxu0 %v352
    %2134 = vmatmul.mubr.bf16.gmra.mrb[0].mxu0 %v351
    %v2135 = vpop.f32.mrb[0].mxu0
    %v2136 = vadd.f32 %v1943, %v2135
    %v2137 = vpop.f32.mrb[0].mxu0
    %v2138 = vadd.f32 %v1945, %v2137
    %v2139 = vpop.f32.mrb[0].mxu0
    %v2140 = vadd.f32 %v1947, %v2139
    %v2141 = vpop.f32.mrb[0].mxu0
    %v2142 = vadd.f32 %v1949, %v2141
    %2143 = vmatprep.mubr.bf16.mxu0 %v359
    %2144 = vmatmul.mubr.bf16.gmra.mrb[0].mxu0 %v358
    %v2145 = vpop.f32.mrb[0].mxu0
    %v2146 = vadd.f32 %v1953, %v2145
    %v2147 = vpop.f32.mrb[0].mxu0
    %v2148 = vadd.f32 %v1955, %v2147
    %v2149 = vpop.f32.mrb[0].mxu0
    %v2150 = vadd.f32 %v1957, %v2149
    %v2151 = vpop.f32.mrb[0].mxu0
    %v2152 = vadd.f32 %v1959, %v2151
    %2153 = vmatprep.mubr.bf16.mxu0 %v366
    %2154 = vmatmul.mubr.bf16.gmra.mrb[0].mxu0 %v365
    %v2155 = vpop.f32.mrb[0].mxu0
    %v2156 = vadd.f32 %v1963, %v2155
    %v2157 = vpop.f32.mrb[0].mxu0
    %v2158 = vadd.f32 %v1965, %v2157
    %v2159 = vpop.f32.mrb[0].mxu0
    %v2160 = vadd.f32 %v1967, %v2159
    %v2161 = vpop.f32.mrb[0].mxu0
    %v2162 = vadd.f32 %v1969, %v2161
    %2163 = vmatprep.mubr.bf16.mxu0 %v373
    %2164 = vmatmul.mubr.bf16.gmra.mrb[0].mxu0 %v372
    %v2165 = vpop.f32.mrb[0].mxu0
    %v2166 = vadd.f32 %v1973, %v2165
    %v2167 = vpop.f32.mrb[0].mxu0
    %v2168 = vadd.f32 %v1975, %v2167
    %v2169 = vpop.f32.mrb[0].mxu0
    %v2170 = vadd.f32 %v1977, %v2169
    %v2171 = vpop.f32.mrb[0].mxu0
    %v2172 = vadd.f32 %v1979, %v2171
    %2173 = vmatprep.mubr.bf16.mxu0 %v380
    %2174 = vmatmul.mubr.bf16.gmra.mrb[0].mxu0 %v379
    %v2175 = vpop.f32.mrb[0].mxu0
    %v2176 = vadd.f32 %v1983, %v2175
    %v2177 = vpop.f32.mrb[0].mxu0
    %v2178 = vadd.f32 %v1985, %v2177
    %v2179 = vpop.f32.mrb[0].mxu0
    %v2180 = vadd.f32 %v1987, %v2179
    %v2181 = vpop.f32.mrb[0].mxu0
    %v2182 = vadd.f32 %v1989, %v2181
    %2183 = vmatprep.mubr.bf16.mxu0 %v387
    %2184 = vmatmul.mubr.bf16.gmra.mrb[0].mxu0 %v386
    %v2185 = vpop.f32.mrb[0].mxu0
    %v2186 = vadd.f32 %v1993, %v2185
    %v2187 = vpop.f32.mrb[0].mxu0
    %v2188 = vadd.f32 %v1995, %v2187
    %v2189 = vpop.f32.mrb[0].mxu0
    %v2190 = vadd.f32 %v1997, %v2189
    %v2191 = vpop.f32.mrb[0].mxu0
    %v2192 = vadd.f32 %v1999, %v2191
    %2193 = vmatprep.mubr.bf16.mxu0 %v394
    %2194 = vmatmul.mubr.bf16.gmra.mrb[0].mxu0 %v393
    %v2195 = vpop.f32.mrb[0].mxu0
    %v2196 = vadd.f32 %v2003, %v2195
    %v2197 = vpop.f32.mrb[0].mxu0
    %v2198 = vadd.f32 %v2005, %v2197
    %v2199 = vpop.f32.mrb[0].mxu0
    %v2200 = vadd.f32 %v2007, %v2199
    %v2201 = vpop.f32.mrb[0].mxu0
    %v2202 = vadd.f32 %v2009, %v2201
    %2203 = vmatprep.mubr.bf16.mxu0 %v401
    %2204 = vmatmul.mubr.bf16.gmra.mrb[0].mxu0 %v400
    %v2205 = vpop.f32.mrb[0].mxu0
    %v2206 = vadd.f32 %v2013, %v2205
    %v2207 = vpop.f32.mrb[0].mxu0
    %v2208 = vadd.f32 %v2015, %v2207
    %v2209 = vpop.f32.mrb[0].mxu0
    %v2210 = vadd.f32 %v2017, %v2209
    %v2211 = vpop.f32.mrb[0].mxu0
    %v2212 = vadd.f32 %v2019, %v2211
    %2213 = vmatprep.mubr.bf16.mxu0 %v408
    %2214 = vmatmul.mubr.bf16.gmra.mrb[0].mxu0 %v407
    %v2215 = vpop.f32.mrb[0].mxu0
    %v2216 = vadd.f32 %v2023, %v2215
    %v2217 = vpop.f32.mrb[0].mxu0
    %v2218 = vadd.f32 %v2025, %v2217
    %v2219 = vpop.f32.mrb[0].mxu0
    %v2220 = vadd.f32 %v2027, %v2219
    %v2221 = vpop.f32.mrb[0].mxu0
    %v2222 = vadd.f32 %v2029, %v2221
    %2223 = vmatprep.mubr.bf16.mxu0 %v415
    %2224 = vmatmul.mubr.bf16.gmra.mrb[0].mxu0 %v414
    %v2225 = vpop.f32.mrb[0].mxu0
    %v2226 = vadd.f32 %v2033, %v2225
    %v2227 = vpop.f32.mrb[0].mxu0
    %v2228 = vadd.f32 %v2035, %v2227
    %v2229 = vpop.f32.mrb[0].mxu0
    %v2230 = vadd.f32 %v2037, %v2229
    %v2231 = vpop.f32.mrb[0].mxu0
    %v2232 = vadd.f32 %v2039, %v2231
    %2233 = vmatprep.mubr.bf16.mxu0 %v422
    %2234 = vmatmul.mubr.bf16.gmra.mrb[0].mxu0 %v421
    %v2235 = vpop.f32.mrb[0].mxu0
    %v2236 = vadd.f32 %v2043, %v2235
    %v2237 = vpop.f32.mrb[0].mxu0
    %v2238 = vadd.f32 %v2045, %v2237
    %v2239 = vpop.f32.mrb[0].mxu0
    %v2240 = vadd.f32 %v2047, %v2239
    %v2241 = vpop.f32.mrb[0].mxu0
    %v2242 = vadd.f32 %v2049, %v2241
    %2243 = vmatprep.mubr.bf16.mxu0 %v429
    %2244 = vmatmul.mubr.bf16.gmra.mrb[0].mxu0 %v428
    %v2245 = vpop.f32.mrb[0].mxu0
    %v2246 = vadd.f32 %v2053, %v2245
    %v2247 = vpop.f32.mrb[0].mxu0
    %v2248 = vadd.f32 %v2055, %v2247
    %v2249 = vpop.f32.mrb[0].mxu0
    %v2250 = vadd.f32 %v2057, %v2249
    %v2251 = vpop.f32.mrb[0].mxu0
    %v2252 = vadd.f32 %v2059, %v2251
    %2253 = vmatprep.mubr.bf16.mxu0 %v436
    %2254 = vmatmul.mubr.bf16.gmra.mrb[0].mxu0 %v435
    %v2255 = vpop.f32.mrb[0].mxu0
    %v2256 = vadd.f32 %v2063, %v2255
    %v2257 = vpop.f32.mrb[0].mxu0
    %v2258 = vadd.f32 %v2065, %v2257
    %v2259 = vpop.f32.mrb[0].mxu0
    %v2260 = vadd.f32 %v2067, %v2259
    %v2261 = vpop.f32.mrb[0].mxu0
    %v2262 = vadd.f32 %v2069, %v2261
    %2263 = vdwg.mxu0
    %2264 = vmatprep.subr.bf16.mxu0 %v1437
    %2265 = vmatpush1.bf16.msra.mxu0 %v1436
    %2266 = vmatprep.subr.bf16.mxu0 0
    %2267 = vmatpush1.bf16.msra.mxu0 0
    %2268 = vmatprep.subr.bf16.mxu0 0
    %2269 = vmatpush1.bf16.msra.mxu0 0
    %2270 = vmatprep.subr.bf16.mxu0 0
    %2271 = vmatpush1.bf16.msra.mxu0 0
    %2272 = vmatprep.subr.bf16.mxu0 0
    %2273 = vmatpush1.bf16.msra.mxu0 0
    %2274 = vmatprep.subr.bf16.mxu0 0
    %2275 = vmatpush1.bf16.msra.mxu0 0
    %2276 = vmatprep.subr.bf16.mxu0 0
    %2277 = vmatpush1.bf16.msra.mxu0 0
    %2278 = vmatprep.subr.bf16.mxu0 0
    %2279 = vmatpush1.bf16.msra.mxu0 0
    %2280 = vmatprep.subr.bf16.mxu0 0
    %2281 = vmatpush1.bf16.msra.mxu0 0
    %2282 = vmatprep.subr.bf16.mxu0 0
    %2283 = vmatpush1.bf16.msra.mxu0 0
    %2284 = vmatprep.subr.bf16.mxu0 0
    %2285 = vmatpush1.bf16.msra.mxu0 0
    %2286 = vmatprep.subr.bf16.mxu0 0
    %2287 = vmatpush1.bf16.msra.mxu0 0
    %2288 = vmatprep.subr.bf16.mxu0 0
    %2289 = vmatpush1.bf16.msra.mxu0 0
    %2290 = vmatprep.subr.bf16.mxu0 0
    %2291 = vmatpush1.bf16.msra.mxu0 0
    %2292 = vmatprep.subr.bf16.mxu0 0
    %2293 = vmatpush1.bf16.msra.mxu0 0
    %2294 = vmatprep.subr.bf16.mxu0 0
    %2295 = vmatpush1.bf16.msra.mxu0 0
    %2296 = vmatprep.mubr.bf16.mxu0 0
    %2297 = vmatmul.mubr.bf16.gmra.mrb[0].mxu0 %v1638
    %v2298 = vpop.f32.mrb[0].mxu0
    %v2299 = vadd.f32 %v2106, %v2298
    %v2300 = vpop.f32.mrb[0].mxu0
    %v2301 = vadd.f32 %v2108, %v2300
    %v2302 = vpop.f32.mrb[0].mxu0
    %v2303 = vadd.f32 %v2110, %v2302
    %v2304 = vpop.f32.mrb[0].mxu0
    %v2305 = vadd.f32 %v2112, %v2304
    %2306 = vmatprep.mubr.bf16.mxu0 0
    %2307 = vmatmul.mubr.bf16.gmra.mrb[0].mxu0 %v1641
    %v2308 = vpop.f32.mrb[0].mxu0
    %v2309 = vadd.f32 %v2116, %v2308
    %v2310 = vpop.f32.mrb[0].mxu0
    %v2311 = vadd.f32 %v2118, %v2310
    %v2312 = vpop.f32.mrb[0].mxu0
    %v2313 = vadd.f32 %v2120, %v2312
    %v2314 = vpop.f32.mrb[0].mxu0
    %v2315 = vadd.f32 %v2122, %v2314
    %2316 = vmatprep.mubr.bf16.mxu0 0
    %2317 = vmatmul.mubr.bf16.gmra.mrb[0].mxu0 %v1644
    %v2318 = vpop.f32.mrb[0].mxu0
    %v2319 = vadd.f32 %v2126, %v2318
    %v2320 = vpop.f32.mrb[0].mxu0
    %v2321 = vadd.f32 %v2128, %v2320
    %v2322 = vpop.f32.mrb[0].mxu0
    %v2323 = vadd.f32 %v2130, %v2322
    %v2324 = vpop.f32.mrb[0].mxu0
    %v2325 = vadd.f32 %v2132, %v2324
    %2326 = vmatprep.mubr.bf16.mxu0 0
    %2327 = vmatmul.mubr.bf16.gmra.mrb[0].mxu0 %v1647
    %v2328 = vpop.f32.mrb[0].mxu0
    %v2329 = vadd.f32 %v2136, %v2328
    %v2330 = vpop.f32.mrb[0].mxu0
    %v2331 = vadd.f32 %v2138, %v2330
    %v2332 = vpop.f32.mrb[0].mxu0
    %v2333 = vadd.f32 %v2140, %v2332
    %v2334 = vpop.f32.mrb[0].mxu0
    %v2335 = vadd.f32 %v2142, %v2334
    %2336 = vmatprep.mubr.bf16.mxu0 0
    %2337 = vmatmul.mubr.bf16.gmra.mrb[0].mxu0 %v1650
    %v2338 = vpop.f32.mrb[0].mxu0
    %v2339 = vadd.f32 %v2146, %v2338
    %v2340 = vpop.f32.mrb[0].mxu0
    %v2341 = vadd.f32 %v2148, %v2340
    %v2342 = vpop.f32.mrb[0].mxu0
    %v2343 = vadd.f32 %v2150, %v2342
    %v2344 = vpop.f32.mrb[0].mxu0
    %v2345 = vadd.f32 %v2152, %v2344
    %2346 = vmatprep.mubr.bf16.mxu0 0
    %2347 = vmatmul.mubr.bf16.gmra.mrb[0].mxu0 %v1653
    %v2348 = vpop.f32.mrb[0].mxu0
    %v2349 = vadd.f32 %v2156, %v2348
    %v2350 = vpop.f32.mrb[0].mxu0
    %v2351 = vadd.f32 %v2158, %v2350
    %v2352 = vpop.f32.mrb[0].mxu0
    %v2353 = vadd.f32 %v2160, %v2352
    %v2354 = vpop.f32.mrb[0].mxu0
    %v2355 = vadd.f32 %v2162, %v2354
    %2356 = vmatprep.mubr.bf16.mxu0 0
    %2357 = vmatmul.mubr.bf16.gmra.mrb[0].mxu0 %v1656
    %v2358 = vpop.f32.mrb[0].mxu0
    %v2359 = vadd.f32 %v2166, %v2358
    %v2360 = vpop.f32.mrb[0].mxu0
    %v2361 = vadd.f32 %v2168, %v2360
    %v2362 = vpop.f32.mrb[0].mxu0
    %v2363 = vadd.f32 %v2170, %v2362
    %v2364 = vpop.f32.mrb[0].mxu0
    %v2365 = vadd.f32 %v2172, %v2364
    %2366 = vmatprep.mubr.bf16.mxu0 0
    %2367 = vmatmul.mubr.bf16.gmra.mrb[0].mxu0 %v1659
    %v2368 = vpop.f32.mrb[0].mxu0
    %v2369 = vadd.f32 %v2176, %v2368
    %v2370 = vpop.f32.mrb[0].mxu0
    %v2371 = vadd.f32 %v2178, %v2370
    %v2372 = vpop.f32.mrb[0].mxu0
    %v2373 = vadd.f32 %v2180, %v2372
    %v2374 = vpop.f32.mrb[0].mxu0
    %v2375 = vadd.f32 %v2182, %v2374
    %2376 = vmatprep.mubr.bf16.mxu0 0
    %2377 = vmatmul.mubr.bf16.gmra.mrb[0].mxu0 %v1662
    %v2378 = vpop.f32.mrb[0].mxu0
    %v2379 = vadd.f32 %v2186, %v2378
    %v2380 = vpop.f32.mrb[0].mxu0
    %v2381 = vadd.f32 %v2188, %v2380
    %v2382 = vpop.f32.mrb[0].mxu0
    %v2383 = vadd.f32 %v2190, %v2382
    %v2384 = vpop.f32.mrb[0].mxu0
    %v2385 = vadd.f32 %v2192, %v2384
    %2386 = vmatprep.mubr.bf16.mxu0 0
    %2387 = vmatmul.mubr.bf16.gmra.mrb[0].mxu0 %v1665
    %v2388 = vpop.f32.mrb[0].mxu0
    %v2389 = vadd.f32 %v2196, %v2388
    %v2390 = vpop.f32.mrb[0].mxu0
    %v2391 = vadd.f32 %v2198, %v2390
    %v2392 = vpop.f32.mrb[0].mxu0
    %v2393 = vadd.f32 %v2200, %v2392
    %v2394 = vpop.f32.mrb[0].mxu0
    %v2395 = vadd.f32 %v2202, %v2394
    %2396 = vmatprep.mubr.bf16.mxu0 0
    %2397 = vmatmul.mubr.bf16.gmra.mrb[0].mxu0 %v1668
    %v2398 = vpop.f32.mrb[0].mxu0
    %v2399 = vadd.f32 %v2206, %v2398
    %v2400 = vpop.f32.mrb[0].mxu0
    %v2401 = vadd.f32 %v2208, %v2400
    %v2402 = vpop.f32.mrb[0].mxu0
    %v2403 = vadd.f32 %v2210, %v2402
    %v2404 = vpop.f32.mrb[0].mxu0
    %v2405 = vadd.f32 %v2212, %v2404
    %2406 = vmatprep.mubr.bf16.mxu0 0
    %2407 = vmatmul.mubr.bf16.gmra.mrb[0].mxu0 %v1671
    %v2408 = vpop.f32.mrb[0].mxu0
    %v2409 = vadd.f32 %v2216, %v2408
    %v2410 = vpop.f32.mrb[0].mxu0
    %v2411 = vadd.f32 %v2218, %v2410
    %v2412 = vpop.f32.mrb[0].mxu0
    %v2413 = vadd.f32 %v2220, %v2412
    %v2414 = vpop.f32.mrb[0].mxu0
    %v2415 = vadd.f32 %v2222, %v2414
    %2416 = vmatprep.mubr.bf16.mxu0 0
    %2417 = vmatmul.mubr.bf16.gmra.mrb[0].mxu0 %v1674
    %v2418 = vpop.f32.mrb[0].mxu0
    %v2419 = vadd.f32 %v2226, %v2418
    %v2420 = vpop.f32.mrb[0].mxu0
    %v2421 = vadd.f32 %v2228, %v2420
    %v2422 = vpop.f32.mrb[0].mxu0
    %v2423 = vadd.f32 %v2230, %v2422
    %v2424 = vpop.f32.mrb[0].mxu0
    %v2425 = vadd.f32 %v2232, %v2424
    %2426 = vmatprep.mubr.bf16.mxu0 0
    %2427 = vmatmul.mubr.bf16.gmra.mrb[0].mxu0 %v1677
    %v2428 = vpop.f32.mrb[0].mxu0
    %v2429 = vadd.f32 %v2236, %v2428
    %v2430 = vpop.f32.mrb[0].mxu0
    %v2431 = vadd.f32 %v2238, %v2430
    %v2432 = vpop.f32.mrb[0].mxu0
    %v2433 = vadd.f32 %v2240, %v2432
    %v2434 = vpop.f32.mrb[0].mxu0
    %v2435 = vadd.f32 %v2242, %v2434
    %2436 = vmatprep.mubr.bf16.mxu0 0
    %2437 = vmatmul.mubr.bf16.gmra.mrb[0].mxu0 %v1680
    %v2438 = vpop.f32.mrb[0].mxu0
    %v2439 = vadd.f32 %v2246, %v2438
    %v2440 = vpop.f32.mrb[0].mxu0
    %v2441 = vadd.f32 %v2248, %v2440
    %v2442 = vpop.f32.mrb[0].mxu0
    %v2443 = vadd.f32 %v2250, %v2442
    %v2444 = vpop.f32.mrb[0].mxu0
    %v2445 = vadd.f32 %v2252, %v2444
    %2446 = vmatprep.mubr.bf16.mxu0 0
    %2447 = vmatmul.mubr.bf16.gmra.mrb[0].mxu0 %v1683
    %v2448 = vpop.f32.mrb[0].mxu0
    %v2449 = vadd.f32 %v2256, %v2448
    %v2450 = vpop.f32.mrb[0].mxu0
    %v2451 = vadd.f32 %v2258, %v2450
    %v2452 = vpop.f32.mrb[0].mxu0
    %v2453 = vadd.f32 %v2260, %v2452
    %v2454 = vpop.f32.mrb[0].mxu0
    %v2455 = vadd.f32 %v2262, %v2454
    %2456 = vdwg.mxu0
    %2457 = vmatprep.subr.bf16.mxu0 %v1247
    %2458 = vmatpush1.bf16.msra.mxu0 %v1246
    %2459 = vmatprep.subr.bf16.mxu0 %v1251
    %2460 = vmatpush1.bf16.msra.mxu0 %v1250
    %2461 = vmatprep.subr.bf16.mxu0 %v1255
    %2462 = vmatpush1.bf16.msra.mxu0 %v1254
    %2463 = vmatprep.subr.bf16.mxu0 %v1259
    %2464 = vmatpush1.bf16.msra.mxu0 %v1258
    %2465 = vmatprep.subr.bf16.mxu0 %v1263
    %2466 = vmatpush1.bf16.msra.mxu0 %v1262
    %2467 = vmatprep.subr.bf16.mxu0 %v1267
    %2468 = vmatpush1.bf16.msra.mxu0 %v1266
    %2469 = vmatprep.subr.bf16.mxu0 %v1271
    %2470 = vmatpush1.bf16.msra.mxu0 %v1270
    %2471 = vmatprep.subr.bf16.mxu0 %v1275
    %2472 = vmatpush1.bf16.msra.mxu0 %v1274
    %2473 = vmatprep.subr.bf16.mxu0 %v1279
    %2474 = vmatpush1.bf16.msra.mxu0 %v1278
    %2475 = vmatprep.subr.bf16.mxu0 %v1283
    %2476 = vmatpush1.bf16.msra.mxu0 %v1282
    %2477 = vmatprep.subr.bf16.mxu0 %v1287
    %2478 = vmatpush1.bf16.msra.mxu0 %v1286
    %2479 = vmatprep.subr.bf16.mxu0 %v1291
    %2480 = vmatpush1.bf16.msra.mxu0 %v1290
    %2481 = vmatprep.subr.bf16.mxu0 %v1295
    %2482 = vmatpush1.bf16.msra.mxu0 %v1294
    %2483 = vmatprep.subr.bf16.mxu0 %v1299
    %2484 = vmatpush1.bf16.msra.mxu0 %v1298
    %2485 = vmatprep.subr.bf16.mxu0 %v1303
    %2486 = vmatpush1.bf16.msra.mxu0 %v1302
    %2487 = vmatprep.subr.bf16.mxu0 %v1307
    %2488 = vmatpush1.bf16.msra.mxu0 %v1306
    %2489 = vmatprep.mubr.bf16.mxu0 %v327
    %2490 = vmatmul.mubr.bf16.gmra.mrb[0].mxu0 %v326
    %v2491 = vpop.f32.mrb[0].mxu0
    %v2492 = vadd.f32 %v647, %v2491
    %v2493 = vpop.f32.mrb[0].mxu0
    %v2494 = vadd.f32 %v651, %v2493
    %v2495 = vpop.f32.mrb[0].mxu0
    %v2496 = vadd.f32 %v647, %v2495
    %v2497 = vpop.f32.mrb[0].mxu0
    %v2498 = vadd.f32 %v651, %v2497
    %2499 = vmatprep.mubr.bf16.mxu0 %v334
    %2500 = vmatmul.mubr.bf16.gmra.mrb[0].mxu0 %v333
    %v2501 = vpop.f32.mrb[0].mxu0
    %v2502 = vadd.f32 %v647, %v2501
    %v2503 = vpop.f32.mrb[0].mxu0
    %v2504 = vadd.f32 %v651, %v2503
    %v2505 = vpop.f32.mrb[0].mxu0
    %v2506 = vadd.f32 %v647, %v2505
    %v2507 = vpop.f32.mrb[0].mxu0
    %v2508 = vadd.f32 %v651, %v2507
    %2509 = vmatprep.mubr.bf16.mxu0 %v341
    %2510 = vmatmul.mubr.bf16.gmra.mrb[0].mxu0 %v340
    %v2511 = vpop.f32.mrb[0].mxu0
    %v2512 = vadd.f32 %v647, %v2511
    %v2513 = vpop.f32.mrb[0].mxu0
    %v2514 = vadd.f32 %v651, %v2513
    %v2515 = vpop.f32.mrb[0].mxu0
    %v2516 = vadd.f32 %v647, %v2515
    %v2517 = vpop.f32.mrb[0].mxu0
    %v2518 = vadd.f32 %v651, %v2517
    %2519 = vmatprep.mubr.bf16.mxu0 %v348
    %2520 = vmatmul.mubr.bf16.gmra.mrb[0].mxu0 %v347
    %v2521 = vpop.f32.mrb[0].mxu0
    %v2522 = vadd.f32 %v647, %v2521
    %v2523 = vpop.f32.mrb[0].mxu0
    %v2524 = vadd.f32 %v651, %v2523
    %v2525 = vpop.f32.mrb[0].mxu0
    %v2526 = vadd.f32 %v647, %v2525
    %v2527 = vpop.f32.mrb[0].mxu0
    %v2528 = vadd.f32 %v651, %v2527
    %2529 = vmatprep.mubr.bf16.mxu0 %v355
    %2530 = vmatmul.mubr.bf16.gmra.mrb[0].mxu0 %v354
    %v2531 = vpop.f32.mrb[0].mxu0
    %v2532 = vadd.f32 %v647, %v2531
    %v2533 = vpop.f32.mrb[0].mxu0
    %v2534 = vadd.f32 %v651, %v2533
    %v2535 = vpop.f32.mrb[0].mxu0
    %v2536 = vadd.f32 %v647, %v2535
    %v2537 = vpop.f32.mrb[0].mxu0
    %v2538 = vadd.f32 %v651, %v2537
    %2539 = vmatprep.mubr.bf16.mxu0 %v362
    %2540 = vmatmul.mubr.bf16.gmra.mrb[0].mxu0 %v361
    %v2541 = vpop.f32.mrb[0].mxu0
    %v2542 = vadd.f32 %v647, %v2541
    %v2543 = vpop.f32.mrb[0].mxu0
    %v2544 = vadd.f32 %v651, %v2543
    %v2545 = vpop.f32.mrb[0].mxu0
    %v2546 = vadd.f32 %v647, %v2545
    %v2547 = vpop.f32.mrb[0].mxu0
    %v2548 = vadd.f32 %v651, %v2547
    %2549 = vmatprep.mubr.bf16.mxu0 %v369
    %2550 = vmatmul.mubr.bf16.gmra.mrb[0].mxu0 %v368
    %v2551 = vpop.f32.mrb[0].mxu0
    %v2552 = vadd.f32 %v647, %v2551
    %v2553 = vpop.f32.mrb[0].mxu0
    %v2554 = vadd.f32 %v651, %v2553
    %v2555 = vpop.f32.mrb[0].mxu0
    %v2556 = vadd.f32 %v647, %v2555
    %v2557 = vpop.f32.mrb[0].mxu0
    %v2558 = vadd.f32 %v651, %v2557
    %2559 = vmatprep.mubr.bf16.mxu0 %v376
    %2560 = vmatmul.mubr.bf16.gmra.mrb[0].mxu0 %v375
    %v2561 = vpop.f32.mrb[0].mxu0
    %v2562 = vadd.f32 %v647, %v2561
    %v2563 = vpop.f32.mrb[0].mxu0
    %v2564 = vadd.f32 %v651, %v2563
    %v2565 = vpop.f32.mrb[0].mxu0
    %v2566 = vadd.f32 %v647, %v2565
    %v2567 = vpop.f32.mrb[0].mxu0
    %v2568 = vadd.f32 %v651, %v2567
    %2569 = vmatprep.mubr.bf16.mxu0 %v383
    %2570 = vmatmul.mubr.bf16.gmra.mrb[0].mxu0 %v382
    %v2571 = vpop.f32.mrb[0].mxu0
    %v2572 = vadd.f32 %v647, %v2571
    %v2573 = vpop.f32.mrb[0].mxu0
    %v2574 = vadd.f32 %v651, %v2573
    %v2575 = vpop.f32.mrb[0].mxu0
    %v2576 = vadd.f32 %v647, %v2575
    %v2577 = vpop.f32.mrb[0].mxu0
    %v2578 = vadd.f32 %v651, %v2577
    %2579 = vmatprep.mubr.bf16.mxu0 %v390
    %2580 = vmatmul.mubr.bf16.gmra.mrb[0].mxu0 %v389
    %v2581 = vpop.f32.mrb[0].mxu0
    %v2582 = vadd.f32 %v647, %v2581
    %v2583 = vpop.f32.mrb[0].mxu0
    %v2584 = vadd.f32 %v651, %v2583
    %v2585 = vpop.f32.mrb[0].mxu0
    %v2586 = vadd.f32 %v647, %v2585
    %v2587 = vpop.f32.mrb[0].mxu0
    %v2588 = vadd.f32 %v651, %v2587
    %2589 = vmatprep.mubr.bf16.mxu0 %v397
    %2590 = vmatmul.mubr.bf16.gmra.mrb[0].mxu0 %v396
    %v2591 = vpop.f32.mrb[0].mxu0
    %v2592 = vadd.f32 %v647, %v2591
    %v2593 = vpop.f32.mrb[0].mxu0
    %v2594 = vadd.f32 %v651, %v2593
    %v2595 = vpop.f32.mrb[0].mxu0
    %v2596 = vadd.f32 %v647, %v2595
    %v2597 = vpop.f32.mrb[0].mxu0
    %v2598 = vadd.f32 %v651, %v2597
    %2599 = vmatprep.mubr.bf16.mxu0 %v404
    %2600 = vmatmul.mubr.bf16.gmra.mrb[0].mxu0 %v403
    %v2601 = vpop.f32.mrb[0].mxu0
    %v2602 = vadd.f32 %v647, %v2601
    %v2603 = vpop.f32.mrb[0].mxu0
    %v2604 = vadd.f32 %v651, %v2603
    %v2605 = vpop.f32.mrb[0].mxu0
    %v2606 = vadd.f32 %v647, %v2605
    %v2607 = vpop.f32.mrb[0].mxu0
    %v2608 = vadd.f32 %v651, %v2607
    %2609 = vmatprep.mubr.bf16.mxu0 %v411
    %2610 = vmatmul.mubr.bf16.gmra.mrb[0].mxu0 %v410
    %v2611 = vpop.f32.mrb[0].mxu0
    %v2612 = vadd.f32 %v647, %v2611
    %v2613 = vpop.f32.mrb[0].mxu0
    %v2614 = vadd.f32 %v651, %v2613
    %v2615 = vpop.f32.mrb[0].mxu0
    %v2616 = vadd.f32 %v647, %v2615
    %v2617 = vpop.f32.mrb[0].mxu0
    %v2618 = vadd.f32 %v651, %v2617
    %2619 = vmatprep.mubr.bf16.mxu0 %v418
    %2620 = vmatmul.mubr.bf16.gmra.mrb[0].mxu0 %v417
    %v2621 = vpop.f32.mrb[0].mxu0
    %v2622 = vadd.f32 %v647, %v2621
    %v2623 = vpop.f32.mrb[0].mxu0
    %v2624 = vadd.f32 %v651, %v2623
    %v2625 = vpop.f32.mrb[0].mxu0
    %v2626 = vadd.f32 %v647, %v2625
    %v2627 = vpop.f32.mrb[0].mxu0
    %v2628 = vadd.f32 %v651, %v2627
    %2629 = vmatprep.mubr.bf16.mxu0 %v425
    %2630 = vmatmul.mubr.bf16.gmra.mrb[0].mxu0 %v424
    %v2631 = vpop.f32.mrb[0].mxu0
    %v2632 = vadd.f32 %v647, %v2631
    %v2633 = vpop.f32.mrb[0].mxu0
    %v2634 = vadd.f32 %v651, %v2633
    %v2635 = vpop.f32.mrb[0].mxu0
    %v2636 = vadd.f32 %v647, %v2635
    %v2637 = vpop.f32.mrb[0].mxu0
    %v2638 = vadd.f32 %v651, %v2637
    %2639 = vmatprep.mubr.bf16.mxu0 %v432
    %2640 = vmatmul.mubr.bf16.gmra.mrb[0].mxu0 %v431
    %v2641 = vpop.f32.mrb[0].mxu0
    %v2642 = vadd.f32 %v647, %v2641
    %v2643 = vpop.f32.mrb[0].mxu0
    %v2644 = vadd.f32 %v651, %v2643
    %v2645 = vpop.f32.mrb[0].mxu0
    %v2646 = vadd.f32 %v647, %v2645
    %v2647 = vpop.f32.mrb[0].mxu0
    %v2648 = vadd.f32 %v651, %v2647
    %2649 = vdwg.mxu0
    %2650 = vmatprep.subr.bf16.mxu0 %v1311
    %2651 = vmatpush1.bf16.msra.mxu0 %v1310
    %2652 = vmatprep.subr.bf16.mxu0 %v1315
    %2653 = vmatpush1.bf16.msra.mxu0 %v1314
    %2654 = vmatprep.subr.bf16.mxu0 %v1319
    %2655 = vmatpush1.bf16.msra.mxu0 %v1318
    %2656 = vmatprep.subr.bf16.mxu0 %v1323
    %2657 = vmatpush1.bf16.msra.mxu0 %v1322
    %2658 = vmatprep.subr.bf16.mxu0 %v1327
    %2659 = vmatpush1.bf16.msra.mxu0 %v1326
    %2660 = vmatprep.subr.bf16.mxu0 %v1331
    %2661 = vmatpush1.bf16.msra.mxu0 %v1330
    %2662 = vmatprep.subr.bf16.mxu0 %v1335
    %2663 = vmatpush1.bf16.msra.mxu0 %v1334
    %2664 = vmatprep.subr.bf16.mxu0 %v1339
    %2665 = vmatpush1.bf16.msra.mxu0 %v1338
    %2666 = vmatprep.subr.bf16.mxu0 %v1343
    %2667 = vmatpush1.bf16.msra.mxu0 %v1342
    %2668 = vmatprep.subr.bf16.mxu0 %v1347
    %2669 = vmatpush1.bf16.msra.mxu0 %v1346
    %2670 = vmatprep.subr.bf16.mxu0 %v1351
    %2671 = vmatpush1.bf16.msra.mxu0 %v1350
    %2672 = vmatprep.subr.bf16.mxu0 %v1355
    %2673 = vmatpush1.bf16.msra.mxu0 %v1354
    %2674 = vmatprep.subr.bf16.mxu0 %v1359
    %2675 = vmatpush1.bf16.msra.mxu0 %v1358
    %2676 = vmatprep.subr.bf16.mxu0 %v1363
    %2677 = vmatpush1.bf16.msra.mxu0 %v1362
    %2678 = vmatprep.subr.bf16.mxu0 %v1367
    %2679 = vmatpush1.bf16.msra.mxu0 %v1366
    %2680 = vmatprep.subr.bf16.mxu0 %v1371
    %2681 = vmatpush1.bf16.msra.mxu0 %v1370
    %2682 = vmatprep.mubr.bf16.mxu0 %v329
    %2683 = vmatmul.mubr.bf16.gmra.mrb[0].mxu0 %v328
    %v2684 = vpop.f32.mrb[0].mxu0
    %v2685 = vadd.f32 %v2492, %v2684
    %v2686 = vpop.f32.mrb[0].mxu0
    %v2687 = vadd.f32 %v2494, %v2686
    %v2688 = vpop.f32.mrb[0].mxu0
    %v2689 = vadd.f32 %v2496, %v2688
    %v2690 = vpop.f32.mrb[0].mxu0
    %v2691 = vadd.f32 %v2498, %v2690
    %2692 = vmatprep.mubr.bf16.mxu0 %v336
    %2693 = vmatmul.mubr.bf16.gmra.mrb[0].mxu0 %v335
    %v2694 = vpop.f32.mrb[0].mxu0
    %v2695 = vadd.f32 %v2502, %v2694
    %v2696 = vpop.f32.mrb[0].mxu0
    %v2697 = vadd.f32 %v2504, %v2696
    %v2698 = vpop.f32.mrb[0].mxu0
    %v2699 = vadd.f32 %v2506, %v2698
    %v2700 = vpop.f32.mrb[0].mxu0
    %v2701 = vadd.f32 %v2508, %v2700
    %2702 = vmatprep.mubr.bf16.mxu0 %v343
    %2703 = vmatmul.mubr.bf16.gmra.mrb[0].mxu0 %v342
    %v2704 = vpop.f32.mrb[0].mxu0
    %v2705 = vadd.f32 %v2512, %v2704
    %v2706 = vpop.f32.mrb[0].mxu0
    %v2707 = vadd.f32 %v2514, %v2706
    %v2708 = vpop.f32.mrb[0].mxu0
    %v2709 = vadd.f32 %v2516, %v2708
    %v2710 = vpop.f32.mrb[0].mxu0
    %v2711 = vadd.f32 %v2518, %v2710
    %2712 = vmatprep.mubr.bf16.mxu0 %v350
    %2713 = vmatmul.mubr.bf16.gmra.mrb[0].mxu0 %v349
    %v2714 = vpop.f32.mrb[0].mxu0
    %v2715 = vadd.f32 %v2522, %v2714
    %v2716 = vpop.f32.mrb[0].mxu0
    %v2717 = vadd.f32 %v2524, %v2716
    %v2718 = vpop.f32.mrb[0].mxu0
    %v2719 = vadd.f32 %v2526, %v2718
    %v2720 = vpop.f32.mrb[0].mxu0
    %v2721 = vadd.f32 %v2528, %v2720
    %2722 = vmatprep.mubr.bf16.mxu0 %v357
    %2723 = vmatmul.mubr.bf16.gmra.mrb[0].mxu0 %v356
    %v2724 = vpop.f32.mrb[0].mxu0
    %v2725 = vadd.f32 %v2532, %v2724
    %v2726 = vpop.f32.mrb[0].mxu0
    %v2727 = vadd.f32 %v2534, %v2726
    %v2728 = vpop.f32.mrb[0].mxu0
    %v2729 = vadd.f32 %v2536, %v2728
    %v2730 = vpop.f32.mrb[0].mxu0
    %v2731 = vadd.f32 %v2538, %v2730
    %2732 = vmatprep.mubr.bf16.mxu0 %v364
    %2733 = vmatmul.mubr.bf16.gmra.mrb[0].mxu0 %v363
    %v2734 = vpop.f32.mrb[0].mxu0
    %v2735 = vadd.f32 %v2542, %v2734
    %v2736 = vpop.f32.mrb[0].mxu0
    %v2737 = vadd.f32 %v2544, %v2736
    %v2738 = vpop.f32.mrb[0].mxu0
    %v2739 = vadd.f32 %v2546, %v2738
    %v2740 = vpop.f32.mrb[0].mxu0
    %v2741 = vadd.f32 %v2548, %v2740
    %2742 = vmatprep.mubr.bf16.mxu0 %v371
    %2743 = vmatmul.mubr.bf16.gmra.mrb[0].mxu0 %v370
    %v2744 = vpop.f32.mrb[0].mxu0
    %v2745 = vadd.f32 %v2552, %v2744
    %v2746 = vpop.f32.mrb[0].mxu0
    %v2747 = vadd.f32 %v2554, %v2746
    %v2748 = vpop.f32.mrb[0].mxu0
    %v2749 = vadd.f32 %v2556, %v2748
    %v2750 = vpop.f32.mrb[0].mxu0
    %v2751 = vadd.f32 %v2558, %v2750
    %2752 = vmatprep.mubr.bf16.mxu0 %v378
    %2753 = vmatmul.mubr.bf16.gmra.mrb[0].mxu0 %v377
    %v2754 = vpop.f32.mrb[0].mxu0
    %v2755 = vadd.f32 %v2562, %v2754
    %v2756 = vpop.f32.mrb[0].mxu0
    %v2757 = vadd.f32 %v2564, %v2756
    %v2758 = vpop.f32.mrb[0].mxu0
    %v2759 = vadd.f32 %v2566, %v2758
    %v2760 = vpop.f32.mrb[0].mxu0
    %v2761 = vadd.f32 %v2568, %v2760
    %2762 = vmatprep.mubr.bf16.mxu0 %v385
    %2763 = vmatmul.mubr.bf16.gmra.mrb[0].mxu0 %v384
    %v2764 = vpop.f32.mrb[0].mxu0
    %v2765 = vadd.f32 %v2572, %v2764
    %v2766 = vpop.f32.mrb[0].mxu0
    %v2767 = vadd.f32 %v2574, %v2766
    %v2768 = vpop.f32.mrb[0].mxu0
    %v2769 = vadd.f32 %v2576, %v2768
    %v2770 = vpop.f32.mrb[0].mxu0
    %v2771 = vadd.f32 %v2578, %v2770
    %2772 = vmatprep.mubr.bf16.mxu0 %v392
    %2773 = vmatmul.mubr.bf16.gmra.mrb[0].mxu0 %v391
    %v2774 = vpop.f32.mrb[0].mxu0
    %v2775 = vadd.f32 %v2582, %v2774
    %v2776 = vpop.f32.mrb[0].mxu0
    %v2777 = vadd.f32 %v2584, %v2776
    %v2778 = vpop.f32.mrb[0].mxu0
    %v2779 = vadd.f32 %v2586, %v2778
    %v2780 = vpop.f32.mrb[0].mxu0
    %v2781 = vadd.f32 %v2588, %v2780
    %2782 = vmatprep.mubr.bf16.mxu0 %v399
    %2783 = vmatmul.mubr.bf16.gmra.mrb[0].mxu0 %v398
    %v2784 = vpop.f32.mrb[0].mxu0
    %v2785 = vadd.f32 %v2592, %v2784
    %v2786 = vpop.f32.mrb[0].mxu0
    %v2787 = vadd.f32 %v2594, %v2786
    %v2788 = vpop.f32.mrb[0].mxu0
    %v2789 = vadd.f32 %v2596, %v2788
    %v2790 = vpop.f32.mrb[0].mxu0
    %v2791 = vadd.f32 %v2598, %v2790
    %2792 = vmatprep.mubr.bf16.mxu0 %v406
    %2793 = vmatmul.mubr.bf16.gmra.mrb[0].mxu0 %v405
    %v2794 = vpop.f32.mrb[0].mxu0
    %v2795 = vadd.f32 %v2602, %v2794
    %v2796 = vpop.f32.mrb[0].mxu0
    %v2797 = vadd.f32 %v2604, %v2796
    %v2798 = vpop.f32.mrb[0].mxu0
    %v2799 = vadd.f32 %v2606, %v2798
    %v2800 = vpop.f32.mrb[0].mxu0
    %v2801 = vadd.f32 %v2608, %v2800
    %2802 = vmatprep.mubr.bf16.mxu0 %v413
    %2803 = vmatmul.mubr.bf16.gmra.mrb[0].mxu0 %v412
    %v2804 = vpop.f32.mrb[0].mxu0
    %v2805 = vadd.f32 %v2612, %v2804
    %v2806 = vpop.f32.mrb[0].mxu0
    %v2807 = vadd.f32 %v2614, %v2806
    %v2808 = vpop.f32.mrb[0].mxu0
    %v2809 = vadd.f32 %v2616, %v2808
    %v2810 = vpop.f32.mrb[0].mxu0
    %v2811 = vadd.f32 %v2618, %v2810
    %2812 = vmatprep.mubr.bf16.mxu0 %v420
    %2813 = vmatmul.mubr.bf16.gmra.mrb[0].mxu0 %v419
    %v2814 = vpop.f32.mrb[0].mxu0
    %v2815 = vadd.f32 %v2622, %v2814
    %v2816 = vpop.f32.mrb[0].mxu0
    %v2817 = vadd.f32 %v2624, %v2816
    %v2818 = vpop.f32.mrb[0].mxu0
    %v2819 = vadd.f32 %v2626, %v2818
    %v2820 = vpop.f32.mrb[0].mxu0
    %v2821 = vadd.f32 %v2628, %v2820
    %2822 = vmatprep.mubr.bf16.mxu0 %v427
    %2823 = vmatmul.mubr.bf16.gmra.mrb[0].mxu0 %v426
    %v2824 = vpop.f32.mrb[0].mxu0
    %v2825 = vadd.f32 %v2632, %v2824
    %v2826 = vpop.f32.mrb[0].mxu0
    %v2827 = vadd.f32 %v2634, %v2826
    %v2828 = vpop.f32.mrb[0].mxu0
    %v2829 = vadd.f32 %v2636, %v2828
    %v2830 = vpop.f32.mrb[0].mxu0
    %v2831 = vadd.f32 %v2638, %v2830
    %2832 = vmatprep.mubr.bf16.mxu0 %v434
    %2833 = vmatmul.mubr.bf16.gmra.mrb[0].mxu0 %v433
    %v2834 = vpop.f32.mrb[0].mxu0
    %v2835 = vadd.f32 %v2642, %v2834
    %v2836 = vpop.f32.mrb[0].mxu0
    %v2837 = vadd.f32 %v2644, %v2836
    %v2838 = vpop.f32.mrb[0].mxu0
    %v2839 = vadd.f32 %v2646, %v2838
    %v2840 = vpop.f32.mrb[0].mxu0
    %v2841 = vadd.f32 %v2648, %v2840
    %2842 = vdwg.mxu0
    %2843 = vmatprep.subr.bf16.mxu0 %v1375
    %2844 = vmatpush1.bf16.msra.mxu0 %v1374
    %2845 = vmatprep.subr.bf16.mxu0 %v1379
    %2846 = vmatpush1.bf16.msra.mxu0 %v1378
    %2847 = vmatprep.subr.bf16.mxu0 %v1383
    %2848 = vmatpush1.bf16.msra.mxu0 %v1382
    %2849 = vmatprep.subr.bf16.mxu0 %v1387
    %2850 = vmatpush1.bf16.msra.mxu0 %v1386
    %2851 = vmatprep.subr.bf16.mxu0 %v1391
    %2852 = vmatpush1.bf16.msra.mxu0 %v1390
    %2853 = vmatprep.subr.bf16.mxu0 %v1395
    %2854 = vmatpush1.bf16.msra.mxu0 %v1394
    %2855 = vmatprep.subr.bf16.mxu0 %v1399
    %2856 = vmatpush1.bf16.msra.mxu0 %v1398
    %2857 = vmatprep.subr.bf16.mxu0 %v1403
    %2858 = vmatpush1.bf16.msra.mxu0 %v1402
    %2859 = vmatprep.subr.bf16.mxu0 %v1407
    %2860 = vmatpush1.bf16.msra.mxu0 %v1406
    %2861 = vmatprep.subr.bf16.mxu0 %v1411
    %2862 = vmatpush1.bf16.msra.mxu0 %v1410
    %2863 = vmatprep.subr.bf16.mxu0 %v1415
    %2864 = vmatpush1.bf16.msra.mxu0 %v1414
    %2865 = vmatprep.subr.bf16.mxu0 %v1419
    %2866 = vmatpush1.bf16.msra.mxu0 %v1418
    %2867 = vmatprep.subr.bf16.mxu0 %v1423
    %2868 = vmatpush1.bf16.msra.mxu0 %v1422
    %2869 = vmatprep.subr.bf16.mxu0 %v1427
    %2870 = vmatpush1.bf16.msra.mxu0 %v1426
    %2871 = vmatprep.subr.bf16.mxu0 %v1431
    %2872 = vmatpush1.bf16.msra.mxu0 %v1430
    %2873 = vmatprep.subr.bf16.mxu0 %v1435
    %2874 = vmatpush1.bf16.msra.mxu0 %v1434
    %2875 = vmatprep.mubr.bf16.mxu0 %v331
    %2876 = vmatmul.mubr.bf16.gmra.mrb[0].mxu0 %v330
    %v2877 = vpop.f32.mrb[0].mxu0
    %v2878 = vadd.f32 %v2685, %v2877
    %v2879 = vpop.f32.mrb[0].mxu0
    %v2880 = vadd.f32 %v2687, %v2879
    %v2881 = vpop.f32.mrb[0].mxu0
    %v2882 = vadd.f32 %v2689, %v2881
    %v2883 = vpop.f32.mrb[0].mxu0
    %v2884 = vadd.f32 %v2691, %v2883
    %2885 = vmatprep.mubr.bf16.mxu0 %v338
    %2886 = vmatmul.mubr.bf16.gmra.mrb[0].mxu0 %v337
    %v2887 = vpop.f32.mrb[0].mxu0
    %v2888 = vadd.f32 %v2695, %v2887
    %v2889 = vpop.f32.mrb[0].mxu0
    %v2890 = vadd.f32 %v2697, %v2889
    %v2891 = vpop.f32.mrb[0].mxu0
    %v2892 = vadd.f32 %v2699, %v2891
    %v2893 = vpop.f32.mrb[0].mxu0
    %v2894 = vadd.f32 %v2701, %v2893
    %2895 = vmatprep.mubr.bf16.mxu0 %v345
    %2896 = vmatmul.mubr.bf16.gmra.mrb[0].mxu0 %v344
    %v2897 = vpop.f32.mrb[0].mxu0
    %v2898 = vadd.f32 %v2705, %v2897
    %v2899 = vpop.f32.mrb[0].mxu0
    %v2900 = vadd.f32 %v2707, %v2899
    %v2901 = vpop.f32.mrb[0].mxu0
    %v2902 = vadd.f32 %v2709, %v2901
    %v2903 = vpop.f32.mrb[0].mxu0
    %v2904 = vadd.f32 %v2711, %v2903
    %2905 = vmatprep.mubr.bf16.mxu0 %v352
    %2906 = vmatmul.mubr.bf16.gmra.mrb[0].mxu0 %v351
    %v2907 = vpop.f32.mrb[0].mxu0
    %v2908 = vadd.f32 %v2715, %v2907
    %v2909 = vpop.f32.mrb[0].mxu0
    %v2910 = vadd.f32 %v2717, %v2909
    %v2911 = vpop.f32.mrb[0].mxu0
    %v2912 = vadd.f32 %v2719, %v2911
    %v2913 = vpop.f32.mrb[0].mxu0
    %v2914 = vadd.f32 %v2721, %v2913
    %2915 = vmatprep.mubr.bf16.mxu0 %v359
    %2916 = vmatmul.mubr.bf16.gmra.mrb[0].mxu0 %v358
    %v2917 = vpop.f32.mrb[0].mxu0
    %v2918 = vadd.f32 %v2725, %v2917
    %v2919 = vpop.f32.mrb[0].mxu0
    %v2920 = vadd.f32 %v2727, %v2919
    %v2921 = vpop.f32.mrb[0].mxu0
    %v2922 = vadd.f32 %v2729, %v2921
    %v2923 = vpop.f32.mrb[0].mxu0
    %v2924 = vadd.f32 %v2731, %v2923
    %2925 = vmatprep.mubr.bf16.mxu0 %v366
    %2926 = vmatmul.mubr.bf16.gmra.mrb[0].mxu0 %v365
    %v2927 = vpop.f32.mrb[0].mxu0
    %v2928 = vadd.f32 %v2735, %v2927
    %v2929 = vpop.f32.mrb[0].mxu0
    %v2930 = vadd.f32 %v2737, %v2929
    %v2931 = vpop.f32.mrb[0].mxu0
    %v2932 = vadd.f32 %v2739, %v2931
    %v2933 = vpop.f32.mrb[0].mxu0
    %v2934 = vadd.f32 %v2741, %v2933
    %2935 = vmatprep.mubr.bf16.mxu0 %v373
    %2936 = vmatmul.mubr.bf16.gmra.mrb[0].mxu0 %v372
    %v2937 = vpop.f32.mrb[0].mxu0
    %v2938 = vadd.f32 %v2745, %v2937
    %v2939 = vpop.f32.mrb[0].mxu0
    %v2940 = vadd.f32 %v2747, %v2939
    %v2941 = vpop.f32.mrb[0].mxu0
    %v2942 = vadd.f32 %v2749, %v2941
    %v2943 = vpop.f32.mrb[0].mxu0
    %v2944 = vadd.f32 %v2751, %v2943
    %2945 = vmatprep.mubr.bf16.mxu0 %v380
    %2946 = vmatmul.mubr.bf16.gmra.mrb[0].mxu0 %v379
    %v2947 = vpop.f32.mrb[0].mxu0
    %v2948 = vadd.f32 %v2755, %v2947
    %v2949 = vpop.f32.mrb[0].mxu0
    %v2950 = vadd.f32 %v2757, %v2949
    %v2951 = vpop.f32.mrb[0].mxu0
    %v2952 = vadd.f32 %v2759, %v2951
    %v2953 = vpop.f32.mrb[0].mxu0
    %v2954 = vadd.f32 %v2761, %v2953
    %2955 = vmatprep.mubr.bf16.mxu0 %v387
    %2956 = vmatmul.mubr.bf16.gmra.mrb[0].mxu0 %v386
    %v2957 = vpop.f32.mrb[0].mxu0
    %v2958 = vadd.f32 %v2765, %v2957
    %v2959 = vpop.f32.mrb[0].mxu0
    %v2960 = vadd.f32 %v2767, %v2959
    %v2961 = vpop.f32.mrb[0].mxu0
    %v2962 = vadd.f32 %v2769, %v2961
    %v2963 = vpop.f32.mrb[0].mxu0
    %v2964 = vadd.f32 %v2771, %v2963
    %2965 = vmatprep.mubr.bf16.mxu0 %v394
    %2966 = vmatmul.mubr.bf16.gmra.mrb[0].mxu0 %v393
    %v2967 = vpop.f32.mrb[0].mxu0
    %v2968 = vadd.f32 %v2775, %v2967
    %v2969 = vpop.f32.mrb[0].mxu0
    %v2970 = vadd.f32 %v2777, %v2969
    %v2971 = vpop.f32.mrb[0].mxu0
    %v2972 = vadd.f32 %v2779, %v2971
    %v2973 = vpop.f32.mrb[0].mxu0
    %v2974 = vadd.f32 %v2781, %v2973
    %2975 = vmatprep.mubr.bf16.mxu0 %v401
    %2976 = vmatmul.mubr.bf16.gmra.mrb[0].mxu0 %v400
    %v2977 = vpop.f32.mrb[0].mxu0
    %v2978 = vadd.f32 %v2785, %v2977
    %v2979 = vpop.f32.mrb[0].mxu0
    %v2980 = vadd.f32 %v2787, %v2979
    %v2981 = vpop.f32.mrb[0].mxu0
    %v2982 = vadd.f32 %v2789, %v2981
    %v2983 = vpop.f32.mrb[0].mxu0
    %v2984 = vadd.f32 %v2791, %v2983
    %2985 = vmatprep.mubr.bf16.mxu0 %v408
    %2986 = vmatmul.mubr.bf16.gmra.mrb[0].mxu0 %v407
    %v2987 = vpop.f32.mrb[0].mxu0
    %v2988 = vadd.f32 %v2795, %v2987
    %v2989 = vpop.f32.mrb[0].mxu0
    %v2990 = vadd.f32 %v2797, %v2989
    %v2991 = vpop.f32.mrb[0].mxu0
    %v2992 = vadd.f32 %v2799, %v2991
    %v2993 = vpop.f32.mrb[0].mxu0
    %v2994 = vadd.f32 %v2801, %v2993
    %2995 = vmatprep.mubr.bf16.mxu0 %v415
    %2996 = vmatmul.mubr.bf16.gmra.mrb[0].mxu0 %v414
    %v2997 = vpop.f32.mrb[0].mxu0
    %v2998 = vadd.f32 %v2805, %v2997
    %v2999 = vpop.f32.mrb[0].mxu0
    %v3000 = vadd.f32 %v2807, %v2999
    %v3001 = vpop.f32.mrb[0].mxu0
    %v3002 = vadd.f32 %v2809, %v3001
    %v3003 = vpop.f32.mrb[0].mxu0
    %v3004 = vadd.f32 %v2811, %v3003
    %3005 = vmatprep.mubr.bf16.mxu0 %v422
    %3006 = vmatmul.mubr.bf16.gmra.mrb[0].mxu0 %v421
    %v3007 = vpop.f32.mrb[0].mxu0
    %v3008 = vadd.f32 %v2815, %v3007
    %v3009 = vpop.f32.mrb[0].mxu0
    %v3010 = vadd.f32 %v2817, %v3009
    %v3011 = vpop.f32.mrb[0].mxu0
    %v3012 = vadd.f32 %v2819, %v3011
    %v3013 = vpop.f32.mrb[0].mxu0
    %v3014 = vadd.f32 %v2821, %v3013
    %3015 = vmatprep.mubr.bf16.mxu0 %v429
    %3016 = vmatmul.mubr.bf16.gmra.mrb[0].mxu0 %v428
    %v3017 = vpop.f32.mrb[0].mxu0
    %v3018 = vadd.f32 %v2825, %v3017
    %v3019 = vpop.f32.mrb[0].mxu0
    %v3020 = vadd.f32 %v2827, %v3019
    %v3021 = vpop.f32.mrb[0].mxu0
    %v3022 = vadd.f32 %v2829, %v3021
    %v3023 = vpop.f32.mrb[0].mxu0
    %v3024 = vadd.f32 %v2831, %v3023
    %3025 = vmatprep.mubr.bf16.mxu0 %v436
    %3026 = vmatmul.mubr.bf16.gmra.mrb[0].mxu0 %v435
    %v3027 = vpop.f32.mrb[0].mxu0
    %v3028 = vadd.f32 %v2835, %v3027
    %v3029 = vpop.f32.mrb[0].mxu0
    %v3030 = vadd.f32 %v2837, %v3029
    %v3031 = vpop.f32.mrb[0].mxu0
    %v3032 = vadd.f32 %v2839, %v3031
    %v3033 = vpop.f32.mrb[0].mxu0
    %v3034 = vadd.f32 %v2841, %v3033
    %3035 = vdwg.mxu0
    %3036 = vmatprep.subr.bf16.mxu0 %v1439
    %3037 = vmatpush1.bf16.msra.mxu0 %v1438
    %3038 = vmatprep.subr.bf16.mxu0 0
    %3039 = vmatpush1.bf16.msra.mxu0 0
    %3040 = vmatprep.subr.bf16.mxu0 0
    %3041 = vmatpush1.bf16.msra.mxu0 0
    %3042 = vmatprep.subr.bf16.mxu0 0
    %3043 = vmatpush1.bf16.msra.mxu0 0
    %3044 = vmatprep.subr.bf16.mxu0 0
    %3045 = vmatpush1.bf16.msra.mxu0 0
    %3046 = vmatprep.subr.bf16.mxu0 0
    %3047 = vmatpush1.bf16.msra.mxu0 0
    %3048 = vmatprep.subr.bf16.mxu0 0
    %3049 = vmatpush1.bf16.msra.mxu0 0
    %3050 = vmatprep.subr.bf16.mxu0 0
    %3051 = vmatpush1.bf16.msra.mxu0 0
    %3052 = vmatprep.subr.bf16.mxu0 0
    %3053 = vmatpush1.bf16.msra.mxu0 0
    %3054 = vmatprep.subr.bf16.mxu0 0
    %3055 = vmatpush1.bf16.msra.mxu0 0
    %3056 = vmatprep.subr.bf16.mxu0 0
    %3057 = vmatpush1.bf16.msra.mxu0 0
    %3058 = vmatprep.subr.bf16.mxu0 0
    %3059 = vmatpush1.bf16.msra.mxu0 0
    %3060 = vmatprep.subr.bf16.mxu0 0
    %3061 = vmatpush1.bf16.msra.mxu0 0
    %3062 = vmatprep.subr.bf16.mxu0 0
    %3063 = vmatpush1.bf16.msra.mxu0 0
    %3064 = vmatprep.subr.bf16.mxu0 0
    %3065 = vmatpush1.bf16.msra.mxu0 0
    %3066 = vmatprep.subr.bf16.mxu0 0
    %3067 = vmatpush1.bf16.msra.mxu0 0
    %3068 = vmatprep.mubr.bf16.mxu0 0
    %3069 = vmatmul.mubr.bf16.gmra.mrb[0].mxu0 %v1638
    %v3070 = vpop.f32.mrb[0].mxu0
    %v3071 = vadd.f32 %v2878, %v3070
    %v3072 = vpop.f32.mrb[0].mxu0
    %v3073 = vadd.f32 %v2880, %v3072
    %v3074 = vpop.f32.mrb[0].mxu0
    %v3075 = vadd.f32 %v2882, %v3074
    %v3076 = vpop.f32.mrb[0].mxu0
    %v3077 = vadd.f32 %v2884, %v3076
    %3078 = vmatprep.mubr.bf16.mxu0 0
    %3079 = vmatmul.mubr.bf16.gmra.mrb[0].mxu0 %v1641
    %v3080 = vpop.f32.mrb[0].mxu0
    %v3081 = vadd.f32 %v2888, %v3080
    %v3082 = vpop.f32.mrb[0].mxu0
    %v3083 = vadd.f32 %v2890, %v3082
    %v3084 = vpop.f32.mrb[0].mxu0
    %v3085 = vadd.f32 %v2892, %v3084
    %v3086 = vpop.f32.mrb[0].mxu0
    %v3087 = vadd.f32 %v2894, %v3086
    %3088 = vmatprep.mubr.bf16.mxu0 0
    %3089 = vmatmul.mubr.bf16.gmra.mrb[0].mxu0 %v1644
    %v3090 = vpop.f32.mrb[0].mxu0
    %v3091 = vadd.f32 %v2898, %v3090
    %v3092 = vpop.f32.mrb[0].mxu0
    %v3093 = vadd.f32 %v2900, %v3092
    %v3094 = vpop.f32.mrb[0].mxu0
    %v3095 = vadd.f32 %v2902, %v3094
    %v3096 = vpop.f32.mrb[0].mxu0
    %v3097 = vadd.f32 %v2904, %v3096
    %3098 = vmatprep.mubr.bf16.mxu0 0
    %3099 = vmatmul.mubr.bf16.gmra.mrb[0].mxu0 %v1647
    %v3100 = vpop.f32.mrb[0].mxu0
    %v3101 = vadd.f32 %v2908, %v3100
    %v3102 = vpop.f32.mrb[0].mxu0
    %v3103 = vadd.f32 %v2910, %v3102
    %v3104 = vpop.f32.mrb[0].mxu0
    %v3105 = vadd.f32 %v2912, %v3104
    %v3106 = vpop.f32.mrb[0].mxu0
    %v3107 = vadd.f32 %v2914, %v3106
    %3108 = vmatprep.mubr.bf16.mxu0 0
    %3109 = vmatmul.mubr.bf16.gmra.mrb[0].mxu0 %v1650
    %v3110 = vpop.f32.mrb[0].mxu0
    %v3111 = vadd.f32 %v2918, %v3110
    %v3112 = vpop.f32.mrb[0].mxu0
    %v3113 = vadd.f32 %v2920, %v3112
    %v3114 = vpop.f32.mrb[0].mxu0
    %v3115 = vadd.f32 %v2922, %v3114
    %v3116 = vpop.f32.mrb[0].mxu0
    %v3117 = vadd.f32 %v2924, %v3116
    %3118 = vmatprep.mubr.bf16.mxu0 0
    %3119 = vmatmul.mubr.bf16.gmra.mrb[0].mxu0 %v1653
    %v3120 = vpop.f32.mrb[0].mxu0
    %v3121 = vadd.f32 %v2928, %v3120
    %v3122 = vpop.f32.mrb[0].mxu0
    %v3123 = vadd.f32 %v2930, %v3122
    %v3124 = vpop.f32.mrb[0].mxu0
    %v3125 = vadd.f32 %v2932, %v3124
    %v3126 = vpop.f32.mrb[0].mxu0
    %v3127 = vadd.f32 %v2934, %v3126
    %3128 = vmatprep.mubr.bf16.mxu0 0
    %3129 = vmatmul.mubr.bf16.gmra.mrb[0].mxu0 %v1656
    %v3130 = vpop.f32.mrb[0].mxu0
    %v3131 = vadd.f32 %v2938, %v3130
    %v3132 = vpop.f32.mrb[0].mxu0
    %v3133 = vadd.f32 %v2940, %v3132
    %v3134 = vpop.f32.mrb[0].mxu0
    %v3135 = vadd.f32 %v2942, %v3134
    %v3136 = vpop.f32.mrb[0].mxu0
    %v3137 = vadd.f32 %v2944, %v3136
    %3138 = vmatprep.mubr.bf16.mxu0 0
    %3139 = vmatmul.mubr.bf16.gmra.mrb[0].mxu0 %v1659
    %v3140 = vpop.f32.mrb[0].mxu0
    %v3141 = vadd.f32 %v2948, %v3140
    %v3142 = vpop.f32.mrb[0].mxu0
    %v3143 = vadd.f32 %v2950, %v3142
    %v3144 = vpop.f32.mrb[0].mxu0
    %v3145 = vadd.f32 %v2952, %v3144
    %v3146 = vpop.f32.mrb[0].mxu0
    %v3147 = vadd.f32 %v2954, %v3146
    %3148 = vmatprep.mubr.bf16.mxu0 0
    %3149 = vmatmul.mubr.bf16.gmra.mrb[0].mxu0 %v1662
    %v3150 = vpop.f32.mrb[0].mxu0
    %v3151 = vadd.f32 %v2958, %v3150
    %v3152 = vpop.f32.mrb[0].mxu0
    %v3153 = vadd.f32 %v2960, %v3152
    %v3154 = vpop.f32.mrb[0].mxu0
    %v3155 = vadd.f32 %v2962, %v3154
    %v3156 = vpop.f32.mrb[0].mxu0
    %v3157 = vadd.f32 %v2964, %v3156
    %3158 = vmatprep.mubr.bf16.mxu0 0
    %3159 = vmatmul.mubr.bf16.gmra.mrb[0].mxu0 %v1665
    %v3160 = vpop.f32.mrb[0].mxu0
    %v3161 = vadd.f32 %v2968, %v3160
    %v3162 = vpop.f32.mrb[0].mxu0
    %v3163 = vadd.f32 %v2970, %v3162
    %v3164 = vpop.f32.mrb[0].mxu0
    %v3165 = vadd.f32 %v2972, %v3164
    %v3166 = vpop.f32.mrb[0].mxu0
    %v3167 = vadd.f32 %v2974, %v3166
    %3168 = vmatprep.mubr.bf16.mxu0 0
    %3169 = vmatmul.mubr.bf16.gmra.mrb[0].mxu0 %v1668
    %v3170 = vpop.f32.mrb[0].mxu0
    %v3171 = vadd.f32 %v2978, %v3170
    %v3172 = vpop.f32.mrb[0].mxu0
    %v3173 = vadd.f32 %v2980, %v3172
    %v3174 = vpop.f32.mrb[0].mxu0
    %v3175 = vadd.f32 %v2982, %v3174
    %v3176 = vpop.f32.mrb[0].mxu0
    %v3177 = vadd.f32 %v2984, %v3176
    %3178 = vmatprep.mubr.bf16.mxu0 0
    %3179 = vmatmul.mubr.bf16.gmra.mrb[0].mxu0 %v1671
    %v3180 = vpop.f32.mrb[0].mxu0
    %v3181 = vadd.f32 %v2988, %v3180
    %v3182 = vpop.f32.mrb[0].mxu0
    %v3183 = vadd.f32 %v2990, %v3182
    %v3184 = vpop.f32.mrb[0].mxu0
    %v3185 = vadd.f32 %v2992, %v3184
    %v3186 = vpop.f32.mrb[0].mxu0
    %v3187 = vadd.f32 %v2994, %v3186
    %3188 = vmatprep.mubr.bf16.mxu0 0
    %3189 = vmatmul.mubr.bf16.gmra.mrb[0].mxu0 %v1674
    %v3190 = vpop.f32.mrb[0].mxu0
    %v3191 = vadd.f32 %v2998, %v3190
    %v3192 = vpop.f32.mrb[0].mxu0
    %v3193 = vadd.f32 %v3000, %v3192
    %v3194 = vpop.f32.mrb[0].mxu0
    %v3195 = vadd.f32 %v3002, %v3194
    %v3196 = vpop.f32.mrb[0].mxu0
    %v3197 = vadd.f32 %v3004, %v3196
    %3198 = vmatprep.mubr.bf16.mxu0 0
    %3199 = vmatmul.mubr.bf16.gmra.mrb[0].mxu0 %v1677
    %v3200 = vpop.f32.mrb[0].mxu0
    %v3201 = vadd.f32 %v3008, %v3200
    %v3202 = vpop.f32.mrb[0].mxu0
    %v3203 = vadd.f32 %v3010, %v3202
    %v3204 = vpop.f32.mrb[0].mxu0
    %v3205 = vadd.f32 %v3012, %v3204
    %v3206 = vpop.f32.mrb[0].mxu0
    %v3207 = vadd.f32 %v3014, %v3206
    %3208 = vmatprep.mubr.bf16.mxu0 0
    %3209 = vmatmul.mubr.bf16.gmra.mrb[0].mxu0 %v1680
    %v3210 = vpop.f32.mrb[0].mxu0
    %v3211 = vadd.f32 %v3018, %v3210
    %v3212 = vpop.f32.mrb[0].mxu0
    %v3213 = vadd.f32 %v3020, %v3212
    %v3214 = vpop.f32.mrb[0].mxu0
    %v3215 = vadd.f32 %v3022, %v3214
    %v3216 = vpop.f32.mrb[0].mxu0
    %v3217 = vadd.f32 %v3024, %v3216
    %3218 = vmatprep.mubr.bf16.mxu0 0
    %3219 = vmatmul.mubr.bf16.gmra.mrb[0].mxu0 %v1683
    %v3220 = vpop.f32.mrb[0].mxu0
    %v3221 = vadd.f32 %v3028, %v3220
    %v3222 = vpop.f32.mrb[0].mxu0
    %v3223 = vadd.f32 %v3030, %v3222
    %v3224 = vpop.f32.mrb[0].mxu0
    %v3225 = vadd.f32 %v3032, %v3224
    %v3226 = vpop.f32.mrb[0].mxu0
    %v3227 = vadd.f32 %v3034, %v3226
    %3228 = vdwg.mxu0
    %v3229 = vmax.f32 %v2299, 0.0
    %v3230 = vmax.f32 %v2301, 0.0
    %v3231 = vmax.f32 %v3071, 0.0
    %v3232 = vmax.f32 %v3073, 0.0
    %v3233 = vmax.f32 %v2303, 0.0
    %v3234 = vmax.f32 %v2305, 0.0
    %v3235 = vmax.f32 %v3075, 0.0
    %v3236 = vmax.f32 %v3077, 0.0
    %v3237 = vmax.f32 %v2309, 0.0
    %v3238 = vmax.f32 %v2311, 0.0
    %v3239 = vmax.f32 %v3081, 0.0
    %v3240 = vmax.f32 %v3083, 0.0
    %v3241 = vmax.f32 %v2313, 0.0
    %v3242 = vmax.f32 %v2315, 0.0
    %v3243 = vmax.f32 %v3085, 0.0
    %v3244 = vmax.f32 %v3087, 0.0
    %v3245 = vmax.f32 %v2319, 0.0
    %v3246 = vmax.f32 %v2321, 0.0
    %v3247 = vmax.f32 %v3091, 0.0
    %v3248 = vmax.f32 %v3093, 0.0
    %v3249 = vmax.f32 %v2323, 0.0
    %v3250 = vmax.f32 %v2325, 0.0
    %v3251 = vmax.f32 %v3095, 0.0
    %v3252 = vmax.f32 %v3097, 0.0
    %v3253 = vmax.f32 %v2329, 0.0
    %v3254 = vmax.f32 %v2331, 0.0
    %v3255 = vmax.f32 %v3101, 0.0
    %v3256 = vmax.f32 %v3103, 0.0
    %v3257 = vmax.f32 %v2333, 0.0
    %v3258 = vmax.f32 %v2335, 0.0
    %v3259 = vmax.f32 %v3105, 0.0
    %v3260 = vmax.f32 %v3107, 0.0
    %v3261 = vmax.f32 %v2339, 0.0
    %v3262 = vmax.f32 %v2341, 0.0
    %v3263 = vmax.f32 %v3111, 0.0
    %v3264 = vmax.f32 %v3113, 0.0
    %v3265 = vmax.f32 %v2343, 0.0
    %v3266 = vmax.f32 %v2345, 0.0
    %v3267 = vmax.f32 %v3115, 0.0
    %v3268 = vmax.f32 %v3117, 0.0
    %v3269 = vmax.f32 %v2349, 0.0
    %v3270 = vmax.f32 %v2351, 0.0
    %v3271 = vmax.f32 %v3121, 0.0
    %v3272 = vmax.f32 %v3123, 0.0
    %v3273 = vmax.f32 %v2353, 0.0
    %v3274 = vmax.f32 %v2355, 0.0
    %v3275 = vmax.f32 %v3125, 0.0
    %v3276 = vmax.f32 %v3127, 0.0
    %v3277 = vmax.f32 %v2359, 0.0
    %v3278 = vmax.f32 %v2361, 0.0
    %v3279 = vmax.f32 %v3131, 0.0
    %v3280 = vmax.f32 %v3133, 0.0
    %v3281 = vmax.f32 %v2363, 0.0
    %v3282 = vmax.f32 %v2365, 0.0
    %v3283 = vmax.f32 %v3135, 0.0
    %v3284 = vmax.f32 %v3137, 0.0
    %v3285 = vmax.f32 %v2369, 0.0
    %v3286 = vmax.f32 %v2371, 0.0
    %v3287 = vmax.f32 %v3141, 0.0
    %v3288 = vmax.f32 %v3143, 0.0
    %v3289 = vmax.f32 %v2373, 0.0
    %v3290 = vmax.f32 %v2375, 0.0
    %v3291 = vmax.f32 %v3145, 0.0
    %v3292 = vmax.f32 %v3147, 0.0
    %v3293 = vmax.f32 %v2379, 0.0
    %v3294 = vmax.f32 %v2381, 0.0
    %v3295 = vmax.f32 %v3151, 0.0
    %v3296 = vmax.f32 %v3153, 0.0
    %v3297 = vmax.f32 %v2383, 0.0
    %v3298 = vmax.f32 %v2385, 0.0
    %v3299 = vmax.f32 %v3155, 0.0
    %v3300 = vmax.f32 %v3157, 0.0
    %v3301 = vmax.f32 %v2389, 0.0
    %v3302 = vmax.f32 %v2391, 0.0
    %v3303 = vmax.f32 %v3161, 0.0
    %v3304 = vmax.f32 %v3163, 0.0
    %v3305 = vmax.f32 %v2393, 0.0
    %v3306 = vmax.f32 %v2395, 0.0
    %v3307 = vmax.f32 %v3165, 0.0
    %v3308 = vmax.f32 %v3167, 0.0
    %v3309 = vmax.f32 %v2399, 0.0
    %v3310 = vmax.f32 %v2401, 0.0
    %v3311 = vmax.f32 %v3171, 0.0
    %v3312 = vmax.f32 %v3173, 0.0
    %v3313 = vmax.f32 %v2403, 0.0
    %v3314 = vmax.f32 %v2405, 0.0
    %v3315 = vmax.f32 %v3175, 0.0
    %v3316 = vmax.f32 %v3177, 0.0
    %v3317 = vmax.f32 %v2409, 0.0
    %v3318 = vmax.f32 %v2411, 0.0
    %v3319 = vmax.f32 %v3181, 0.0
    %v3320 = vmax.f32 %v3183, 0.0
    %v3321 = vmax.f32 %v2413, 0.0
    %v3322 = vmax.f32 %v2415, 0.0
    %v3323 = vmax.f32 %v3185, 0.0
    %v3324 = vmax.f32 %v3187, 0.0
    %v3325 = vmax.f32 %v2419, 0.0
    %v3326 = vmax.f32 %v2421, 0.0
    %v3327 = vmax.f32 %v3191, 0.0
    %v3328 = vmax.f32 %v3193, 0.0
    %v3329 = vmax.f32 %v2423, 0.0
    %v3330 = vmax.f32 %v2425, 0.0
    %v3331 = vmax.f32 %v3195, 0.0
    %v3332 = vmax.f32 %v3197, 0.0
    %v3333 = vmax.f32 %v2429, 0.0
    %v3334 = vmax.f32 %v2431, 0.0
    %v3335 = vmax.f32 %v3201, 0.0
    %v3336 = vmax.f32 %v3203, 0.0
    %v3337 = vmax.f32 %v2433, 0.0
    %v3338 = vmax.f32 %v2435, 0.0
    %v3339 = vmax.f32 %v3205, 0.0
    %v3340 = vmax.f32 %v3207, 0.0
    %v3341 = vmax.f32 %v2439, 0.0
    %v3342 = vmax.f32 %v2441, 0.0
    %v3343 = vmax.f32 %v3211, 0.0
    %v3344 = vmax.f32 %v3213, 0.0
    %v3345 = vmax.f32 %v2443, 0.0
    %v3346 = vmax.f32 %v2445, 0.0
    %v3347 = vmax.f32 %v3215, 0.0
    %v3348 = vmax.f32 %v3217, 0.0
    %v3349 = vmax.f32 %v2449, 0.0
    %v3350 = vmax.f32 %v2451, 0.0
    %v3351 = vmax.f32 %v3221, 0.0
    %v3352 = vmax.f32 %v3223, 0.0
    %v3353 = vmax.f32 %v2453, 0.0
    %v3354 = vmax.f32 %v2455, 0.0
    %v3355 = vmax.f32 %v3225, 0.0
    %v3356 = vmax.f32 %v3227, 0.0
    %v3357 = vpack.c.bf16 %v3233, %v3229
    %v3358 = vpack.c.bf16 %v3234, %v3230
    %v3359 = vpack.c.bf16 %v3235, %v3231
    %v3360 = vpack.c.bf16 %v3236, %v3232
    %v3361 = vpack.c.bf16 %v3241, %v3237
    %v3362 = vpack.c.bf16 %v3242, %v3238
    %v3363 = vpack.c.bf16 %v3243, %v3239
    %v3364 = vpack.c.bf16 %v3244, %v3240
    %v3365 = vpack.c.bf16 %v3249, %v3245
    %v3366 = vpack.c.bf16 %v3250, %v3246
    %v3367 = vpack.c.bf16 %v3251, %v3247
    %v3368 = vpack.c.bf16 %v3252, %v3248
    %v3369 = vpack.c.bf16 %v3257, %v3253
    %v3370 = vpack.c.bf16 %v3258, %v3254
    %v3371 = vpack.c.bf16 %v3259, %v3255
    %v3372 = vpack.c.bf16 %v3260, %v3256
    %v3373 = vpack.c.bf16 %v3265, %v3261
    %v3374 = vpack.c.bf16 %v3266, %v3262
    %v3375 = vpack.c.bf16 %v3267, %v3263
    %v3376 = vpack.c.bf16 %v3268, %v3264
    %v3377 = vpack.c.bf16 %v3273, %v3269
    %v3378 = vpack.c.bf16 %v3274, %v3270
    %v3379 = vpack.c.bf16 %v3275, %v3271
    %v3380 = vpack.c.bf16 %v3276, %v3272
    %v3381 = vpack.c.bf16 %v3281, %v3277
    %v3382 = vpack.c.bf16 %v3282, %v3278
    %v3383 = vpack.c.bf16 %v3283, %v3279
    %v3384 = vpack.c.bf16 %v3284, %v3280
    %v3385 = vpack.c.bf16 %v3289, %v3285
    %v3386 = vpack.c.bf16 %v3290, %v3286
    %v3387 = vpack.c.bf16 %v3291, %v3287
    %v3388 = vpack.c.bf16 %v3292, %v3288
    %v3389 = vpack.c.bf16 %v3297, %v3293
    %v3390 = vpack.c.bf16 %v3298, %v3294
    %v3391 = vpack.c.bf16 %v3299, %v3295
    %v3392 = vpack.c.bf16 %v3300, %v3296
    %v3393 = vpack.c.bf16 %v3305, %v3301
    %v3394 = vpack.c.bf16 %v3306, %v3302
    %v3395 = vpack.c.bf16 %v3307, %v3303
    %v3396 = vpack.c.bf16 %v3308, %v3304
    %v3397 = vpack.c.bf16 %v3313, %v3309
    %v3398 = vpack.c.bf16 %v3314, %v3310
    %v3399 = vpack.c.bf16 %v3315, %v3311
    %v3400 = vpack.c.bf16 %v3316, %v3312
    %v3401 = vpack.c.bf16 %v3321, %v3317
    %v3402 = vpack.c.bf16 %v3322, %v3318
    %v3403 = vpack.c.bf16 %v3323, %v3319
    %v3404 = vpack.c.bf16 %v3324, %v3320
    %v3405 = vpack.c.bf16 %v3329, %v3325
    %v3406 = vpack.c.bf16 %v3330, %v3326
    %v3407 = vpack.c.bf16 %v3331, %v3327
    %v3408 = vpack.c.bf16 %v3332, %v3328
    %v3409 = vpack.c.bf16 %v3337, %v3333
    %v3410 = vpack.c.bf16 %v3338, %v3334
    %v3411 = vpack.c.bf16 %v3339, %v3335
    %v3412 = vpack.c.bf16 %v3340, %v3336
    %v3413 = vpack.c.bf16 %v3345, %v3341
    %v3414 = vpack.c.bf16 %v3346, %v3342
    %v3415 = vpack.c.bf16 %v3347, %v3343
    %v3416 = vpack.c.bf16 %v3348, %v3344
    %v3417 = vpack.c.bf16 %v3353, %v3349
    %v3418 = vpack.c.bf16 %v3354, %v3350
    %v3419 = vpack.c.bf16 %v3355, %v3351
    %v3420 = vpack.c.bf16 %v3356, %v3352
    %v3421 = vld [vmem:[#allocation7] sm:$0xff]
    %v3422 = vld [vmem:[#allocation7 + $0x8] sm:$0xff]
    %v3423 = vld [vmem:[#allocation7 + $0x10] sm:$0xff]
    %v3424 = vld [vmem:[#allocation7 + $0x18] sm:$0xff]
    %v3425 = vld [vmem:[#allocation7 + $0x20] sm:$0xff]
    %v3426 = vld [vmem:[#allocation7 + $0x28] sm:$0xff]
    %v3427 = vld [vmem:[#allocation7 + $0x30] sm:$0xff]
    %v3428 = vld [vmem:[#allocation7 + $0x38] sm:$0xff]
    %v3429 = vld [vmem:[#allocation7 + $0x40] sm:$0xff]
    %v3430 = vld [vmem:[#allocation7 + $0x48] sm:$0xff]
    %v3431 = vld [vmem:[#allocation7 + $0x50] sm:$0xff]
    %v3432 = vld [vmem:[#allocation7 + $0x58] sm:$0xff]
    %v3433 = vld [vmem:[#allocation7 + $0x60] sm:$0xff]
    %v3434 = vld [vmem:[#allocation7 + $0x68] sm:$0xff]
    %v3435 = vld [vmem:[#allocation7 + $0x70] sm:$0xff]
    %v3436 = vld [vmem:[#allocation7 + $0x78] sm:$0xff]
    %v3437 = vld [vmem:[#allocation7 + $0x80] sm:$0xff]
    %v3438 = vld [vmem:[#allocation7 + $0x88] sm:$0xff]
    %v3439 = vld [vmem:[#allocation7 + $0x90] sm:$0xff]
    %v3440 = vld [vmem:[#allocation7 + $0x98] sm:$0xff]
    %v3441 = vld [vmem:[#allocation7 + $0xa0] sm:$0xff]
    %v3442 = vld [vmem:[#allocation7 + $0xa8] sm:$0xff]
    %v3443 = vld [vmem:[#allocation7 + $0xb0] sm:$0xff]
    %v3444 = vld [vmem:[#allocation7 + $0xb8] sm:$0xff]
    %v3445 = vld [vmem:[#allocation7 + $0xc0] sm:$0xff]
    %v3446 = vld [vmem:[#allocation7 + $0xc8] sm:$0xff]
    %v3447 = vld [vmem:[#allocation7 + $0xd0] sm:$0xff]
    %v3448 = vld [vmem:[#allocation7 + $0xd8] sm:$0xff]
    %v3449 = vld [vmem:[#allocation7 + $0xe0] sm:$0xff]
    %v3450 = vld [vmem:[#allocation7 + $0xe8] sm:$0xff]
    %v3451 = vld [vmem:[#allocation7 + $0xf0] sm:$0xff]
    %v3452 = vld [vmem:[#allocation7 + $0xf8] sm:$0xff]
    %v3453 = vld [vmem:[#allocation7 + $0x100] sm:$0xff]
    %v3454 = vld [vmem:[#allocation7 + $0x108] sm:$0xff]
    %v3455 = vld [vmem:[#allocation7 + $0x110] sm:$0xff]
    %v3456 = vld [vmem:[#allocation7 + $0x118] sm:$0xff]
    %v3457 = vld [vmem:[#allocation7 + $0x120] sm:$0xff]
    %v3458 = vld [vmem:[#allocation7 + $0x128] sm:$0xff]
    %v3459 = vld [vmem:[#allocation7 + $0x130] sm:$0xff]
    %v3460 = vld [vmem:[#allocation7 + $0x138] sm:$0xff]
    %v3461 = vld [vmem:[#allocation7 + $0x140] sm:$0xff]
    %v3462 = vld [vmem:[#allocation7 + $0x148] sm:$0xff]
    %v3463 = vld [vmem:[#allocation7 + $0x150] sm:$0xff]
    %v3464 = vld [vmem:[#allocation7 + $0x158] sm:$0xff]
    %v3465 = vld [vmem:[#allocation7 + $0x160] sm:$0xff]
    %v3466 = vld [vmem:[#allocation7 + $0x168] sm:$0xff]
    %v3467 = vld [vmem:[#allocation7 + $0x170] sm:$0xff]
    %v3468 = vld [vmem:[#allocation7 + $0x178] sm:$0xff]
    %v3469 = vld [vmem:[#allocation7 + $0x180] sm:$0xff]
    %v3470 = vld [vmem:[#allocation7 + $0x188] sm:$0xff]
    %v3471 = vld [vmem:[#allocation7 + $0x190] sm:$0xff]
    %v3472 = vld [vmem:[#allocation7 + $0x198] sm:$0xff]
    %v3473 = vld [vmem:[#allocation7 + $0x1a0] sm:$0xff]
    %v3474 = vld [vmem:[#allocation7 + $0x1a8] sm:$0xff]
    %v3475 = vld [vmem:[#allocation7 + $0x1b0] sm:$0xff]
    %v3476 = vld [vmem:[#allocation7 + $0x1b8] sm:$0xff]
    %v3477 = vld [vmem:[#allocation7 + $0x1c0] sm:$0xff]
    %v3478 = vld [vmem:[#allocation7 + $0x1c8] sm:$0xff]
    %v3479 = vld [vmem:[#allocation7 + $0x1d0] sm:$0xff]
    %v3480 = vld [vmem:[#allocation7 + $0x1d8] sm:$0xff]
    %v3481 = vld [vmem:[#allocation7 + $0x1e0] sm:$0xff]
    %v3482 = vld [vmem:[#allocation7 + $0x1e8] sm:$0xff]
    %v3483 = vld [vmem:[#allocation7 + $0x1f0] sm:$0xff]
    %v3484 = vld [vmem:[#allocation7 + $0x1f8] sm:$0xff]
    %v3485 = vld [vmem:[%s4] sm:$0x3]
    %v3487 = vlaneseq
    %v3488 = vshrl.u32 %v3487, 7
    %v3489 = vsub.s32 0, %v3488
    %v3490 = vrot.slane %v3485, %v3489
    %v3491 = vlaneseq
    %v3492 = vshrl.u32 %v3491, 7
    %v3493 = vsub.s32 1, %v3492
    %v3494 = vrot.slane %v3485, %v3493
    %v3561 = vunpack.c.l.b16 %v3421
    %v3562 = vunpack.c.h.b16 %v3421
    %v3563 = vunpack.c.l.b16 %v3422
    %v3564 = vunpack.c.h.b16 %v3422
    %v3565 = vunpack.c.l.b16 %v3423
    %v3566 = vunpack.c.h.b16 %v3423
    %v3567 = vunpack.c.l.b16 %v3424
    %v3568 = vunpack.c.h.b16 %v3424
    %v3569 = vunpack.c.l.b16 %v3425
    %v3570 = vunpack.c.h.b16 %v3425
    %v3571 = vunpack.c.l.b16 %v3426
    %v3572 = vunpack.c.h.b16 %v3426
    %v3573 = vunpack.c.l.b16 %v3427
    %v3574 = vunpack.c.h.b16 %v3427
    %v3575 = vunpack.c.l.b16 %v3428
    %v3576 = vunpack.c.h.b16 %v3428
    %v3577 = vunpack.c.l.b16 %v3429
    %v3578 = vunpack.c.h.b16 %v3429
    %v3579 = vunpack.c.l.b16 %v3430
    %v3580 = vunpack.c.h.b16 %v3430
    %v3581 = vunpack.c.l.b16 %v3431
    %v3582 = vunpack.c.h.b16 %v3431
    %v3583 = vunpack.c.l.b16 %v3432
    %v3584 = vunpack.c.h.b16 %v3432
    %v3585 = vunpack.c.l.b16 %v3433
    %v3586 = vunpack.c.h.b16 %v3433
    %v3587 = vunpack.c.l.b16 %v3434
    %v3588 = vunpack.c.h.b16 %v3434
    %v3589 = vunpack.c.l.b16 %v3435
    %v3590 = vunpack.c.h.b16 %v3435
    %v3591 = vunpack.c.l.b16 %v3436
    %v3592 = vunpack.c.h.b16 %v3436
    %v3593 = vunpack.c.l.b16 %v3437
    %v3594 = vunpack.c.h.b16 %v3437
    %v3595 = vunpack.c.l.b16 %v3438
    %v3596 = vunpack.c.h.b16 %v3438
    %v3597 = vunpack.c.l.b16 %v3439
    %v3598 = vunpack.c.h.b16 %v3439
    %v3599 = vunpack.c.l.b16 %v3440
    %v3600 = vunpack.c.h.b16 %v3440
    %v3601 = vunpack.c.l.b16 %v3441
    %v3602 = vunpack.c.h.b16 %v3441
    %v3603 = vunpack.c.l.b16 %v3442
    %v3604 = vunpack.c.h.b16 %v3442
    %v3605 = vunpack.c.l.b16 %v3443
    %v3606 = vunpack.c.h.b16 %v3443
    %v3607 = vunpack.c.l.b16 %v3444
    %v3608 = vunpack.c.h.b16 %v3444
    %v3609 = vunpack.c.l.b16 %v3445
    %v3610 = vunpack.c.h.b16 %v3445
    %v3611 = vunpack.c.l.b16 %v3446
    %v3612 = vunpack.c.h.b16 %v3446
    %v3613 = vunpack.c.l.b16 %v3447
    %v3614 = vunpack.c.h.b16 %v3447
    %v3615 = vunpack.c.l.b16 %v3448
    %v3616 = vunpack.c.h.b16 %v3448
    %v3617 = vunpack.c.l.b16 %v3449
    %v3618 = vunpack.c.h.b16 %v3449
    %v3619 = vunpack.c.l.b16 %v3450
    %v3620 = vunpack.c.h.b16 %v3450
    %v3621 = vunpack.c.l.b16 %v3451
    %v3622 = vunpack.c.h.b16 %v3451
    %v3623 = vunpack.c.l.b16 %v3452
    %v3624 = vunpack.c.h.b16 %v3452
    %v3625 = vunpack.c.l.b16 %v3453
    %v3626 = vunpack.c.h.b16 %v3453
    %v3627 = vunpack.c.l.b16 %v3454
    %v3628 = vunpack.c.h.b16 %v3454
    %v3629 = vunpack.c.l.b16 %v3455
    %v3630 = vunpack.c.h.b16 %v3455
    %v3631 = vunpack.c.l.b16 %v3456
    %v3632 = vunpack.c.h.b16 %v3456
    %v3633 = vunpack.c.l.b16 %v3457
    %v3634 = vunpack.c.h.b16 %v3457
    %v3635 = vunpack.c.l.b16 %v3458
    %v3636 = vunpack.c.h.b16 %v3458
    %v3637 = vunpack.c.l.b16 %v3459
    %v3638 = vunpack.c.h.b16 %v3459
    %v3639 = vunpack.c.l.b16 %v3460
    %v3640 = vunpack.c.h.b16 %v3460
    %v3641 = vunpack.c.l.b16 %v3461
    %v3642 = vunpack.c.h.b16 %v3461
    %v3643 = vunpack.c.l.b16 %v3462
    %v3644 = vunpack.c.h.b16 %v3462
    %v3645 = vunpack.c.l.b16 %v3463
    %v3646 = vunpack.c.h.b16 %v3463
    %v3647 = vunpack.c.l.b16 %v3464
    %v3648 = vunpack.c.h.b16 %v3464
    %v3649 = vunpack.c.l.b16 %v3465
    %v3650 = vunpack.c.h.b16 %v3465
    %v3651 = vunpack.c.l.b16 %v3466
    %v3652 = vunpack.c.h.b16 %v3466
    %v3653 = vunpack.c.l.b16 %v3467
    %v3654 = vunpack.c.h.b16 %v3467
    %v3655 = vunpack.c.l.b16 %v3468
    %v3656 = vunpack.c.h.b16 %v3468
    %v3657 = vunpack.c.l.b16 %v3469
    %v3658 = vunpack.c.h.b16 %v3469
    %v3659 = vunpack.c.l.b16 %v3470
    %v3660 = vunpack.c.h.b16 %v3470
    %v3661 = vunpack.c.l.b16 %v3471
    %v3662 = vunpack.c.h.b16 %v3471
    %v3663 = vunpack.c.l.b16 %v3472
    %v3664 = vunpack.c.h.b16 %v3472
    %v3665 = vunpack.c.l.b16 %v3473
    %v3666 = vunpack.c.h.b16 %v3473
    %v3667 = vunpack.c.l.b16 %v3474
    %v3668 = vunpack.c.h.b16 %v3474
    %v3669 = vunpack.c.l.b16 %v3475
    %v3670 = vunpack.c.h.b16 %v3475
    %v3671 = vunpack.c.l.b16 %v3476
    %v3672 = vunpack.c.h.b16 %v3476
    %v3673 = vunpack.c.l.b16 %v3477
    %v3674 = vunpack.c.h.b16 %v3477
    %v3675 = vunpack.c.l.b16 %v3478
    %v3676 = vunpack.c.h.b16 %v3478
    %v3677 = vunpack.c.l.b16 %v3479
    %v3678 = vunpack.c.h.b16 %v3479
    %v3679 = vunpack.c.l.b16 %v3480
    %v3680 = vunpack.c.h.b16 %v3480
    %v3681 = vunpack.c.l.b16 %v3481
    %v3682 = vunpack.c.h.b16 %v3481
    %v3683 = vunpack.c.l.b16 %v3482
    %v3684 = vunpack.c.h.b16 %v3482
    %v3685 = vunpack.c.l.b16 %v3483
    %v3686 = vunpack.c.h.b16 %v3483
    %v3687 = vunpack.c.l.b16 %v3484
    %v3688 = vunpack.c.h.b16 %v3484
    %v3689 = vpack.c.b16 %v3563, %v3561
    %v3690 = vpack.c.b16 %v3564, %v3562
    %v3691 = vpack.c.b16 %v3567, %v3565
    %v3692 = vpack.c.b16 %v3568, %v3566
    %v3693 = vpack.c.b16 %v3571, %v3569
    %v3694 = vpack.c.b16 %v3572, %v3570
    %v3695 = vpack.c.b16 %v3575, %v3573
    %v3696 = vpack.c.b16 %v3576, %v3574
    %v3697 = vpack.c.b16 %v3579, %v3577
    %v3698 = vpack.c.b16 %v3580, %v3578
    %v3699 = vpack.c.b16 %v3583, %v3581
    %v3700 = vpack.c.b16 %v3584, %v3582
    %v3701 = vpack.c.b16 %v3587, %v3585
    %v3702 = vpack.c.b16 %v3588, %v3586
    %v3703 = vpack.c.b16 %v3591, %v3589
    %v3704 = vpack.c.b16 %v3592, %v3590
    %v3705 = vpack.c.b16 %v3595, %v3593
    %v3706 = vpack.c.b16 %v3596, %v3594
    %v3707 = vpack.c.b16 %v3599, %v3597
    %v3708 = vpack.c.b16 %v3600, %v3598
    %v3709 = vpack.c.b16 %v3603, %v3601
    %v3710 = vpack.c.b16 %v3604, %v3602
    %v3711 = vpack.c.b16 %v3607, %v3605
    %v3712 = vpack.c.b16 %v3608, %v3606
    %v3713 = vpack.c.b16 %v3611, %v3609
    %v3714 = vpack.c.b16 %v3612, %v3610
    %v3715 = vpack.c.b16 %v3615, %v3613
    %v3716 = vpack.c.b16 %v3616, %v3614
    %v3717 = vpack.c.b16 %v3619, %v3617
    %v3718 = vpack.c.b16 %v3620, %v3618
    %v3719 = vpack.c.b16 %v3623, %v3621
    %v3720 = vpack.c.b16 %v3624, %v3622
    %v3721 = vpack.c.b16 %v3627, %v3625
    %v3722 = vpack.c.b16 %v3628, %v3626
    %v3723 = vpack.c.b16 %v3631, %v3629
    %v3724 = vpack.c.b16 %v3632, %v3630
    %v3725 = vpack.c.b16 %v3635, %v3633
    %v3726 = vpack.c.b16 %v3636, %v3634
    %v3727 = vpack.c.b16 %v3639, %v3637
    %v3728 = vpack.c.b16 %v3640, %v3638
    %v3729 = vpack.c.b16 %v3643, %v3641
    %v3730 = vpack.c.b16 %v3644, %v3642
    %v3731 = vpack.c.b16 %v3647, %v3645
    %v3732 = vpack.c.b16 %v3648, %v3646
    %v3733 = vpack.c.b16 %v3651, %v3649
    %v3734 = vpack.c.b16 %v3652, %v3650
    %v3735 = vpack.c.b16 %v3655, %v3653
    %v3736 = vpack.c.b16 %v3656, %v3654
    %v3737 = vpack.c.b16 %v3659, %v3657
    %v3738 = vpack.c.b16 %v3660, %v3658
    %v3739 = vpack.c.b16 %v3663, %v3661
    %v3740 = vpack.c.b16 %v3664, %v3662
    %v3741 = vpack.c.b16 %v3667, %v3665
    %v3742 = vpack.c.b16 %v3668, %v3666
    %v3743 = vpack.c.b16 %v3671, %v3669
    %v3744 = vpack.c.b16 %v3672, %v3670
    %v3745 = vpack.c.b16 %v3675, %v3673
    %v3746 = vpack.c.b16 %v3676, %v3674
    %v3747 = vpack.c.b16 %v3679, %v3677
    %v3748 = vpack.c.b16 %v3680, %v3678
    %v3749 = vpack.c.b16 %v3683, %v3681
    %v3750 = vpack.c.b16 %v3684, %v3682
    %v3751 = vpack.c.b16 %v3687, %v3685
    %v3752 = vpack.c.b16 %v3688, %v3686
    %3817 = vmatprep.subr.bf16.mxu0 %v3690
    %3818 = vmatpush1.bf16.msra.mxu0 %v3689
    %3819 = vmatprep.subr.bf16.mxu0 %v3692
    %3820 = vmatpush1.bf16.msra.mxu0 %v3691
    %3821 = vmatprep.subr.bf16.mxu0 %v3694
    %3822 = vmatpush1.bf16.msra.mxu0 %v3693
    %3823 = vmatprep.subr.bf16.mxu0 %v3696
    %3824 = vmatpush1.bf16.msra.mxu0 %v3695
    %3825 = vmatprep.subr.bf16.mxu0 %v3698
    %3826 = vmatpush1.bf16.msra.mxu0 %v3697
    %3827 = vmatprep.subr.bf16.mxu0 %v3700
    %3828 = vmatpush1.bf16.msra.mxu0 %v3699
    %3829 = vmatprep.subr.bf16.mxu0 %v3702
    %3830 = vmatpush1.bf16.msra.mxu0 %v3701
    %3831 = vmatprep.subr.bf16.mxu0 %v3704
    %3832 = vmatpush1.bf16.msra.mxu0 %v3703
    %3833 = vmatprep.subr.bf16.mxu0 %v3706
    %3834 = vmatpush1.bf16.msra.mxu0 %v3705
    %3835 = vmatprep.subr.bf16.mxu0 %v3708
    %3836 = vmatpush1.bf16.msra.mxu0 %v3707
    %3837 = vmatprep.subr.bf16.mxu0 %v3710
    %3838 = vmatpush1.bf16.msra.mxu0 %v3709
    %3839 = vmatprep.subr.bf16.mxu0 %v3712
    %3840 = vmatpush1.bf16.msra.mxu0 %v3711
    %3841 = vmatprep.subr.bf16.mxu0 %v3714
    %3842 = vmatpush1.bf16.msra.mxu0 %v3713
    %3843 = vmatprep.subr.bf16.mxu0 %v3716
    %3844 = vmatpush1.bf16.msra.mxu0 %v3715
    %3845 = vmatprep.subr.bf16.mxu0 %v3718
    %3846 = vmatpush1.bf16.msra.mxu0 %v3717
    %3847 = vmatprep.subr.bf16.mxu0 %v3720
    %3848 = vmatpush1.bf16.msra.mxu0 %v3719
    %3849 = vmatprep.mubr.bf16.mxu0 %v3358
    %3850 = vmatmul.mubr.bf16.gmra.mrb[0].mxu0 %v3357
    %v3851 = vpop.f32.mrb[0].mxu0
    %v3852 = vadd.f32 %v3490, %v3851
    %v3853 = vpop.f32.mrb[0].mxu0
    %v3854 = vadd.f32 %v3494, %v3853
    %v3855 = vpop.f32.mrb[0].mxu0
    %v3856 = vadd.f32 %v3490, %v3855
    %v3857 = vpop.f32.mrb[0].mxu0
    %v3858 = vadd.f32 %v3494, %v3857
    %3859 = vmatprep.mubr.bf16.mxu0 %v3362
    %3860 = vmatmul.mubr.bf16.gmra.mrb[0].mxu0 %v3361
    %v3861 = vpop.f32.mrb[0].mxu0
    %v3862 = vadd.f32 %v3490, %v3861
    %v3863 = vpop.f32.mrb[0].mxu0
    %v3864 = vadd.f32 %v3494, %v3863
    %v3865 = vpop.f32.mrb[0].mxu0
    %v3866 = vadd.f32 %v3490, %v3865
    %v3867 = vpop.f32.mrb[0].mxu0
    %v3868 = vadd.f32 %v3494, %v3867
    %3869 = vmatprep.mubr.bf16.mxu0 %v3366
    %3870 = vmatmul.mubr.bf16.gmra.mrb[0].mxu0 %v3365
    %v3871 = vpop.f32.mrb[0].mxu0
    %v3872 = vadd.f32 %v3490, %v3871
    %v3873 = vpop.f32.mrb[0].mxu0
    %v3874 = vadd.f32 %v3494, %v3873
    %v3875 = vpop.f32.mrb[0].mxu0
    %v3876 = vadd.f32 %v3490, %v3875
    %v3877 = vpop.f32.mrb[0].mxu0
    %v3878 = vadd.f32 %v3494, %v3877
    %3879 = vmatprep.mubr.bf16.mxu0 %v3370
    %3880 = vmatmul.mubr.bf16.gmra.mrb[0].mxu0 %v3369
    %v3881 = vpop.f32.mrb[0].mxu0
    %v3882 = vadd.f32 %v3490, %v3881
    %v3883 = vpop.f32.mrb[0].mxu0
    %v3884 = vadd.f32 %v3494, %v3883
    %v3885 = vpop.f32.mrb[0].mxu0
    %v3886 = vadd.f32 %v3490, %v3885
    %v3887 = vpop.f32.mrb[0].mxu0
    %v3888 = vadd.f32 %v3494, %v3887
    %3889 = vmatprep.mubr.bf16.mxu0 %v3374
    %3890 = vmatmul.mubr.bf16.gmra.mrb[0].mxu0 %v3373
    %v3891 = vpop.f32.mrb[0].mxu0
    %v3892 = vadd.f32 %v3490, %v3891
    %v3893 = vpop.f32.mrb[0].mxu0
    %v3894 = vadd.f32 %v3494, %v3893
    %v3895 = vpop.f32.mrb[0].mxu0
    %v3896 = vadd.f32 %v3490, %v3895
    %v3897 = vpop.f32.mrb[0].mxu0
    %v3898 = vadd.f32 %v3494, %v3897
    %3899 = vmatprep.mubr.bf16.mxu0 %v3378
    %3900 = vmatmul.mubr.bf16.gmra.mrb[0].mxu0 %v3377
    %v3901 = vpop.f32.mrb[0].mxu0
    %v3902 = vadd.f32 %v3490, %v3901
    %v3903 = vpop.f32.mrb[0].mxu0
    %v3904 = vadd.f32 %v3494, %v3903
    %v3905 = vpop.f32.mrb[0].mxu0
    %v3906 = vadd.f32 %v3490, %v3905
    %v3907 = vpop.f32.mrb[0].mxu0
    %v3908 = vadd.f32 %v3494, %v3907
    %3909 = vmatprep.mubr.bf16.mxu0 %v3382
    %3910 = vmatmul.mubr.bf16.gmra.mrb[0].mxu0 %v3381
    %v3911 = vpop.f32.mrb[0].mxu0
    %v3912 = vadd.f32 %v3490, %v3911
    %v3913 = vpop.f32.mrb[0].mxu0
    %v3914 = vadd.f32 %v3494, %v3913
    %v3915 = vpop.f32.mrb[0].mxu0
    %v3916 = vadd.f32 %v3490, %v3915
    %v3917 = vpop.f32.mrb[0].mxu0
    %v3918 = vadd.f32 %v3494, %v3917
    %3919 = vmatprep.mubr.bf16.mxu0 %v3386
    %3920 = vmatmul.mubr.bf16.gmra.mrb[0].mxu0 %v3385
    %v3921 = vpop.f32.mrb[0].mxu0
    %v3922 = vadd.f32 %v3490, %v3921
    %v3923 = vpop.f32.mrb[0].mxu0
    %v3924 = vadd.f32 %v3494, %v3923
    %v3925 = vpop.f32.mrb[0].mxu0
    %v3926 = vadd.f32 %v3490, %v3925
    %v3927 = vpop.f32.mrb[0].mxu0
    %v3928 = vadd.f32 %v3494, %v3927
    %3929 = vmatprep.mubr.bf16.mxu0 %v3390
    %3930 = vmatmul.mubr.bf16.gmra.mrb[0].mxu0 %v3389
    %v3931 = vpop.f32.mrb[0].mxu0
    %v3932 = vadd.f32 %v3490, %v3931
    %v3933 = vpop.f32.mrb[0].mxu0
    %v3934 = vadd.f32 %v3494, %v3933
    %v3935 = vpop.f32.mrb[0].mxu0
    %v3936 = vadd.f32 %v3490, %v3935
    %v3937 = vpop.f32.mrb[0].mxu0
    %v3938 = vadd.f32 %v3494, %v3937
    %3939 = vmatprep.mubr.bf16.mxu0 %v3394
    %3940 = vmatmul.mubr.bf16.gmra.mrb[0].mxu0 %v3393
    %v3941 = vpop.f32.mrb[0].mxu0
    %v3942 = vadd.f32 %v3490, %v3941
    %v3943 = vpop.f32.mrb[0].mxu0
    %v3944 = vadd.f32 %v3494, %v3943
    %v3945 = vpop.f32.mrb[0].mxu0
    %v3946 = vadd.f32 %v3490, %v3945
    %v3947 = vpop.f32.mrb[0].mxu0
    %v3948 = vadd.f32 %v3494, %v3947
    %3949 = vmatprep.mubr.bf16.mxu0 %v3398
    %3950 = vmatmul.mubr.bf16.gmra.mrb[0].mxu0 %v3397
    %v3951 = vpop.f32.mrb[0].mxu0
    %v3952 = vadd.f32 %v3490, %v3951
    %v3953 = vpop.f32.mrb[0].mxu0
    %v3954 = vadd.f32 %v3494, %v3953
    %v3955 = vpop.f32.mrb[0].mxu0
    %v3956 = vadd.f32 %v3490, %v3955
    %v3957 = vpop.f32.mrb[0].mxu0
    %v3958 = vadd.f32 %v3494, %v3957
    %3959 = vmatprep.mubr.bf16.mxu0 %v3402
    %3960 = vmatmul.mubr.bf16.gmra.mrb[0].mxu0 %v3401
    %v3961 = vpop.f32.mrb[0].mxu0
    %v3962 = vadd.f32 %v3490, %v3961
    %v3963 = vpop.f32.mrb[0].mxu0
    %v3964 = vadd.f32 %v3494, %v3963
    %v3965 = vpop.f32.mrb[0].mxu0
    %v3966 = vadd.f32 %v3490, %v3965
    %v3967 = vpop.f32.mrb[0].mxu0
    %v3968 = vadd.f32 %v3494, %v3967
    %3969 = vmatprep.mubr.bf16.mxu0 %v3406
    %3970 = vmatmul.mubr.bf16.gmra.mrb[0].mxu0 %v3405
    %v3971 = vpop.f32.mrb[0].mxu0
    %v3972 = vadd.f32 %v3490, %v3971
    %v3973 = vpop.f32.mrb[0].mxu0
    %v3974 = vadd.f32 %v3494, %v3973
    %v3975 = vpop.f32.mrb[0].mxu0
    %v3976 = vadd.f32 %v3490, %v3975
    %v3977 = vpop.f32.mrb[0].mxu0
    %v3978 = vadd.f32 %v3494, %v3977
    %3979 = vmatprep.mubr.bf16.mxu0 %v3410
    %3980 = vmatmul.mubr.bf16.gmra.mrb[0].mxu0 %v3409
    %v3981 = vpop.f32.mrb[0].mxu0
    %v3982 = vadd.f32 %v3490, %v3981
    %v3983 = vpop.f32.mrb[0].mxu0
    %v3984 = vadd.f32 %v3494, %v3983
    %v3985 = vpop.f32.mrb[0].mxu0
    %v3986 = vadd.f32 %v3490, %v3985
    %v3987 = vpop.f32.mrb[0].mxu0
    %v3988 = vadd.f32 %v3494, %v3987
    %3989 = vmatprep.mubr.bf16.mxu0 %v3414
    %3990 = vmatmul.mubr.bf16.gmra.mrb[0].mxu0 %v3413
    %v3991 = vpop.f32.mrb[0].mxu0
    %v3992 = vadd.f32 %v3490, %v3991
    %v3993 = vpop.f32.mrb[0].mxu0
    %v3994 = vadd.f32 %v3494, %v3993
    %v3995 = vpop.f32.mrb[0].mxu0
    %v3996 = vadd.f32 %v3490, %v3995
    %v3997 = vpop.f32.mrb[0].mxu0
    %v3998 = vadd.f32 %v3494, %v3997
    %3999 = vmatprep.mubr.bf16.mxu0 %v3418
    %4000 = vmatmul.mubr.bf16.gmra.mrb[0].mxu0 %v3417
    %v4001 = vpop.f32.mrb[0].mxu0
    %v4002 = vadd.f32 %v3490, %v4001
    %v4003 = vpop.f32.mrb[0].mxu0
    %v4004 = vadd.f32 %v3494, %v4003
    %v4005 = vpop.f32.mrb[0].mxu0
    %v4006 = vadd.f32 %v3490, %v4005
    %v4007 = vpop.f32.mrb[0].mxu0
    %v4008 = vadd.f32 %v3494, %v4007
    %4009 = vdwg.mxu0
    %4010 = vmatprep.subr.bf16.mxu0 %v3722
    %4011 = vmatpush1.bf16.msra.mxu0 %v3721
    %4012 = vmatprep.subr.bf16.mxu0 %v3724
    %4013 = vmatpush1.bf16.msra.mxu0 %v3723
    %4014 = vmatprep.subr.bf16.mxu0 %v3726
    %4015 = vmatpush1.bf16.msra.mxu0 %v3725
    %4016 = vmatprep.subr.bf16.mxu0 %v3728
    %4017 = vmatpush1.bf16.msra.mxu0 %v3727
    %4018 = vmatprep.subr.bf16.mxu0 %v3730
    %4019 = vmatpush1.bf16.msra.mxu0 %v3729
    %4020 = vmatprep.subr.bf16.mxu0 %v3732
    %4021 = vmatpush1.bf16.msra.mxu0 %v3731
    %4022 = vmatprep.subr.bf16.mxu0 %v3734
    %4023 = vmatpush1.bf16.msra.mxu0 %v3733
    %4024 = vmatprep.subr.bf16.mxu0 %v3736
    %4025 = vmatpush1.bf16.msra.mxu0 %v3735
    %4026 = vmatprep.subr.bf16.mxu0 %v3738
    %4027 = vmatpush1.bf16.msra.mxu0 %v3737
    %4028 = vmatprep.subr.bf16.mxu0 %v3740
    %4029 = vmatpush1.bf16.msra.mxu0 %v3739
    %4030 = vmatprep.subr.bf16.mxu0 %v3742
    %4031 = vmatpush1.bf16.msra.mxu0 %v3741
    %4032 = vmatprep.subr.bf16.mxu0 %v3744
    %4033 = vmatpush1.bf16.msra.mxu0 %v3743
    %4034 = vmatprep.subr.bf16.mxu0 %v3746
    %4035 = vmatpush1.bf16.msra.mxu0 %v3745
    %4036 = vmatprep.subr.bf16.mxu0 %v3748
    %4037 = vmatpush1.bf16.msra.mxu0 %v3747
    %4038 = vmatprep.subr.bf16.mxu0 %v3750
    %4039 = vmatpush1.bf16.msra.mxu0 %v3749
    %4040 = vmatprep.subr.bf16.mxu0 %v3752
    %4041 = vmatpush1.bf16.msra.mxu0 %v3751
    %4042 = vmatprep.mubr.bf16.mxu0 %v3360
    %4043 = vmatmul.mubr.bf16.gmra.mrb[0].mxu0 %v3359
    %v4044 = vpop.f32.mrb[0].mxu0
    %v4045 = vadd.f32 %v3852, %v4044
    %v4046 = vpop.f32.mrb[0].mxu0
    %v4047 = vadd.f32 %v3854, %v4046
    %v4048 = vpop.f32.mrb[0].mxu0
    %v4049 = vadd.f32 %v3856, %v4048
    %v4050 = vpop.f32.mrb[0].mxu0
    %v4051 = vadd.f32 %v3858, %v4050
    %4052 = vmatprep.mubr.bf16.mxu0 %v3364
    %4053 = vmatmul.mubr.bf16.gmra.mrb[0].mxu0 %v3363
    %v4054 = vpop.f32.mrb[0].mxu0
    %v4055 = vadd.f32 %v3862, %v4054
    %v4056 = vpop.f32.mrb[0].mxu0
    %v4057 = vadd.f32 %v3864, %v4056
    %v4058 = vpop.f32.mrb[0].mxu0
    %v4059 = vadd.f32 %v3866, %v4058
    %v4060 = vpop.f32.mrb[0].mxu0
    %v4061 = vadd.f32 %v3868, %v4060
    %4062 = vmatprep.mubr.bf16.mxu0 %v3368
    %4063 = vmatmul.mubr.bf16.gmra.mrb[0].mxu0 %v3367
    %v4064 = vpop.f32.mrb[0].mxu0
    %v4065 = vadd.f32 %v3872, %v4064
    %v4066 = vpop.f32.mrb[0].mxu0
    %v4067 = vadd.f32 %v3874, %v4066
    %v4068 = vpop.f32.mrb[0].mxu0
    %v4069 = vadd.f32 %v3876, %v4068
    %v4070 = vpop.f32.mrb[0].mxu0
    %v4071 = vadd.f32 %v3878, %v4070
    %4072 = vmatprep.mubr.bf16.mxu0 %v3372
    %4073 = vmatmul.mubr.bf16.gmra.mrb[0].mxu0 %v3371
    %v4074 = vpop.f32.mrb[0].mxu0
    %v4075 = vadd.f32 %v3882, %v4074
    %v4076 = vpop.f32.mrb[0].mxu0
    %v4077 = vadd.f32 %v3884, %v4076
    %v4078 = vpop.f32.mrb[0].mxu0
    %v4079 = vadd.f32 %v3886, %v4078
    %v4080 = vpop.f32.mrb[0].mxu0
    %v4081 = vadd.f32 %v3888, %v4080
    %4082 = vmatprep.mubr.bf16.mxu0 %v3376
    %4083 = vmatmul.mubr.bf16.gmra.mrb[0].mxu0 %v3375
    %v4084 = vpop.f32.mrb[0].mxu0
    %v4085 = vadd.f32 %v3892, %v4084
    %v4086 = vpop.f32.mrb[0].mxu0
    %v4087 = vadd.f32 %v3894, %v4086
    %v4088 = vpop.f32.mrb[0].mxu0
    %v4089 = vadd.f32 %v3896, %v4088
    %v4090 = vpop.f32.mrb[0].mxu0
    %v4091 = vadd.f32 %v3898, %v4090
    %4092 = vmatprep.mubr.bf16.mxu0 %v3380
    %4093 = vmatmul.mubr.bf16.gmra.mrb[0].mxu0 %v3379
    %v4094 = vpop.f32.mrb[0].mxu0
    %v4095 = vadd.f32 %v3902, %v4094
    %v4096 = vpop.f32.mrb[0].mxu0
    %v4097 = vadd.f32 %v3904, %v4096
    %v4098 = vpop.f32.mrb[0].mxu0
    %v4099 = vadd.f32 %v3906, %v4098
    %v4100 = vpop.f32.mrb[0].mxu0
    %v4101 = vadd.f32 %v3908, %v4100
    %4102 = vmatprep.mubr.bf16.mxu0 %v3384
    %4103 = vmatmul.mubr.bf16.gmra.mrb[0].mxu0 %v3383
    %v4104 = vpop.f32.mrb[0].mxu0
    %v4105 = vadd.f32 %v3912, %v4104
    %v4106 = vpop.f32.mrb[0].mxu0
    %v4107 = vadd.f32 %v3914, %v4106
    %v4108 = vpop.f32.mrb[0].mxu0
    %v4109 = vadd.f32 %v3916, %v4108
    %v4110 = vpop.f32.mrb[0].mxu0
    %v4111 = vadd.f32 %v3918, %v4110
    %4112 = vmatprep.mubr.bf16.mxu0 %v3388
    %4113 = vmatmul.mubr.bf16.gmra.mrb[0].mxu0 %v3387
    %v4114 = vpop.f32.mrb[0].mxu0
    %v4115 = vadd.f32 %v3922, %v4114
    %v4116 = vpop.f32.mrb[0].mxu0
    %v4117 = vadd.f32 %v3924, %v4116
    %v4118 = vpop.f32.mrb[0].mxu0
    %v4119 = vadd.f32 %v3926, %v4118
    %v4120 = vpop.f32.mrb[0].mxu0
    %v4121 = vadd.f32 %v3928, %v4120
    %4122 = vmatprep.mubr.bf16.mxu0 %v3392
    %4123 = vmatmul.mubr.bf16.gmra.mrb[0].mxu0 %v3391
    %v4124 = vpop.f32.mrb[0].mxu0
    %v4125 = vadd.f32 %v3932, %v4124
    %v4126 = vpop.f32.mrb[0].mxu0
    %v4127 = vadd.f32 %v3934, %v4126
    %v4128 = vpop.f32.mrb[0].mxu0
    %v4129 = vadd.f32 %v3936, %v4128
    %v4130 = vpop.f32.mrb[0].mxu0
    %v4131 = vadd.f32 %v3938, %v4130
    %4132 = vmatprep.mubr.bf16.mxu0 %v3396
    %4133 = vmatmul.mubr.bf16.gmra.mrb[0].mxu0 %v3395
    %v4134 = vpop.f32.mrb[0].mxu0
    %v4135 = vadd.f32 %v3942, %v4134
    %v4136 = vpop.f32.mrb[0].mxu0
    %v4137 = vadd.f32 %v3944, %v4136
    %v4138 = vpop.f32.mrb[0].mxu0
    %v4139 = vadd.f32 %v3946, %v4138
    %v4140 = vpop.f32.mrb[0].mxu0
    %v4141 = vadd.f32 %v3948, %v4140
    %4142 = vmatprep.mubr.bf16.mxu0 %v3400
    %4143 = vmatmul.mubr.bf16.gmra.mrb[0].mxu0 %v3399
    %v4144 = vpop.f32.mrb[0].mxu0
    %v4145 = vadd.f32 %v3952, %v4144
    %v4146 = vpop.f32.mrb[0].mxu0
    %v4147 = vadd.f32 %v3954, %v4146
    %v4148 = vpop.f32.mrb[0].mxu0
    %v4149 = vadd.f32 %v3956, %v4148
    %v4150 = vpop.f32.mrb[0].mxu0
    %v4151 = vadd.f32 %v3958, %v4150
    %4152 = vmatprep.mubr.bf16.mxu0 %v3404
    %4153 = vmatmul.mubr.bf16.gmra.mrb[0].mxu0 %v3403
    %v4154 = vpop.f32.mrb[0].mxu0
    %v4155 = vadd.f32 %v3962, %v4154
    %v4156 = vpop.f32.mrb[0].mxu0
    %v4157 = vadd.f32 %v3964, %v4156
    %v4158 = vpop.f32.mrb[0].mxu0
    %v4159 = vadd.f32 %v3966, %v4158
    %v4160 = vpop.f32.mrb[0].mxu0
    %v4161 = vadd.f32 %v3968, %v4160
    %4162 = vmatprep.mubr.bf16.mxu0 %v3408
    %4163 = vmatmul.mubr.bf16.gmra.mrb[0].mxu0 %v3407
    %v4164 = vpop.f32.mrb[0].mxu0
    %v4165 = vadd.f32 %v3972, %v4164
    %v4166 = vpop.f32.mrb[0].mxu0
    %v4167 = vadd.f32 %v3974, %v4166
    %v4168 = vpop.f32.mrb[0].mxu0
    %v4169 = vadd.f32 %v3976, %v4168
    %v4170 = vpop.f32.mrb[0].mxu0
    %v4171 = vadd.f32 %v3978, %v4170
    %4172 = vmatprep.mubr.bf16.mxu0 %v3412
    %4173 = vmatmul.mubr.bf16.gmra.mrb[0].mxu0 %v3411
    %v4174 = vpop.f32.mrb[0].mxu0
    %v4175 = vadd.f32 %v3982, %v4174
    %v4176 = vpop.f32.mrb[0].mxu0
    %v4177 = vadd.f32 %v3984, %v4176
    %v4178 = vpop.f32.mrb[0].mxu0
    %v4179 = vadd.f32 %v3986, %v4178
    %v4180 = vpop.f32.mrb[0].mxu0
    %v4181 = vadd.f32 %v3988, %v4180
    %4182 = vmatprep.mubr.bf16.mxu0 %v3416
    %4183 = vmatmul.mubr.bf16.gmra.mrb[0].mxu0 %v3415
    %v4184 = vpop.f32.mrb[0].mxu0
    %v4185 = vadd.f32 %v3992, %v4184
    %v4186 = vpop.f32.mrb[0].mxu0
    %v4187 = vadd.f32 %v3994, %v4186
    %v4188 = vpop.f32.mrb[0].mxu0
    %v4189 = vadd.f32 %v3996, %v4188
    %v4190 = vpop.f32.mrb[0].mxu0
    %v4191 = vadd.f32 %v3998, %v4190
    %4192 = vmatprep.mubr.bf16.mxu0 %v3420
    %4193 = vmatmul.mubr.bf16.gmra.mrb[0].mxu0 %v3419
    %v4194 = vpop.f32.mrb[0].mxu0
    %v4195 = vadd.f32 %v4002, %v4194
    %v4196 = vpop.f32.mrb[0].mxu0
    %v4197 = vadd.f32 %v4004, %v4196
    %v4198 = vpop.f32.mrb[0].mxu0
    %v4199 = vadd.f32 %v4006, %v4198
    %v4200 = vpop.f32.mrb[0].mxu0
    %v4201 = vadd.f32 %v4008, %v4200
    %4202 = vdwg.mxu0
    %v4203 = vmax.f32 %v4045, 0.0
    %v4204 = vmax.f32 %v4047, 0.0
    %v4205 = vmax.f32 %v4049, 0.0
    %v4206 = vmax.f32 %v4051, 0.0
    %v4207 = vmax.f32 %v4055, 0.0
    %v4208 = vmax.f32 %v4057, 0.0
    %v4209 = vmax.f32 %v4059, 0.0
    %v4210 = vmax.f32 %v4061, 0.0
    %v4211 = vmax.f32 %v4065, 0.0
    %v4212 = vmax.f32 %v4067, 0.0
    %v4213 = vmax.f32 %v4069, 0.0
    %v4214 = vmax.f32 %v4071, 0.0
    %v4215 = vmax.f32 %v4075, 0.0
    %v4216 = vmax.f32 %v4077, 0.0
    %v4217 = vmax.f32 %v4079, 0.0
    %v4218 = vmax.f32 %v4081, 0.0
    %v4219 = vmax.f32 %v4085, 0.0
    %v4220 = vmax.f32 %v4087, 0.0
    %v4221 = vmax.f32 %v4089, 0.0
    %v4222 = vmax.f32 %v4091, 0.0
    %v4223 = vmax.f32 %v4095, 0.0
    %v4224 = vmax.f32 %v4097, 0.0
    %v4225 = vmax.f32 %v4099, 0.0
    %v4226 = vmax.f32 %v4101, 0.0
    %v4227 = vmax.f32 %v4105, 0.0
    %v4228 = vmax.f32 %v4107, 0.0
    %v4229 = vmax.f32 %v4109, 0.0
    %v4230 = vmax.f32 %v4111, 0.0
    %v4231 = vmax.f32 %v4115, 0.0
    %v4232 = vmax.f32 %v4117, 0.0
    %v4233 = vmax.f32 %v4119, 0.0
    %v4234 = vmax.f32 %v4121, 0.0
    %v4235 = vmax.f32 %v4125, 0.0
    %v4236 = vmax.f32 %v4127, 0.0
    %v4237 = vmax.f32 %v4129, 0.0
    %v4238 = vmax.f32 %v4131, 0.0
    %v4239 = vmax.f32 %v4135, 0.0
    %v4240 = vmax.f32 %v4137, 0.0
    %v4241 = vmax.f32 %v4139, 0.0
    %v4242 = vmax.f32 %v4141, 0.0
    %v4243 = vmax.f32 %v4145, 0.0
    %v4244 = vmax.f32 %v4147, 0.0
    %v4245 = vmax.f32 %v4149, 0.0
    %v4246 = vmax.f32 %v4151, 0.0
    %v4247 = vmax.f32 %v4155, 0.0
    %v4248 = vmax.f32 %v4157, 0.0
    %v4249 = vmax.f32 %v4159, 0.0
    %v4250 = vmax.f32 %v4161, 0.0
    %v4251 = vmax.f32 %v4165, 0.0
    %v4252 = vmax.f32 %v4167, 0.0
    %v4253 = vmax.f32 %v4169, 0.0
    %v4254 = vmax.f32 %v4171, 0.0
    %v4255 = vmax.f32 %v4175, 0.0
    %v4256 = vmax.f32 %v4177, 0.0
    %v4257 = vmax.f32 %v4179, 0.0
    %v4258 = vmax.f32 %v4181, 0.0
    %v4259 = vmax.f32 %v4185, 0.0
    %v4260 = vmax.f32 %v4187, 0.0
    %v4261 = vmax.f32 %v4189, 0.0
    %v4262 = vmax.f32 %v4191, 0.0
    %v4263 = vmax.f32 %v4195, 0.0
    %v4264 = vmax.f32 %v4197, 0.0
    %v4265 = vmax.f32 %v4199, 0.0
    %v4266 = vmax.f32 %v4201, 0.0
    %v4267 = vpack.c.bf16 %v4205, %v4203
    %v4268 = vpack.c.bf16 %v4206, %v4204
    %v4269 = vpack.c.bf16 %v4209, %v4207
    %v4270 = vpack.c.bf16 %v4210, %v4208
    %v4271 = vpack.c.bf16 %v4213, %v4211
    %v4272 = vpack.c.bf16 %v4214, %v4212
    %v4273 = vpack.c.bf16 %v4217, %v4215
    %v4274 = vpack.c.bf16 %v4218, %v4216
    %v4275 = vpack.c.bf16 %v4221, %v4219
    %v4276 = vpack.c.bf16 %v4222, %v4220
    %v4277 = vpack.c.bf16 %v4225, %v4223
    %v4278 = vpack.c.bf16 %v4226, %v4224
    %v4279 = vpack.c.bf16 %v4229, %v4227
    %v4280 = vpack.c.bf16 %v4230, %v4228
    %v4281 = vpack.c.bf16 %v4233, %v4231
    %v4282 = vpack.c.bf16 %v4234, %v4232
    %v4283 = vpack.c.bf16 %v4237, %v4235
    %v4284 = vpack.c.bf16 %v4238, %v4236
    %v4285 = vpack.c.bf16 %v4241, %v4239
    %v4286 = vpack.c.bf16 %v4242, %v4240
    %v4287 = vpack.c.bf16 %v4245, %v4243
    %v4288 = vpack.c.bf16 %v4246, %v4244
    %v4289 = vpack.c.bf16 %v4249, %v4247
    %v4290 = vpack.c.bf16 %v4250, %v4248
    %v4291 = vpack.c.bf16 %v4253, %v4251
    %v4292 = vpack.c.bf16 %v4254, %v4252
    %v4293 = vpack.c.bf16 %v4257, %v4255
    %v4294 = vpack.c.bf16 %v4258, %v4256
    %v4295 = vpack.c.bf16 %v4261, %v4259
    %v4296 = vpack.c.bf16 %v4262, %v4260
    %v4297 = vpack.c.bf16 %v4265, %v4263
    %v4298 = vpack.c.bf16 %v4266, %v4264
    %v4299 = vld [vmem:[#allocation8] sm:$0xf]
    %v4300 = vld [vmem:[#allocation8 + $0x4] sm:$0xf]
    %v4301 = vld [vmem:[#allocation8 + $0x8] sm:$0xf]
    %v4302 = vld [vmem:[#allocation8 + $0xc] sm:$0xf]
    %v4303 = vld [vmem:[#allocation8 + $0x10] sm:$0xf]
    %v4304 = vld [vmem:[#allocation8 + $0x14] sm:$0xf]
    %v4305 = vld [vmem:[#allocation8 + $0x18] sm:$0xf]
    %v4306 = vld [vmem:[#allocation8 + $0x1c] sm:$0xf]
    %v4307 = vld [vmem:[#allocation8 + $0x20] sm:$0xf]
    %v4308 = vld [vmem:[#allocation8 + $0x24] sm:$0xf]
    %v4309 = vld [vmem:[#allocation8 + $0x28] sm:$0xf]
    %v4310 = vld [vmem:[#allocation8 + $0x2c] sm:$0xf]
    %v4311 = vld [vmem:[#allocation8 + $0x30] sm:$0xf]
    %v4312 = vld [vmem:[#allocation8 + $0x34] sm:$0xf]
    %v4313 = vld [vmem:[#allocation8 + $0x38] sm:$0xf]
    %v4314 = vld [vmem:[#allocation8 + $0x3c] sm:$0xf]
    %v4315 = vld [vmem:[#allocation8 + $0x40] sm:$0xf]
    %v4316 = vld [vmem:[#allocation8 + $0x44] sm:$0xf]
    %v4317 = vld [vmem:[#allocation8 + $0x48] sm:$0xf]
    %v4318 = vld [vmem:[#allocation8 + $0x4c] sm:$0xf]
    %v4319 = vld [vmem:[#allocation8 + $0x50] sm:$0xf]
    %v4320 = vld [vmem:[#allocation8 + $0x54] sm:$0xf]
    %v4321 = vld [vmem:[#allocation8 + $0x58] sm:$0xf]
    %v4322 = vld [vmem:[#allocation8 + $0x5c] sm:$0xf]
    %v4323 = vld [vmem:[#allocation8 + $0x60] sm:$0xf]
    %v4324 = vld [vmem:[#allocation8 + $0x64] sm:$0xf]
    %v4325 = vld [vmem:[#allocation8 + $0x68] sm:$0xf]
    %v4326 = vld [vmem:[#allocation8 + $0x6c] sm:$0xf]
    %v4327 = vld [vmem:[#allocation8 + $0x70] sm:$0xf]
    %v4328 = vld [vmem:[#allocation8 + $0x74] sm:$0xf]
    %v4329 = vld [vmem:[#allocation8 + $0x78] sm:$0xf]
    %v4330 = vld [vmem:[#allocation8 + $0x7c] sm:$0xf]
    %v4331 = vld [vmem:[%s6] sm:$0x1]
    %v4333 = vlaneseq
    %v4334 = vshrl.u32 %v4333, 7
    %v4335 = vsub.s32 0, %v4334
    %v4336 = vrot.slane %v4331, %v4335
    %v4370 = vunpack.c.l.b16 %v4299
    %v4371 = vunpack.c.l.b16 %v4300
    %v4372 = vunpack.c.l.b16 %v4301
    %v4373 = vunpack.c.l.b16 %v4302
    %v4374 = vunpack.c.l.b16 %v4303
    %v4375 = vunpack.c.l.b16 %v4304
    %v4376 = vunpack.c.l.b16 %v4305
    %v4377 = vunpack.c.l.b16 %v4306
    %v4378 = vunpack.c.l.b16 %v4307
    %v4379 = vunpack.c.l.b16 %v4308
    %v4380 = vunpack.c.l.b16 %v4309
    %v4381 = vunpack.c.l.b16 %v4310
    %v4382 = vunpack.c.l.b16 %v4311
    %v4383 = vunpack.c.l.b16 %v4312
    %v4384 = vunpack.c.l.b16 %v4313
    %v4385 = vunpack.c.l.b16 %v4314
    %v4386 = vunpack.c.l.b16 %v4315
    %v4387 = vunpack.c.l.b16 %v4316
    %v4388 = vunpack.c.l.b16 %v4317
    %v4389 = vunpack.c.l.b16 %v4318
    %v4390 = vunpack.c.l.b16 %v4319
    %v4391 = vunpack.c.l.b16 %v4320
    %v4392 = vunpack.c.l.b16 %v4321
    %v4393 = vunpack.c.l.b16 %v4322
    %v4394 = vunpack.c.l.b16 %v4323
    %v4395 = vunpack.c.l.b16 %v4324
    %v4396 = vunpack.c.l.b16 %v4325
    %v4397 = vunpack.c.l.b16 %v4326
    %v4398 = vunpack.c.l.b16 %v4327
    %v4399 = vunpack.c.l.b16 %v4328
    %v4400 = vunpack.c.l.b16 %v4329
    %v4401 = vunpack.c.l.b16 %v4330
    %v4402 = vpack.c.b16 %v4371, %v4370
    %v4403 = vpack.c.b16 %v4373, %v4372
    %v4404 = vpack.c.b16 %v4375, %v4374
    %v4405 = vpack.c.b16 %v4377, %v4376
    %v4406 = vpack.c.b16 %v4379, %v4378
    %v4407 = vpack.c.b16 %v4381, %v4380
    %v4408 = vpack.c.b16 %v4383, %v4382
    %v4409 = vpack.c.b16 %v4385, %v4384
    %v4410 = vpack.c.b16 %v4387, %v4386
    %v4411 = vpack.c.b16 %v4389, %v4388
    %v4412 = vpack.c.b16 %v4391, %v4390
    %v4413 = vpack.c.b16 %v4393, %v4392
    %v4414 = vpack.c.b16 %v4395, %v4394
    %v4415 = vpack.c.b16 %v4397, %v4396
    %v4416 = vpack.c.b16 %v4399, %v4398
    %v4417 = vpack.c.b16 %v4401, %v4400
    %4434 = vmatprep.subr.bf16.mxu0 0
    %4435 = vmatpush1.bf16.msra.mxu0 %v4402
    %4436 = vmatprep.subr.bf16.mxu0 0
    %4437 = vmatpush1.bf16.msra.mxu0 %v4403
    %4438 = vmatprep.subr.bf16.mxu0 0
    %4439 = vmatpush1.bf16.msra.mxu0 %v4404
    %4440 = vmatprep.subr.bf16.mxu0 0
    %4441 = vmatpush1.bf16.msra.mxu0 %v4405
    %4442 = vmatprep.subr.bf16.mxu0 0
    %4443 = vmatpush1.bf16.msra.mxu0 %v4406
    %4444 = vmatprep.subr.bf16.mxu0 0
    %4445 = vmatpush1.bf16.msra.mxu0 %v4407
    %4446 = vmatprep.subr.bf16.mxu0 0
    %4447 = vmatpush1.bf16.msra.mxu0 %v4408
    %4448 = vmatprep.subr.bf16.mxu0 0
    %4449 = vmatpush1.bf16.msra.mxu0 %v4409
    %4450 = vmatprep.subr.bf16.mxu0 0
    %4451 = vmatpush1.bf16.msra.mxu0 %v4410
    %4452 = vmatprep.subr.bf16.mxu0 0
    %4453 = vmatpush1.bf16.msra.mxu0 %v4411
    %4454 = vmatprep.subr.bf16.mxu0 0
    %4455 = vmatpush1.bf16.msra.mxu0 %v4412
    %4456 = vmatprep.subr.bf16.mxu0 0
    %4457 = vmatpush1.bf16.msra.mxu0 %v4413
    %4458 = vmatprep.subr.bf16.mxu0 0
    %4459 = vmatpush1.bf16.msra.mxu0 %v4414
    %4460 = vmatprep.subr.bf16.mxu0 0
    %4461 = vmatpush1.bf16.msra.mxu0 %v4415
    %4462 = vmatprep.subr.bf16.mxu0 0
    %4463 = vmatpush1.bf16.msra.mxu0 %v4416
    %4464 = vmatprep.subr.bf16.mxu0 0
    %4465 = vmatpush1.bf16.msra.mxu0 %v4417
    %4466 = vmatprep.mubr.bf16.mxu0 %v4268
    %4467 = vmatmul.mubr.bf16.gmra.mrb[0].mxu0 %v4267
    %v4468 = vpop.f32.mrb[0].mxu0
    %v4469 = vadd.f32 %v4336, %v4468
    %v4470 = vpop.f32.mrb[0].mxu0
    %v4471 = vpop.f32.mrb[0].mxu0
    %v4472 = vadd.f32 %v4336, %v4471
    %v4473 = vpop.f32.mrb[0].mxu0
    %4474 = vmatprep.mubr.bf16.mxu0 %v4270
    %4475 = vmatmul.mubr.bf16.gmra.mrb[0].mxu0 %v4269
    %v4476 = vpop.f32.mrb[0].mxu0
    %v4477 = vadd.f32 %v4336, %v4476
    %v4478 = vpop.f32.mrb[0].mxu0
    %v4479 = vpop.f32.mrb[0].mxu0
    %v4480 = vadd.f32 %v4336, %v4479
    %v4481 = vpop.f32.mrb[0].mxu0
    %4482 = vmatprep.mubr.bf16.mxu0 %v4272
    %4483 = vmatmul.mubr.bf16.gmra.mrb[0].mxu0 %v4271
    %v4484 = vpop.f32.mrb[0].mxu0
    %v4485 = vadd.f32 %v4336, %v4484
    %v4486 = vpop.f32.mrb[0].mxu0
    %v4487 = vpop.f32.mrb[0].mxu0
    %v4488 = vadd.f32 %v4336, %v4487
    %v4489 = vpop.f32.mrb[0].mxu0
    %4490 = vmatprep.mubr.bf16.mxu0 %v4274
    %4491 = vmatmul.mubr.bf16.gmra.mrb[0].mxu0 %v4273
    %v4492 = vpop.f32.mrb[0].mxu0
    %v4493 = vadd.f32 %v4336, %v4492
    %v4494 = vpop.f32.mrb[0].mxu0
    %v4495 = vpop.f32.mrb[0].mxu0
    %v4496 = vadd.f32 %v4336, %v4495
    %v4497 = vpop.f32.mrb[0].mxu0
    %4498 = vmatprep.mubr.bf16.mxu0 %v4276
    %4499 = vmatmul.mubr.bf16.gmra.mrb[0].mxu0 %v4275
    %v4500 = vpop.f32.mrb[0].mxu0
    %v4501 = vadd.f32 %v4336, %v4500
    %v4502 = vpop.f32.mrb[0].mxu0
    %v4503 = vpop.f32.mrb[0].mxu0
    %v4504 = vadd.f32 %v4336, %v4503
    %v4505 = vpop.f32.mrb[0].mxu0
    %4506 = vmatprep.mubr.bf16.mxu0 %v4278
    %4507 = vmatmul.mubr.bf16.gmra.mrb[0].mxu0 %v4277
    %v4508 = vpop.f32.mrb[0].mxu0
    %v4509 = vadd.f32 %v4336, %v4508
    %v4510 = vpop.f32.mrb[0].mxu0
    %v4511 = vpop.f32.mrb[0].mxu0
    %v4512 = vadd.f32 %v4336, %v4511
    %v4513 = vpop.f32.mrb[0].mxu0
    %4514 = vmatprep.mubr.bf16.mxu0 %v4280
    %4515 = vmatmul.mubr.bf16.gmra.mrb[0].mxu0 %v4279
    %v4516 = vpop.f32.mrb[0].mxu0
    %v4517 = vadd.f32 %v4336, %v4516
    %v4518 = vpop.f32.mrb[0].mxu0
    %v4519 = vpop.f32.mrb[0].mxu0
    %v4520 = vadd.f32 %v4336, %v4519
    %v4521 = vpop.f32.mrb[0].mxu0
    %4522 = vmatprep.mubr.bf16.mxu0 %v4282
    %4523 = vmatmul.mubr.bf16.gmra.mrb[0].mxu0 %v4281
    %v4524 = vpop.f32.mrb[0].mxu0
    %v4525 = vadd.f32 %v4336, %v4524
    %v4526 = vpop.f32.mrb[0].mxu0
    %v4527 = vpop.f32.mrb[0].mxu0
    %v4528 = vadd.f32 %v4336, %v4527
    %v4529 = vpop.f32.mrb[0].mxu0
    %4530 = vmatprep.mubr.bf16.mxu0 %v4284
    %4531 = vmatmul.mubr.bf16.gmra.mrb[0].mxu0 %v4283
    %v4532 = vpop.f32.mrb[0].mxu0
    %v4533 = vadd.f32 %v4336, %v4532
    %v4534 = vpop.f32.mrb[0].mxu0
    %v4535 = vpop.f32.mrb[0].mxu0
    %v4536 = vadd.f32 %v4336, %v4535
    %v4537 = vpop.f32.mrb[0].mxu0
    %4538 = vmatprep.mubr.bf16.mxu0 %v4286
    %4539 = vmatmul.mubr.bf16.gmra.mrb[0].mxu0 %v4285
    %v4540 = vpop.f32.mrb[0].mxu0
    %v4541 = vadd.f32 %v4336, %v4540
    %v4542 = vpop.f32.mrb[0].mxu0
    %v4543 = vpop.f32.mrb[0].mxu0
    %v4544 = vadd.f32 %v4336, %v4543
    %v4545 = vpop.f32.mrb[0].mxu0
    %4546 = vmatprep.mubr.bf16.mxu0 %v4288
    %4547 = vmatmul.mubr.bf16.gmra.mrb[0].mxu0 %v4287
    %v4548 = vpop.f32.mrb[0].mxu0
    %v4549 = vadd.f32 %v4336, %v4548
    %v4550 = vpop.f32.mrb[0].mxu0
    %v4551 = vpop.f32.mrb[0].mxu0
    %v4552 = vadd.f32 %v4336, %v4551
    %v4553 = vpop.f32.mrb[0].mxu0
    %4554 = vmatprep.mubr.bf16.mxu0 %v4290
    %4555 = vmatmul.mubr.bf16.gmra.mrb[0].mxu0 %v4289
    %v4556 = vpop.f32.mrb[0].mxu0
    %v4557 = vadd.f32 %v4336, %v4556
    %v4558 = vpop.f32.mrb[0].mxu0
    %v4559 = vpop.f32.mrb[0].mxu0
    %v4560 = vadd.f32 %v4336, %v4559
    %v4561 = vpop.f32.mrb[0].mxu0
    %4562 = vmatprep.mubr.bf16.mxu0 %v4292
    %4563 = vmatmul.mubr.bf16.gmra.mrb[0].mxu0 %v4291
    %v4564 = vpop.f32.mrb[0].mxu0
    %v4565 = vadd.f32 %v4336, %v4564
    %v4566 = vpop.f32.mrb[0].mxu0
    %v4567 = vpop.f32.mrb[0].mxu0
    %v4568 = vadd.f32 %v4336, %v4567
    %v4569 = vpop.f32.mrb[0].mxu0
    %4570 = vmatprep.mubr.bf16.mxu0 %v4294
    %4571 = vmatmul.mubr.bf16.gmra.mrb[0].mxu0 %v4293
    %v4572 = vpop.f32.mrb[0].mxu0
    %v4573 = vadd.f32 %v4336, %v4572
    %v4574 = vpop.f32.mrb[0].mxu0
    %v4575 = vpop.f32.mrb[0].mxu0
    %v4576 = vadd.f32 %v4336, %v4575
    %v4577 = vpop.f32.mrb[0].mxu0
    %4578 = vmatprep.mubr.bf16.mxu0 %v4296
    %4579 = vmatmul.mubr.bf16.gmra.mrb[0].mxu0 %v4295
    %v4580 = vpop.f32.mrb[0].mxu0
    %v4581 = vadd.f32 %v4336, %v4580
    %v4582 = vpop.f32.mrb[0].mxu0
    %v4583 = vpop.f32.mrb[0].mxu0
    %v4584 = vadd.f32 %v4336, %v4583
    %v4585 = vpop.f32.mrb[0].mxu0
    %4586 = vmatprep.mubr.bf16.mxu0 %v4298
    %4587 = vmatmul.mubr.bf16.gmra.mrb[0].mxu0 %v4297
    %v4588 = vpop.f32.mrb[0].mxu0
    %v4589 = vadd.f32 %v4336, %v4588
    %v4590 = vpop.f32.mrb[0].mxu0
    %v4591 = vpop.f32.mrb[0].mxu0
    %v4592 = vadd.f32 %v4336, %v4591
    %v4593 = vpop.f32.mrb[0].mxu0
    %4594 = vdwg.mxu0
    %v4595 = vmax.f32 %v4469, 0.0
    %v4596 = vmax.f32 %v4472, 0.0
    %v4597 = vmax.f32 %v4477, 0.0
    %v4598 = vmax.f32 %v4480, 0.0
    %v4599 = vmax.f32 %v4485, 0.0
    %v4600 = vmax.f32 %v4488, 0.0
    %v4601 = vmax.f32 %v4493, 0.0
    %v4602 = vmax.f32 %v4496, 0.0
    %v4603 = vmax.f32 %v4501, 0.0
    %v4604 = vmax.f32 %v4504, 0.0
    %v4605 = vmax.f32 %v4509, 0.0
    %v4606 = vmax.f32 %v4512, 0.0
    %v4607 = vmax.f32 %v4517, 0.0
    %v4608 = vmax.f32 %v4520, 0.0
    %v4609 = vmax.f32 %v4525, 0.0
    %v4610 = vmax.f32 %v4528, 0.0
    %v4611 = vmax.f32 %v4533, 0.0
    %v4612 = vmax.f32 %v4536, 0.0
    %v4613 = vmax.f32 %v4541, 0.0
    %v4614 = vmax.f32 %v4544, 0.0
    %v4615 = vmax.f32 %v4549, 0.0
    %v4616 = vmax.f32 %v4552, 0.0
    %v4617 = vmax.f32 %v4557, 0.0
    %v4618 = vmax.f32 %v4560, 0.0
    %v4619 = vmax.f32 %v4565, 0.0
    %v4620 = vmax.f32 %v4568, 0.0
    %v4621 = vmax.f32 %v4573, 0.0
    %v4622 = vmax.f32 %v4576, 0.0
    %v4623 = vmax.f32 %v4581, 0.0
    %v4624 = vmax.f32 %v4584, 0.0
    %v4625 = vmax.f32 %v4589, 0.0
    %v4626 = vmax.f32 %v4592, 0.0
    %v4627 = vpack.c.bf16 %v4596, %v4595
    %v4628 = vpack.c.bf16 %v4598, %v4597
    %v4629 = vpack.c.bf16 %v4600, %v4599
    %v4630 = vpack.c.bf16 %v4602, %v4601
    %v4631 = vpack.c.bf16 %v4604, %v4603
    %v4632 = vpack.c.bf16 %v4606, %v4605
    %v4633 = vpack.c.bf16 %v4608, %v4607
    %v4634 = vpack.c.bf16 %v4610, %v4609
    %v4635 = vpack.c.bf16 %v4612, %v4611
    %v4636 = vpack.c.bf16 %v4614, %v4613
    %v4637 = vpack.c.bf16 %v4616, %v4615
    %v4638 = vpack.c.bf16 %v4618, %v4617
    %v4639 = vpack.c.bf16 %v4620, %v4619
    %v4640 = vpack.c.bf16 %v4622, %v4621
    %v4641 = vpack.c.bf16 %v4624, %v4623
    %v4642 = vpack.c.bf16 %v4626, %v4625
    %v4643 = vld [vmem:[#allocation10] sm:$0xf]
    %v4644 = vld [vmem:[#allocation10 + $0x4] sm:$0xf]
    %v4645 = vld [vmem:[#allocation10 + $0x8] sm:$0xf]
    %v4646 = vld [vmem:[#allocation10 + $0xc] sm:$0xf]
    %v4647 = vld [vmem:[#allocation10 + $0x10] sm:$0xf]
    %v4648 = vld [vmem:[#allocation10 + $0x14] sm:$0xf]
    %v4649 = vld [vmem:[#allocation10 + $0x18] sm:$0xf]
    %v4650 = vld [vmem:[#allocation10 + $0x1c] sm:$0xf]
    %v4651 = vld [vmem:[#allocation10 + $0x20] sm:$0xf]
    %v4652 = vld [vmem:[#allocation10 + $0x24] sm:$0xf]
    %v4653 = vld [vmem:[#allocation10 + $0x28] sm:$0xf]
    %v4654 = vld [vmem:[#allocation10 + $0x2c] sm:$0xf]
    %v4655 = vld [vmem:[#allocation10 + $0x30] sm:$0xf]
    %v4656 = vld [vmem:[#allocation10 + $0x34] sm:$0xf]
    %v4657 = vld [vmem:[#allocation10 + $0x38] sm:$0xf]
    %v4658 = vld [vmem:[#allocation10 + $0x3c] sm:$0xf]
    %v4659 = vld [vmem:[%s8] sm:$0x1]
    %v4661 = vlaneseq
    %v4662 = vshrl.u32 %v4661, 7
    %v4663 = vsub.s32 0, %v4662
    %v4664 = vrot.slane %v4659, %v4663
    %v4682 = vunpack.c.l.b16 %v4643
    %v4683 = vunpack.c.l.b16 %v4644
    %v4684 = vunpack.c.l.b16 %v4645
    %v4685 = vunpack.c.l.b16 %v4646
    %v4686 = vunpack.c.l.b16 %v4647
    %v4687 = vunpack.c.l.b16 %v4648
    %v4688 = vunpack.c.l.b16 %v4649
    %v4689 = vunpack.c.l.b16 %v4650
    %v4690 = vunpack.c.l.b16 %v4651
    %v4691 = vunpack.c.l.b16 %v4652
    %v4692 = vunpack.c.l.b16 %v4653
    %v4693 = vunpack.c.l.b16 %v4654
    %v4694 = vunpack.c.l.b16 %v4655
    %v4695 = vunpack.c.l.b16 %v4656
    %v4696 = vunpack.c.l.b16 %v4657
    %v4697 = vunpack.c.l.b16 %v4658
    %v4698 = vpack.c.b16 %v4683, %v4682
    %v4699 = vpack.c.b16 %v4685, %v4684
    %v4700 = vpack.c.b16 %v4687, %v4686
    %v4701 = vpack.c.b16 %v4689, %v4688
    %v4702 = vpack.c.b16 %v4691, %v4690
    %v4703 = vpack.c.b16 %v4693, %v4692
    %v4704 = vpack.c.b16 %v4695, %v4694
    %v4705 = vpack.c.b16 %v4697, %v4696
    %4714 = vmatprep.subr.bf16.mxu0 0
    %4715 = vmatpush1.bf16.msra.mxu0 %v4698
    %4716 = vmatprep.subr.bf16.mxu0 0
    %4717 = vmatpush1.bf16.msra.mxu0 %v4699
    %4718 = vmatprep.subr.bf16.mxu0 0
    %4719 = vmatpush1.bf16.msra.mxu0 %v4700
    %4720 = vmatprep.subr.bf16.mxu0 0
    %4721 = vmatpush1.bf16.msra.mxu0 %v4701
    %4722 = vmatprep.subr.bf16.mxu0 0
    %4723 = vmatpush1.bf16.msra.mxu0 %v4702
    %4724 = vmatprep.subr.bf16.mxu0 0
    %4725 = vmatpush1.bf16.msra.mxu0 %v4703
    %4726 = vmatprep.subr.bf16.mxu0 0
    %4727 = vmatpush1.bf16.msra.mxu0 %v4704
    %4728 = vmatprep.subr.bf16.mxu0 0
    %4729 = vmatpush1.bf16.msra.mxu0 %v4705
    %4730 = vmatprep.subr.bf16.mxu0 0
    %4731 = vmatpush1.bf16.msra.mxu0 0
    %4732 = vmatprep.subr.bf16.mxu0 0
    %4733 = vmatpush1.bf16.msra.mxu0 0
    %4734 = vmatprep.subr.bf16.mxu0 0
    %4735 = vmatpush1.bf16.msra.mxu0 0
    %4736 = vmatprep.subr.bf16.mxu0 0
    %4737 = vmatpush1.bf16.msra.mxu0 0
    %4738 = vmatprep.subr.bf16.mxu0 0
    %4739 = vmatpush1.bf16.msra.mxu0 0
    %4740 = vmatprep.subr.bf16.mxu0 0
    %4741 = vmatpush1.bf16.msra.mxu0 0
    %4742 = vmatprep.subr.bf16.mxu0 0
    %4743 = vmatpush1.bf16.msra.mxu0 0
    %4744 = vmatprep.subr.bf16.mxu0 0
    %4745 = vmatpush1.bf16.msra.mxu0 0
    %4746 = vmatprep.mubr.bf16.mxu0 0
    %4747 = vmatmul.mubr.bf16.gmra.mrb[0].mxu0 %v4627
    %v4748 = vpop.f32.mrb[0].mxu0
    %v4749 = vadd.f32 %v4664, %v4748
    %v4750 = vpop.f32.mrb[0].mxu0
    %v4751 = vpop.f32.mrb[0].mxu0
    %v4752 = vadd.f32 %v4664, %v4751
    %v4753 = vpop.f32.mrb[0].mxu0
    %4754 = vmatprep.mubr.bf16.mxu0 0
    %4755 = vmatmul.mubr.bf16.gmra.mrb[0].mxu0 %v4628
    %v4756 = vpop.f32.mrb[0].mxu0
    %v4757 = vadd.f32 %v4664, %v4756
    %v4758 = vpop.f32.mrb[0].mxu0
    %v4759 = vpop.f32.mrb[0].mxu0
    %v4760 = vadd.f32 %v4664, %v4759
    %v4761 = vpop.f32.mrb[0].mxu0
    %4762 = vmatprep.mubr.bf16.mxu0 0
    %4763 = vmatmul.mubr.bf16.gmra.mrb[0].mxu0 %v4629
    %v4764 = vpop.f32.mrb[0].mxu0
    %v4765 = vadd.f32 %v4664, %v4764
    %v4766 = vpop.f32.mrb[0].mxu0
    %v4767 = vpop.f32.mrb[0].mxu0
    %v4768 = vadd.f32 %v4664, %v4767
    %v4769 = vpop.f32.mrb[0].mxu0
    %4770 = vmatprep.mubr.bf16.mxu0 0
    %4771 = vmatmul.mubr.bf16.gmra.mrb[0].mxu0 %v4630
    %v4772 = vpop.f32.mrb[0].mxu0
    %v4773 = vadd.f32 %v4664, %v4772
    %v4774 = vpop.f32.mrb[0].mxu0
    %v4775 = vpop.f32.mrb[0].mxu0
    %v4776 = vadd.f32 %v4664, %v4775
    %v4777 = vpop.f32.mrb[0].mxu0
    %4778 = vmatprep.mubr.bf16.mxu0 0
    %4779 = vmatmul.mubr.bf16.gmra.mrb[0].mxu0 %v4631
    %v4780 = vpop.f32.mrb[0].mxu0
    %v4781 = vadd.f32 %v4664, %v4780
    %v4782 = vpop.f32.mrb[0].mxu0
    %v4783 = vpop.f32.mrb[0].mxu0
    %v4784 = vadd.f32 %v4664, %v4783
    %v4785 = vpop.f32.mrb[0].mxu0
    %4786 = vmatprep.mubr.bf16.mxu0 0
    %4787 = vmatmul.mubr.bf16.gmra.mrb[0].mxu0 %v4632
    %v4788 = vpop.f32.mrb[0].mxu0
    %v4789 = vadd.f32 %v4664, %v4788
    %v4790 = vpop.f32.mrb[0].mxu0
    %v4791 = vpop.f32.mrb[0].mxu0
    %v4792 = vadd.f32 %v4664, %v4791
    %v4793 = vpop.f32.mrb[0].mxu0
    %4794 = vmatprep.mubr.bf16.mxu0 0
    %4795 = vmatmul.mubr.bf16.gmra.mrb[0].mxu0 %v4633
    %v4796 = vpop.f32.mrb[0].mxu0
    %v4797 = vadd.f32 %v4664, %v4796
    %v4798 = vpop.f32.mrb[0].mxu0
    %v4799 = vpop.f32.mrb[0].mxu0
    %v4800 = vadd.f32 %v4664, %v4799
    %v4801 = vpop.f32.mrb[0].mxu0
    %4802 = vmatprep.mubr.bf16.mxu0 0
    %4803 = vmatmul.mubr.bf16.gmra.mrb[0].mxu0 %v4634
    %v4804 = vpop.f32.mrb[0].mxu0
    %v4805 = vadd.f32 %v4664, %v4804
    %v4806 = vpop.f32.mrb[0].mxu0
    %v4807 = vpop.f32.mrb[0].mxu0
    %v4808 = vadd.f32 %v4664, %v4807
    %v4809 = vpop.f32.mrb[0].mxu0
    %4810 = vmatprep.mubr.bf16.mxu0 0
    %4811 = vmatmul.mubr.bf16.gmra.mrb[0].mxu0 %v4635
    %v4812 = vpop.f32.mrb[0].mxu0
    %v4813 = vadd.f32 %v4664, %v4812
    %v4814 = vpop.f32.mrb[0].mxu0
    %v4815 = vpop.f32.mrb[0].mxu0
    %v4816 = vadd.f32 %v4664, %v4815
    %v4817 = vpop.f32.mrb[0].mxu0
    %4818 = vmatprep.mubr.bf16.mxu0 0
    %4819 = vmatmul.mubr.bf16.gmra.mrb[0].mxu0 %v4636
    %v4820 = vpop.f32.mrb[0].mxu0
    %v4821 = vadd.f32 %v4664, %v4820
    %v4822 = vpop.f32.mrb[0].mxu0
    %v4823 = vpop.f32.mrb[0].mxu0
    %v4824 = vadd.f32 %v4664, %v4823
    %v4825 = vpop.f32.mrb[0].mxu0
    %4826 = vmatprep.mubr.bf16.mxu0 0
    %4827 = vmatmul.mubr.bf16.gmra.mrb[0].mxu0 %v4637
    %v4828 = vpop.f32.mrb[0].mxu0
    %v4829 = vadd.f32 %v4664, %v4828
    %v4830 = vpop.f32.mrb[0].mxu0
    %v4831 = vpop.f32.mrb[0].mxu0
    %v4832 = vadd.f32 %v4664, %v4831
    %v4833 = vpop.f32.mrb[0].mxu0
    %4834 = vmatprep.mubr.bf16.mxu0 0
    %4835 = vmatmul.mubr.bf16.gmra.mrb[0].mxu0 %v4638
    %v4836 = vpop.f32.mrb[0].mxu0
    %v4837 = vadd.f32 %v4664, %v4836
    %v4838 = vpop.f32.mrb[0].mxu0
    %v4839 = vpop.f32.mrb[0].mxu0
    %v4840 = vadd.f32 %v4664, %v4839
    %v4841 = vpop.f32.mrb[0].mxu0
    %4842 = vmatprep.mubr.bf16.mxu0 0
    %4843 = vmatmul.mubr.bf16.gmra.mrb[0].mxu0 %v4639
    %v4844 = vpop.f32.mrb[0].mxu0
    %v4845 = vadd.f32 %v4664, %v4844
    %v4846 = vpop.f32.mrb[0].mxu0
    %v4847 = vpop.f32.mrb[0].mxu0
    %v4848 = vadd.f32 %v4664, %v4847
    %v4849 = vpop.f32.mrb[0].mxu0
    %4850 = vmatprep.mubr.bf16.mxu0 0
    %4851 = vmatmul.mubr.bf16.gmra.mrb[0].mxu0 %v4640
    %v4852 = vpop.f32.mrb[0].mxu0
    %v4853 = vadd.f32 %v4664, %v4852
    %v4854 = vpop.f32.mrb[0].mxu0
    %v4855 = vpop.f32.mrb[0].mxu0
    %v4856 = vadd.f32 %v4664, %v4855
    %v4857 = vpop.f32.mrb[0].mxu0
    %4858 = vmatprep.mubr.bf16.mxu0 0
    %4859 = vmatmul.mubr.bf16.gmra.mrb[0].mxu0 %v4641
    %v4860 = vpop.f32.mrb[0].mxu0
    %v4861 = vadd.f32 %v4664, %v4860
    %v4862 = vpop.f32.mrb[0].mxu0
    %v4863 = vpop.f32.mrb[0].mxu0
    %v4864 = vadd.f32 %v4664, %v4863
    %v4865 = vpop.f32.mrb[0].mxu0
    %4866 = vmatprep.mubr.bf16.mxu0 0
    %4867 = vmatmul.mubr.bf16.gmra.mrb[0].mxu0 %v4642
    %v4868 = vpop.f32.mrb[0].mxu0
    %v4869 = vadd.f32 %v4664, %v4868
    %v4870 = vpop.f32.mrb[0].mxu0
    %v4871 = vpop.f32.mrb[0].mxu0
    %v4872 = vadd.f32 %v4664, %v4871
    %v4873 = vpop.f32.mrb[0].mxu0
    %4874 = vdwg.mxu0
    %4875 = vst [vmem:[#allocation11] sm:$0xff] %v4749
    %4876 = vst [vmem:[#allocation11 + $0x8] sm:$0xff] %v4752
    %4877 = vst [vmem:[#allocation11 + $0x10] sm:$0xff] %v4757
    %4878 = vst [vmem:[#allocation11 + $0x18] sm:$0xff] %v4760
    %4879 = vst [vmem:[#allocation11 + $0x20] sm:$0xff] %v4765
    %4880 = vst [vmem:[#allocation11 + $0x28] sm:$0xff] %v4768
    %4881 = vst [vmem:[#allocation11 + $0x30] sm:$0xff] %v4773
    %4882 = vst [vmem:[#allocation11 + $0x38] sm:$0xff] %v4776
    %4883 = vst [vmem:[#allocation11 + $0x40] sm:$0xff] %v4781
    %4884 = vst [vmem:[#allocation11 + $0x48] sm:$0xff] %v4784
    %4885 = vst [vmem:[#allocation11 + $0x50] sm:$0xff] %v4789
    %4886 = vst [vmem:[#allocation11 + $0x58] sm:$0xff] %v4792
    %4887 = vst [vmem:[#allocation11 + $0x60] sm:$0xff] %v4797
    %4888 = vst [vmem:[#allocation11 + $0x68] sm:$0xff] %v4800
    %4889 = vst [vmem:[#allocation11 + $0x70] sm:$0xff] %v4805
    %4890 = vst [vmem:[#allocation11 + $0x78] sm:$0xff] %v4808
    %4891 = vst [vmem:[#allocation11 + $0x80] sm:$0xff] %v4813
    %4892 = vst [vmem:[#allocation11 + $0x88] sm:$0xff] %v4816
    %4893 = vst [vmem:[#allocation11 + $0x90] sm:$0xff] %v4821
    %4894 = vst [vmem:[#allocation11 + $0x98] sm:$0xff] %v4824
    %4895 = vst [vmem:[#allocation11 + $0xa0] sm:$0xff] %v4829
    %4896 = vst [vmem:[#allocation11 + $0xa8] sm:$0xff] %v4832
    %4897 = vst [vmem:[#allocation11 + $0xb0] sm:$0xff] %v4837
    %4898 = vst [vmem:[#allocation11 + $0xb8] sm:$0xff] %v4840
    %4899 = vst [vmem:[#allocation11 + $0xc0] sm:$0xff] %v4845
    %4900 = vst [vmem:[#allocation11 + $0xc8] sm:$0xff] %v4848
    %4901 = vst [vmem:[#allocation11 + $0xd0] sm:$0xff] %v4853
    %4902 = vst [vmem:[#allocation11 + $0xd8] sm:$0xff] %v4856
    %4903 = vst [vmem:[#allocation11 + $0xe0] sm:$0xff] %v4861
    %4904 = vst [vmem:[#allocation11 + $0xe8] sm:$0xff] %v4864
    %4905 = vst [vmem:[#allocation11 + $0xf0] sm:$0xff] %v4869
    %4906 = vst [vmem:[#allocation11 + $0xf8] sm:$0xff] %v4872
    // Predicated region
    $region58: #{tpu_custom_call.1} parent=1 // pred_check
      _
    $region59: #{tpu_custom_call.1} parent=1 // pred_check_branch
      %4908 = sbr.rel (0) target = $region61
    $region60: #{tpu_custom_call.1} parent=1 // pred_region
      %s4910 = ssub.s32 4096, 128
      %4911 = vsyncadd [#allocation4], %s4910
      %s4912 = sshll.u32 [#allocation11], 4
      %s4913 = int_to_ptr.vmem [resolvable:$true] %s4912
      %4918 = dma.vmem_to_hbm [thread:$0]  %s4913, 128, %s9, [#allocation4], 128, 128, 8
    $region61: #{tpu_custom_call.1} parent=1 // pred_fallthru
      _
    // Predicated region
    $region62: #{tpu_custom_call.1} parent=1 // pred_check
      _
    $region63: #{tpu_custom_call.1} parent=1 // pred_check_branch
      %4920 = sbr.rel (0) target = $region65
    $region64: #{tpu_custom_call.1} parent=1 // pred_region
      %4921 = dma.done [#allocation4], 4096
    $region65: #{tpu_custom_call.1} parent=1 // pred_fallthru
      _
    %4922 = vsyncpa [#allocation3], 1
    %4923 = vsyncpa [#allocation6], 1
    %4924 = vsyncpa [#allocation9], 1
    %4925 = vsyncpa [#allocation4], 1

</llo_original>
